<compile_context>
chip_gen: v6e
topology: v6e:2x2x1
jax: 0.10.0
libtpu: 0.0.40
codegen_flags: <defaults>
</compile_context>

<pallas_src>
import math
import functools
import numpy as np

import jax
import jax.numpy as jnp
from jax.experimental import pallas as pl
from jax.experimental.pallas import tpu as pltpu

NEG_BIG = -1e30   # Python float literal (NOT a jnp array -> no captured const), NaN-safe masking


def _round_up(x, m):
    return ((x + m - 1) // m) * m


def _gelu(x):
    # TODO(synk): PyTorch F.gelu default is exact erf-GELU; erf has no reliable Mosaic lowering,
    #             so we use the tanh approximation (difference is O(1e-3) relative).
    c = math.sqrt(2.0 / math.pi)
    return 0.5 * x * (1.0 + jnp.tanh(c * (x + 0.044715 * x * x * x)))


# ------------------------------------------------------------------ fused Pallas kernel

def transformer_lm_kernel(ids_ref, mask_ref, embed_ref, pe_ref,
                          ln1w_ref, ln1b_ref, ln2w_ref, ln2b_ref,
                          wqkv_ref, bqkv_ref, wo_ref, bo_ref,
                          w1_ref, b1_ref, w2_ref, b2_ref,
                          lnfw_ref, lnfb_ref, wc_ref, bc_ref,
                          o_ref, *, nhead, num_layers, eps):
    """Whole TransformerLM forward for a block of Bt batch elements.

    ids_ref:  (Bt, Sp, 1) int32 token ids (Sp = seq padded to a multiple of 8)
    mask_ref: (Bt, 1, Sp) int32 key-padding mask (1 = pad)
    embed_ref: (V, D) f32, pe_ref: (Sp, D) f32  (resident tables)
    weights:  stacked over layers (leading dim L), pre-transposed to [in, out], matmul weights bf16,
              softmax scale folded into the Q columns of wqkv.
    o_ref:    (Bt, Sp, Vp) f32 logits, vocab padded to a multiple of 128 (lane-dense store).
    """
    V, D = embed_ref.shape
    Bt, Sp, _ = ids_ref.shape
    H = nhead
    hd = D // H
    SH = H * Sp
    M = Bt * Sp
    bf16 = jnp.bfloat16
    ct = lambda z: z.astype(bf16)

    # ---- in-kernel embedding lookup (one-hot matmul) + positional encoding ----
    ids = ids_ref[...].reshape(M, 1)                                           # (M, 1) int32
    onehot = (jax.lax.broadcasted_iota(jnp.int32, (M, V), 1) == ids)
    x = jnp.dot(onehot.astype(jnp.float32), embed_ref[...],
                preferred_element_type=jnp.float32)                            # (M, D)
    pe = pe_ref[...]
    if Bt > 1:
        pe = jnp.concatenate([pe] * Bt, axis=0)
    x = x + pe

    # ---- additive attention bias: causal + block-diagonal head mask (+ per-batch key padding) ----
    # rows/cols are head-major packed: index = h*Sp + position
    pos_r = jnp.concatenate([jax.lax.broadcasted_iota(jnp.int32, (Sp, 1), 0)] * H, axis=0)   # (SH,1)
    pos_c = jnp.concatenate([jax.lax.broadcasted_iota(jnp.int32, (1, Sp), 1)] * H, axis=1)   # (1,SH)
    head_r = jnp.concatenate([jnp.full((Sp, 1), h, jnp.int32) for h in range(H)], axis=0)    # (SH,1)
    head_c = jnp.concatenate([jnp.full((1, Sp), h, jnp.int32) for h in range(H)], axis=1)    # (1,SH)
    ok_base = (head_r == head_c) & (pos_c <= pos_r)                                          # (SH,SH)

    mask_all = mask_ref[...]                                                   # (Bt, 1, Sp) int32
    biases = []
    for b in range(Bt):
        pad_tiled = jnp.concatenate([mask_all[b]] * H, axis=1)                 # (1, SH)
        ok_b = ok_base & (pad_tiled == 0)
        biases.append(jnp.where(ok_b, 0.0, NEG_BIG).astype(jnp.float32))       # (SH, SH)

    def layer_norm(z, w, b):
        mu = jnp.mean(z, axis=-1, keepdims=True)
        var = jnp.mean((z - mu) ** 2, axis=-1, keepdims=True)
        return (z - mu) * jax.lax.rsqrt(var + eps) * w + b

    def pack_heads(z2d, off):   # (Sp, QKVp) lane-slice channels [off+h*hd, off+(h+1)*hd) -> (SH, hd)
        return jnp.concatenate(
            [z2d[:, off + h * hd: off + (h + 1) * hd] for h in range(H)], axis=0)

    def unpack_heads(zp):       # (SH, hd) -> (Sp, D): concat per-head context along channels
        return jnp.concatenate([zp[h * Sp:(h + 1) * Sp, :] for h in range(H)], axis=1)

    # TODO(synk): switch to lax.fori_loop over a stacked-layer axis if num_layers grows beyond ~4.
    for l in range(num_layers):
        # ---- self-attention block: x = x + Wo(MHA(LN1(x))) ----
        hn = layer_norm(x, ln1w_ref[l], ln1b_ref[l])                           # (M, D) f32
        qkv = jnp.dot(ct(hn), wqkv_ref[l],
                      preferred_element_type=jnp.float32) + bqkv_ref[l]        # (M, QKVp) f32

        ctx_rows = []
        for b in range(Bt):
            qkv_b = qkv[b * Sp:(b + 1) * Sp]                                   # (Sp, QKVp)
            qp = pack_heads(qkv_b, 0)                                          # (SH, hd), scale folded in
            kp = pack_heads(qkv_b, D)
            vp = pack_heads(qkv_b, 2 * D)
            s = jax.lax.dot_general(ct(qp), ct(kp), (((1,), (1,)), ((), ())),
                                    preferred_element_type=jnp.float32)        # (SH, SH)
            s = s + biases[b]
            m = jnp.max(s, axis=-1, keepdims=True)
            p = jnp.exp(s - m)
            inv = 1.0 / jnp.sum(p, axis=-1, keepdims=True)                     # exact (EUP path)
            p = p * inv
            ctx = jnp.dot(ct(p), ct(vp), preferred_element_type=jnp.float32)   # (SH, hd)
            ctx_rows.append(unpack_heads(ctx))                                 # (Sp, D)
        ctx_all = ctx_rows[0] if Bt == 1 else jnp.concatenate(ctx_rows, axis=0)  # (M, D)

        attn = jnp.dot(ct(ctx_all), wo_ref[l],
                       preferred_element_type=jnp.float32) + bo_ref[l]         # single out-proj matmul
        x = x + attn

        # ---- feed-forward block: x = x + W2(gelu(W1(LN2(x)))) ----
        hn = layer_norm(x, ln2w_ref[l], ln2b_ref[l])
        h1 = jnp.dot(ct(hn), w1_ref[l], preferred_element_type=jnp.float32) + b1_ref[l]
        h1 = _gelu(h1)
        h2 = jnp.dot(ct(h1), w2_ref[l], preferred_element_type=jnp.float32) + b2_ref[l]
        x = x + h2

    # ---- final encoder LayerNorm + lane-dense classifier ----
    xf = layer_norm(x, lnfw_ref[...], lnfb_ref[...])
    logits = jnp.dot(ct(xf), wc_ref[...], preferred_element_type=jnp.float32) + bc_ref[...]
    o_ref[...] = logits.reshape(Bt, Sp, logits.shape[-1])


# ------------------------------------------------------------------ model wrapper

class TransformerLMPallas:
    def __init__(self, vocab_size, d_model=32, nhead=4, num_layers=2,
                 max_len=10, layer_norm_eps=1e-5, key=None):
        assert d_model % nhead == 0
        self.vocab_size = vocab_size
        self.d_model = d_model
        self.nhead = nhead
        self.num_layers = num_layers
        self.dim_ff = 4 * d_model
        self.eps = float(layer_norm_eps)
        self.max_len = max_len
        self.vocab_padded = _round_up(vocab_size, 128)        # lane-dense classifier output
        self.qkv_padded = _round_up(3 * d_model, 128)         # lane-dense fused QKV output

        if key is None:
            key = jax.random.PRNGKey(0)
        D, V, F, H = d_model, vocab_size, self.dim_ff, nhead
        hd = D // H
        scale = 1.0 / math.sqrt(hd)

        def uni(k, shape, a):
            return jax.random.uniform(k, shape, jnp.float32, -a, a)

        keys = jax.random.split(key, num_layers + 2)

        # embedding: uniform(-0.1, 0.1), like init_weights(); kept f32 (one-hot gather in-kernel)
        self.embed = uni(keys[0], (V, D), 0.1)

        # positional encoding buffer padded to a sublane-aligned capacity (>= any runtime Sp)
        Sp_cap = _round_up(max_len, 8)
        position = np.arange(max_len)[:, None].astype(np.float32)
        div_term = np.exp(np.arange(0, D, 2).astype(np.float32) * (-math.log(10000.0) / D))
        pe = np.zeros((Sp_cap, D), np.float32)
        pe[:max_len, 0::2] = np.sin(position * div_term)
        pe[:max_len, 1::2] = np.cos(position * div_term)
        self.pe_buf = jnp.asarray(pe)

        QKVp, Vp = self.qkv_padded, self.vocab_padded
        ln1w, ln1b, ln2w, ln2b = [], [], [], []
        wqkv, bqkv, wo, bo, w1, b1, w2, b2 = [], [], [], [], [], [], [], []

        for l in range(num_layers):
            k0, k1, k2, k3 = jax.random.split(keys[1 + l], 4)
            a_in = math.sqrt(6.0 / (D + 3 * D))      # xavier-ish for in_proj
            a_lin = 1.0 / math.sqrt(D)
            a_ff = 1.0 / math.sqrt(F)

            w_in = uni(k0, (D, 3 * D), a_in)         # [in, out] (pre-transposed)
            w_o = uni(k1, (D, D), a_lin)
            w_ff1 = uni(k2, (D, F), a_lin)
            w_ff2 = uni(k3, (F, D), a_ff)

            # fold 1/sqrt(hd) softmax scale into the Q columns; zero-pad to lane-dense width; bf16
            w_in = w_in.at[:, :D].multiply(scale)
            w_in_p = jnp.zeros((D, QKVp), jnp.float32).at[:, :3 * D].set(w_in)
            wqkv.append(w_in_p.astype(jnp.bfloat16))
            bqkv.append(jnp.zeros((1, QKVp), jnp.float32))
            wo.append(w_o.astype(jnp.bfloat16))
            bo.append(jnp.zeros((1, D), jnp.float32))
            w1.append(w_ff1.astype(jnp.bfloat16))
            b1.append(jnp.zeros((1, F), jnp.float32))
            w2.append(w_ff2.astype(jnp.bfloat16))
            b2.append(jnp.zeros((1, D), jnp.float32))
            ln1w.append(jnp.ones((1, D), jnp.float32))
            ln1b.append(jnp.zeros((1, D), jnp.float32))
            ln2w.append(jnp.ones((1, D), jnp.float32))
            ln2b.append(jnp.zeros((1, D), jnp.float32))

        stack = lambda xs: jnp.stack(xs, axis=0)
        self.params = dict(
            ln1w=stack(ln1w), ln1b=stack(ln1b), ln2w=stack(ln2w), ln2b=stack(ln2b),
            wqkv=stack(wqkv), bqkv=stack(bqkv), wo=stack(wo), bo=stack(bo),
            w1=stack(w1), b1=stack(b1), w2=stack(w2), b2=stack(b2))

        # final encoder norm + classifier (weight uniform(-0.1, 0.1), bias 0, like init_weights())
        self.norm_w = jnp.ones((1, D), jnp.float32)
        self.norm_b = jnp.zeros((1, D), jnp.float32)
        cls_w = uni(keys[1 + num_layers], (D, V), 0.1)
        self.cls_w = (jnp.zeros((D, Vp), jnp.float32).at[:, :V].set(cls_w)).astype(jnp.bfloat16)
        self.cls_b = jnp.zeros((1, Vp), jnp.float32)

    # ---- single fused pallas_call -------------------------------------------
    def _forward_pallas(self, ids, mask, pe):
        B, Sp, _ = ids.shape
        L, H, D = self.num_layers, self.nhead, self.d_model
        F, V = self.dim_ff, self.vocab_size
        QKVp, Vp = self.qkv_padded, self.vocab_padded

        # batch block: 1 for tiny batches (keeps 2 grid steps -> both v7x TCs busy at B=2);
        # larger divisors fill the MXU M-dim when B grows.
        Bt = 1
        if B > 2:
            for cand in (8, 4, 2):
                if B % cand == 0:
                    Bt = cand
                    break

        p = self.params

        def fullspec(shape):
            nd = len(shape)
            return pl.BlockSpec(shape, lambda b, _nd=nd: (0,) * _nd)

        kern = functools.partial(transformer_lm_kernel,
                                 nhead=H, num_layers=L, eps=self.eps)
        return pl.pallas_call(
            kern,
            out_shape=jax.ShapeDtypeStruct((B, Sp, Vp), jnp.float32),
            grid=(B // Bt,),
            in_specs=[
                pl.BlockSpec((Bt, Sp, 1), lambda b: (b, 0, 0)),    # token ids
                pl.BlockSpec((Bt, 1, Sp), lambda b: (b, 0, 0)),    # key-padding mask (1 = pad)
                fullspec((V, D)),                                   # embedding table
                fullspec((Sp, D)),                                  # positional encoding
                fullspec((L, 1, D)), fullspec((L, 1, D)),           # ln1 w/b
                fullspec((L, 1, D)), fullspec((L, 1, D)),           # ln2 w/b
                fullspec((L, D, QKVp)), fullspec((L, 1, QKVp)),     # fused qkv
                fullspec((L, D, D)), fullspec((L, 1, D)),           # out proj
                fullspec((L, D, F)), fullspec((L, 1, F)),           # ff1
                fullspec((L, F, D)), fullspec((L, 1, D)),           # ff2
                fullspec((1, D)), fullspec((1, D)),                 # final norm
                fullspec((D, Vp)), fullspec((1, Vp)),               # classifier
            ],
            out_specs=pl.BlockSpec((Bt, Sp, Vp), lambda b: (b, 0, 0)),
            compiler_params=pltpu.CompilerParams(
                dimension_semantics=("parallel",)),
        )(ids, mask, self.embed, pe,
          p["ln1w"], p["ln1b"], p["ln2w"], p["ln2b"],
          p["wqkv"], p["bqkv"], p["wo"], p["bo"],
          p["w1"], p["b1"], p["w2"], p["b2"],
          self.norm_w, self.norm_b, self.cls_w, self.cls_b)

    # ---- forward --------------------------------------------------------------
    def __call__(self, seq, padding_mask, seq_len):
        # TODO(synk): sorting / trimming is data-dependent (dynamic shapes, .tolist()) -> host-side
        #             numpy glue, same as the PyTorch module's .sort()/.tolist(); not jittable.
        seq_np = np.asarray(seq)
        pad_np = np.asarray(padding_mask)
        len_np = np.asarray(seq_len)

        sort_ind = np.argsort(-len_np, kind="stable")            # descending sort
        seq_len_sorted = len_np[sort_ind]
        encoded_seq = seq_np[sort_ind]
        pad_sorted = pad_np[sort_ind]
        decode_lengths = (seq_len_sorted - 1).tolist()
        max_length = int(max(decode_lengths))

        B = seq_np.shape[0]
        Sp = max(8, _round_up(max_length, 8))                    # sublane-aligned seq length

        ids_full = np.zeros((B, Sp), np.int32)
        ids_full[:, :max_length] = encoded_seq[:, :max_length]
        mask_full = np.ones((B, Sp), np.int32)                   # 1 = pad
        mask_full[:, :max_length] = pad_sorted[:, :max_length].astype(np.int32)

        ids = jnp.asarray(ids_full).reshape(B, Sp, 1)
        mask = jnp.asarray(mask_full).reshape(B, 1, Sp)
        pe = self.pe_buf[:Sp]

        logits_padded = self._forward_pallas(ids, mask, pe)      # (B, Sp, Vp)
        out = logits_padded[:, :max_length, :self.vocab_size]    # (B, S, vocab)

        return out, jnp.asarray(encoded_seq), decode_lengths, jnp.asarray(sort_ind)


# ------------------------------------------------------------------ demo

if __name__ == "__main__":
    vocab_size = 50
    d_model = 32
    nhead = 4
    num_layers = 2
    max_len = 10          # (= config max_len 8 + 2)
    B = 2

    key = jax.random.PRNGKey(0)
    k_model, k_seq = jax.random.split(key)

    model = TransformerLMPallas(vocab_size, d_model=d_model, nhead=nhead,
                                num_layers=num_layers, max_len=max_len, key=k_model)

    seq = jax.random.randint(k_seq, (B, max_len), 0, vocab_size, dtype=jnp.int32)
    seq_len = jnp.array([7, 10], dtype=jnp.int32)
    padding_mask = jnp.arange(max_len)[None, :] >= seq_len[:, None]   # True = pad

    out, encoded_seq, decode_lengths, sort_ind = model(seq, padding_mask, seq_len)
    jax.block_until_ready(out)

    assert out.shape == (B, max(decode_lengths), vocab_size)
    assert bool(jnp.all(jnp.isfinite(out)))
    print("KERNEL_OK")
</pallas_src>

<mosaic_0001>
module attributes {stable_mosaic.version = 11 : i64} {
  func.func @transformer_lm_kernel(%arg0: i32, %arg1: memref<1x16x1xi32, #tpu.memory_space<vmem>>, %arg2: memref<1x1x16xi32, #tpu.memory_space<vmem>>, %arg3: memref<50x32xf32, #tpu.memory_space<vmem>>, %arg4: memref<16x32xf32, #tpu.memory_space<vmem>>, %arg5: memref<2x1x32xf32, #tpu.memory_space<vmem>>, %arg6: memref<2x1x32xf32, #tpu.memory_space<vmem>>, %arg7: memref<2x1x32xf32, #tpu.memory_space<vmem>>, %arg8: memref<2x1x32xf32, #tpu.memory_space<vmem>>, %arg9: memref<2x32x128xbf16, #tpu.memory_space<vmem>>, %arg10: memref<2x1x128xf32, #tpu.memory_space<vmem>>, %arg11: memref<2x32x32xbf16, #tpu.memory_space<vmem>>, %arg12: memref<2x1x32xf32, #tpu.memory_space<vmem>>, %arg13: memref<2x32x128xbf16, #tpu.memory_space<vmem>>, %arg14: memref<2x1x128xf32, #tpu.memory_space<vmem>>, %arg15: memref<2x128x32xbf16, #tpu.memory_space<vmem>>, %arg16: memref<2x1x32xf32, #tpu.memory_space<vmem>>, %arg17: memref<1x32xf32, #tpu.memory_space<vmem>>, %arg18: memref<1x32xf32, #tpu.memory_space<vmem>>, %arg19: memref<32x128xbf16, #tpu.memory_space<vmem>>, %arg20: memref<1x128xf32, #tpu.memory_space<vmem>>, %arg21: memref<1x16x128xf32, #tpu.memory_space<vmem>>) attributes {dimension_semantics = [#tpu.dimension_semantics<parallel>], iteration_bounds = array<i64: 2>, scalar_prefetch = 0 : i64, scratch_operands = 0 : i64, tpu.core_type = #tpu.core_type<tc>, window_params = [{transform_indices = @transform_0, window_bounds = array<i64: 1, 16, 1>}, {transform_indices = @transform_1, window_bounds = array<i64: 1, 1, 16>}, {pipeline_mode = #tpu.pipeline_mode<synchronous>, transform_indices = @transform_2, window_bounds = array<i64: 50, 32>}, {pipeline_mode = #tpu.pipeline_mode<synchronous>, transform_indices = @transform_3, window_bounds = array<i64: 16, 32>}, {pipeline_mode = #tpu.pipeline_mode<synchronous>, transform_indices = @transform_4, window_bounds = array<i64: 2, 1, 32>}, {pipeline_mode = #tpu.pipeline_mode<synchronous>, transform_indices = @transform_5, window_bounds = array<i64: 2, 1, 32>}, {pipeline_mode = #tpu.pipeline_mode<synchronous>, transform_indices = @transform_6, window_bounds = array<i64: 2, 1, 32>}, {pipeline_mode = #tpu.pipeline_mode<synchronous>, transform_indices = @transform_7, window_bounds = array<i64: 2, 1, 32>}, {pipeline_mode = #tpu.pipeline_mode<synchronous>, transform_indices = @transform_8, window_bounds = array<i64: 2, 32, 128>}, {pipeline_mode = #tpu.pipeline_mode<synchronous>, transform_indices = @transform_9, window_bounds = array<i64: 2, 1, 128>}, {pipeline_mode = #tpu.pipeline_mode<synchronous>, transform_indices = @transform_10, window_bounds = array<i64: 2, 32, 32>}, {pipeline_mode = #tpu.pipeline_mode<synchronous>, transform_indices = @transform_11, window_bounds = array<i64: 2, 1, 32>}, {pipeline_mode = #tpu.pipeline_mode<synchronous>, transform_indices = @transform_12, window_bounds = array<i64: 2, 32, 128>}, {pipeline_mode = #tpu.pipeline_mode<synchronous>, transform_indices = @transform_13, window_bounds = array<i64: 2, 1, 128>}, {pipeline_mode = #tpu.pipeline_mode<synchronous>, transform_indices = @transform_14, window_bounds = array<i64: 2, 128, 32>}, {pipeline_mode = #tpu.pipeline_mode<synchronous>, transform_indices = @transform_15, window_bounds = array<i64: 2, 1, 32>}, {pipeline_mode = #tpu.pipeline_mode<synchronous>, transform_indices = @transform_16, window_bounds = array<i64: 1, 32>}, {pipeline_mode = #tpu.pipeline_mode<synchronous>, transform_indices = @transform_17, window_bounds = array<i64: 1, 32>}, {pipeline_mode = #tpu.pipeline_mode<synchronous>, transform_indices = @transform_18, window_bounds = array<i64: 32, 128>}, {pipeline_mode = #tpu.pipeline_mode<synchronous>, transform_indices = @transform_19, window_bounds = array<i64: 1, 128>}, {transform_indices = @transform_20, window_bounds = array<i64: 1, 16, 128>}]} {
    %c0 = arith.constant 0 : index
    %c0_0 = arith.constant 0 : index
    %c0_1 = arith.constant 0 : index
    %0 = vector.load %arg1[%c0, %c0_0, %c0_1] : memref<1x16x1xi32, #tpu.memory_space<vmem>>, vector<1x16x1xi32>
    %1 = vector.shape_cast %0 : vector<1x16x1xi32> to vector<16x1xi32>
    %2 = tpu.iota {dimensions = array<i32: 1>} : vector<16x50xi32>
    %3 = vector.broadcast %1 : vector<16x1xi32> to vector<16x50xi32>
    %4 = arith.cmpi eq, %2, %3 : vector<16x50xi32>
    %5 = arith.extui %4 : vector<16x50xi1> to vector<16x50xi32>
    %6 = arith.sitofp %5 : vector<16x50xi32> to vector<16x50xf32>
    %c0_2 = arith.constant 0 : index
    %c0_3 = arith.constant 0 : index
    %7 = vector.load %arg3[%c0_2, %c0_3] : memref<50x32xf32, #tpu.memory_space<vmem>>, vector<50x32xf32>
    %cst = arith.constant dense<0.000000e+00> : vector<16x32xf32>
    %8 = tpu.matmul %6, %7, %cst {dimension_numbers = #tpu.dot_dimension_numbers<[1], [0], [0], [1], [0, 0, 1, 1], [], []>} : vector<16x50xf32>, vector<50x32xf32>, vector<16x32xf32> -> vector<16x32xf32>
    %c0_4 = arith.constant 0 : index
    %c0_5 = arith.constant 0 : index
    %9 = vector.load %arg4[%c0_4, %c0_5] : memref<16x32xf32, #tpu.memory_space<vmem>>, vector<16x32xf32>
    %10 = arith.addf %8, %9 : vector<16x32xf32>
    %11 = tpu.iota {dimensions = array<i32: 0>} : vector<16x1xi32>
    %12 = tpu.concatenate %11, %11, %11, %11 in 0 : vector<16x1xi32>, vector<16x1xi32>, vector<16x1xi32>, vector<16x1xi32> -> vector<64x1xi32>
    %13 = tpu.iota {dimensions = array<i32: 1>} : vector<1x16xi32>
    %14 = tpu.concatenate %13, %13, %13, %13 in 1 : vector<1x16xi32>, vector<1x16xi32>, vector<1x16xi32>, vector<1x16xi32> -> vector<1x64xi32>
    %c0_i32 = arith.constant 0 : i32
    %15 = vector.broadcast %c0_i32 : i32 to vector<16x1xi32>
    %c1_i32 = arith.constant 1 : i32
    %16 = vector.broadcast %c1_i32 : i32 to vector<16x1xi32>
    %c2_i32 = arith.constant 2 : i32
    %17 = vector.broadcast %c2_i32 : i32 to vector<16x1xi32>
    %c3_i32 = arith.constant 3 : i32
    %18 = vector.broadcast %c3_i32 : i32 to vector<16x1xi32>
    %19 = tpu.concatenate %15, %16, %17, %18 in 0 : vector<16x1xi32>, vector<16x1xi32>, vector<16x1xi32>, vector<16x1xi32> -> vector<64x1xi32>
    %c0_i32_6 = arith.constant 0 : i32
    %20 = vector.broadcast %c0_i32_6 : i32 to vector<1x16xi32>
    %c1_i32_7 = arith.constant 1 : i32
    %21 = vector.broadcast %c1_i32_7 : i32 to vector<1x16xi32>
    %c2_i32_8 = arith.constant 2 : i32
    %22 = vector.broadcast %c2_i32_8 : i32 to vector<1x16xi32>
    %c3_i32_9 = arith.constant 3 : i32
    %23 = vector.broadcast %c3_i32_9 : i32 to vector<1x16xi32>
    %24 = tpu.concatenate %20, %21, %22, %23 in 1 : vector<1x16xi32>, vector<1x16xi32>, vector<1x16xi32>, vector<1x16xi32> -> vector<1x64xi32>
    %25 = vector.broadcast %19 : vector<64x1xi32> to vector<64x64xi32>
    %26 = vector.broadcast %24 : vector<1x64xi32> to vector<64x64xi32>
    %27 = arith.cmpi eq, %25, %26 : vector<64x64xi32>
    %28 = vector.broadcast %14 : vector<1x64xi32> to vector<64x64xi32>
    %29 = vector.broadcast %12 : vector<64x1xi32> to vector<64x64xi32>
    %30 = arith.cmpi sle, %28, %29 : vector<64x64xi32>
    %31 = arith.andi %27, %30 : vector<64x64xi1>
    %c0_10 = arith.constant 0 : index
    %c0_11 = arith.constant 0 : index
    %c0_12 = arith.constant 0 : index
    %32 = vector.load %arg2[%c0_10, %c0_11, %c0_12] : memref<1x1x16xi32, #tpu.memory_space<vmem>>, vector<1x1x16xi32>
    %33 = vector.shape_cast %32 : vector<1x1x16xi32> to vector<1x16xi32>
    %34 = tpu.concatenate %33, %33, %33, %33 in 1 : vector<1x16xi32>, vector<1x16xi32>, vector<1x16xi32>, vector<1x16xi32> -> vector<1x64xi32>
    %c0_i32_13 = arith.constant 0 : i32
    %35 = vector.broadcast %c0_i32_13 : i32 to vector<1x64xi32>
    %36 = arith.cmpi eq, %34, %35 : vector<1x64xi32>
    %37 = vector.broadcast %36 : vector<1x64xi1> to vector<64x64xi1>
    %38 = arith.andi %31, %37 : vector<64x64xi1>
    %cst_14 = arith.constant 0.000000e+00 : f32
    %cst_15 = arith.constant -1.000000e+30 : f32
    %39 = vector.broadcast %cst_14 : f32 to vector<64x64xf32>
    %40 = vector.broadcast %cst_15 : f32 to vector<64x64xf32>
    %41 = arith.select %38, %39, %40 : vector<64x64xi1>, vector<64x64xf32>
    %c0_16 = arith.constant 0 : index
    %c0_17 = arith.constant 0 : index
    %c0_18 = arith.constant 0 : index
    %42 = vector.load %arg5[%c0_16, %c0_17, %c0_18] : memref<2x1x32xf32, #tpu.memory_space<vmem>>, vector<1x1x32xf32>
    %43 = vector.shape_cast %42 : vector<1x1x32xf32> to vector<1x32xf32>
    %c0_19 = arith.constant 0 : index
    %c0_20 = arith.constant 0 : index
    %c0_21 = arith.constant 0 : index
    %44 = vector.load %arg6[%c0_19, %c0_20, %c0_21] : memref<2x1x32xf32, #tpu.memory_space<vmem>>, vector<1x1x32xf32>
    %45 = vector.shape_cast %44 : vector<1x1x32xf32> to vector<1x32xf32>
    %cst_22 = arith.constant dense<0.000000e+00> : vector<16xf32>
    %46 = vector.multi_reduction <add>, %10, %cst_22 [1] : vector<16x32xf32> to vector<16xf32>
    %47 = vector.shape_cast %46 : vector<16xf32> to vector<16x1xf32>
    %cst_23 = arith.constant 3.200000e+01 : f32
    %48 = vector.broadcast %cst_23 : f32 to vector<16x1xf32>
    %49 = arith.divf %47, %48 : vector<16x1xf32>
    %50 = vector.broadcast %49 : vector<16x1xf32> to vector<16x32xf32>
    %51 = arith.subf %10, %50 : vector<16x32xf32>
    %52 = arith.mulf %51, %51 : vector<16x32xf32>
    %cst_24 = arith.constant dense<0.000000e+00> : vector<16xf32>
    %53 = vector.multi_reduction <add>, %52, %cst_24 [1] : vector<16x32xf32> to vector<16xf32>
    %54 = vector.shape_cast %53 : vector<16xf32> to vector<16x1xf32>
    %cst_25 = arith.constant 3.200000e+01 : f32
    %55 = vector.broadcast %cst_25 : f32 to vector<16x1xf32>
    %56 = arith.divf %54, %55 : vector<16x1xf32>
    %57 = vector.broadcast %49 : vector<16x1xf32> to vector<16x32xf32>
    %58 = arith.subf %10, %57 : vector<16x32xf32>
    %cst_26 = arith.constant 9.99999974E-6 : f32
    %59 = vector.broadcast %cst_26 : f32 to vector<16x1xf32>
    %60 = arith.addf %56, %59 : vector<16x1xf32>
    %61 = math.rsqrt %60 : vector<16x1xf32>
    %62 = vector.broadcast %61 : vector<16x1xf32> to vector<16x32xf32>
    %63 = arith.mulf %58, %62 : vector<16x32xf32>
    %64 = vector.broadcast %43 : vector<1x32xf32> to vector<16x32xf32>
    %65 = arith.mulf %63, %64 : vector<16x32xf32>
    %66 = vector.broadcast %45 : vector<1x32xf32> to vector<16x32xf32>
    %67 = arith.addf %65, %66 : vector<16x32xf32>
    %68 = arith.truncf %67 : vector<16x32xf32> to vector<16x32xbf16>
    %c0_27 = arith.constant 0 : index
    %c0_28 = arith.constant 0 : index
    %c0_29 = arith.constant 0 : index
    %69 = vector.load %arg9[%c0_27, %c0_28, %c0_29] : memref<2x32x128xbf16, #tpu.memory_space<vmem>>, vector<1x32x128xbf16>
    %70 = vector.shape_cast %69 : vector<1x32x128xbf16> to vector<32x128xbf16>
    %cst_30 = arith.constant dense<0.000000e+00> : vector<16x128xf32>
    %71 = tpu.matmul %68, %70, %cst_30 {dimension_numbers = #tpu.dot_dimension_numbers<[1], [0], [0], [1], [0, 0, 1, 1], [], []>} : vector<16x32xbf16>, vector<32x128xbf16>, vector<16x128xf32> -> vector<16x128xf32>
    %c0_31 = arith.constant 0 : index
    %c0_32 = arith.constant 0 : index
    %c0_33 = arith.constant 0 : index
    %72 = vector.load %arg10[%c0_31, %c0_32, %c0_33] : memref<2x1x128xf32, #tpu.memory_space<vmem>>, vector<1x1x128xf32>
    %73 = vector.shape_cast %72 : vector<1x1x128xf32> to vector<1x128xf32>
    %74 = vector.broadcast %73 : vector<1x128xf32> to vector<16x128xf32>
    %75 = arith.addf %71, %74 : vector<16x128xf32>
    %76 = vector.extract_strided_slice %75 {offsets = [0, 0], sizes = [16, 8], strides = [1, 1]} : vector<16x128xf32> to vector<16x8xf32>
    %77 = vector.extract_strided_slice %75 {offsets = [0, 8], sizes = [16, 8], strides = [1, 1]} : vector<16x128xf32> to vector<16x8xf32>
    %78 = vector.extract_strided_slice %75 {offsets = [0, 16], sizes = [16, 8], strides = [1, 1]} : vector<16x128xf32> to vector<16x8xf32>
    %79 = vector.extract_strided_slice %75 {offsets = [0, 24], sizes = [16, 8], strides = [1, 1]} : vector<16x128xf32> to vector<16x8xf32>
    %80 = tpu.concatenate %76, %77, %78, %79 in 0 : vector<16x8xf32>, vector<16x8xf32>, vector<16x8xf32>, vector<16x8xf32> -> vector<64x8xf32>
    %81 = vector.extract_strided_slice %75 {offsets = [0, 32], sizes = [16, 8], strides = [1, 1]} : vector<16x128xf32> to vector<16x8xf32>
    %82 = vector.extract_strided_slice %75 {offsets = [0, 40], sizes = [16, 8], strides = [1, 1]} : vector<16x128xf32> to vector<16x8xf32>
    %83 = vector.extract_strided_slice %75 {offsets = [0, 48], sizes = [16, 8], strides = [1, 1]} : vector<16x128xf32> to vector<16x8xf32>
    %84 = vector.extract_strided_slice %75 {offsets = [0, 56], sizes = [16, 8], strides = [1, 1]} : vector<16x128xf32> to vector<16x8xf32>
    %85 = tpu.concatenate %81, %82, %83, %84 in 0 : vector<16x8xf32>, vector<16x8xf32>, vector<16x8xf32>, vector<16x8xf32> -> vector<64x8xf32>
    %86 = vector.extract_strided_slice %75 {offsets = [0, 64], sizes = [16, 8], strides = [1, 1]} : vector<16x128xf32> to vector<16x8xf32>
    %87 = vector.extract_strided_slice %75 {offsets = [0, 72], sizes = [16, 8], strides = [1, 1]} : vector<16x128xf32> to vector<16x8xf32>
    %88 = vector.extract_strided_slice %75 {offsets = [0, 80], sizes = [16, 8], strides = [1, 1]} : vector<16x128xf32> to vector<16x8xf32>
    %89 = vector.extract_strided_slice %75 {offsets = [0, 88], sizes = [16, 8], strides = [1, 1]} : vector<16x128xf32> to vector<16x8xf32>
    %90 = tpu.concatenate %86, %87, %88, %89 in 0 : vector<16x8xf32>, vector<16x8xf32>, vector<16x8xf32>, vector<16x8xf32> -> vector<64x8xf32>
    %91 = arith.truncf %80 : vector<64x8xf32> to vector<64x8xbf16>
    %92 = arith.truncf %85 : vector<64x8xf32> to vector<64x8xbf16>
    %cst_34 = arith.constant dense<0.000000e+00> : vector<64x64xf32>
    %93 = tpu.matmul %91, %92, %cst_34 {dimension_numbers = #tpu.dot_dimension_numbers<[1], [1], [0], [0], [0, 0, 1, 0], [], []>} : vector<64x8xbf16>, vector<64x8xbf16>, vector<64x64xf32> -> vector<64x64xf32>
    %94 = arith.addf %93, %41 : vector<64x64xf32>
    %cst_35 = arith.constant dense<0xFF800000> : vector<64xf32>
    %95 = vector.multi_reduction <maximumf>, %94, %cst_35 [1] : vector<64x64xf32> to vector<64xf32>
    %96 = vector.shape_cast %95 : vector<64xf32> to vector<64x1xf32>
    %97 = vector.broadcast %96 : vector<64x1xf32> to vector<64x64xf32>
    %98 = arith.subf %94, %97 : vector<64x64xf32>
    %99 = math.exp %98 : vector<64x64xf32>
    %cst_36 = arith.constant dense<0.000000e+00> : vector<64xf32>
    %100 = vector.multi_reduction <add>, %99, %cst_36 [1] : vector<64x64xf32> to vector<64xf32>
    %101 = vector.shape_cast %100 : vector<64xf32> to vector<64x1xf32>
    %cst_37 = arith.constant 1.000000e+00 : f32
    %102 = vector.broadcast %cst_37 : f32 to vector<64x1xf32>
    %103 = arith.divf %102, %101 : vector<64x1xf32>
    %104 = vector.broadcast %103 : vector<64x1xf32> to vector<64x64xf32>
    %105 = arith.mulf %99, %104 : vector<64x64xf32>
    %106 = arith.truncf %105 : vector<64x64xf32> to vector<64x64xbf16>
    %107 = arith.truncf %90 : vector<64x8xf32> to vector<64x8xbf16>
    %cst_38 = arith.constant dense<0.000000e+00> : vector<64x8xf32>
    %108 = tpu.matmul %106, %107, %cst_38 {dimension_numbers = #tpu.dot_dimension_numbers<[1], [0], [0], [1], [0, 0, 1, 1], [], []>} : vector<64x64xbf16>, vector<64x8xbf16>, vector<64x8xf32> -> vector<64x8xf32>
    %109 = vector.extract_strided_slice %108 {offsets = [0, 0], sizes = [16, 8], strides = [1, 1]} : vector<64x8xf32> to vector<16x8xf32>
    %110 = vector.extract_strided_slice %108 {offsets = [16, 0], sizes = [16, 8], strides = [1, 1]} : vector<64x8xf32> to vector<16x8xf32>
    %111 = vector.extract_strided_slice %108 {offsets = [32, 0], sizes = [16, 8], strides = [1, 1]} : vector<64x8xf32> to vector<16x8xf32>
    %112 = vector.extract_strided_slice %108 {offsets = [48, 0], sizes = [16, 8], strides = [1, 1]} : vector<64x8xf32> to vector<16x8xf32>
    %113 = tpu.concatenate %109, %110, %111, %112 in 1 : vector<16x8xf32>, vector<16x8xf32>, vector<16x8xf32>, vector<16x8xf32> -> vector<16x32xf32>
    %114 = arith.truncf %113 : vector<16x32xf32> to vector<16x32xbf16>
    %c0_39 = arith.constant 0 : index
    %c0_40 = arith.constant 0 : index
    %c0_41 = arith.constant 0 : index
    %115 = vector.load %arg11[%c0_39, %c0_40, %c0_41] : memref<2x32x32xbf16, #tpu.memory_space<vmem>>, vector<1x32x32xbf16>
    %116 = vector.shape_cast %115 : vector<1x32x32xbf16> to vector<32x32xbf16>
    %cst_42 = arith.constant dense<0.000000e+00> : vector<16x32xf32>
    %117 = tpu.matmul %114, %116, %cst_42 {dimension_numbers = #tpu.dot_dimension_numbers<[1], [0], [0], [1], [0, 0, 1, 1], [], []>} : vector<16x32xbf16>, vector<32x32xbf16>, vector<16x32xf32> -> vector<16x32xf32>
    %c0_43 = arith.constant 0 : index
    %c0_44 = arith.constant 0 : index
    %c0_45 = arith.constant 0 : index
    %118 = vector.load %arg12[%c0_43, %c0_44, %c0_45] : memref<2x1x32xf32, #tpu.memory_space<vmem>>, vector<1x1x32xf32>
    %119 = vector.shape_cast %118 : vector<1x1x32xf32> to vector<1x32xf32>
    %120 = vector.broadcast %119 : vector<1x32xf32> to vector<16x32xf32>
    %121 = arith.addf %117, %120 : vector<16x32xf32>
    %122 = arith.addf %10, %121 : vector<16x32xf32>
    %c0_46 = arith.constant 0 : index
    %c0_47 = arith.constant 0 : index
    %c0_48 = arith.constant 0 : index
    %123 = vector.load %arg7[%c0_46, %c0_47, %c0_48] : memref<2x1x32xf32, #tpu.memory_space<vmem>>, vector<1x1x32xf32>
    %124 = vector.shape_cast %123 : vector<1x1x32xf32> to vector<1x32xf32>
    %c0_49 = arith.constant 0 : index
    %c0_50 = arith.constant 0 : index
    %c0_51 = arith.constant 0 : index
    %125 = vector.load %arg8[%c0_49, %c0_50, %c0_51] : memref<2x1x32xf32, #tpu.memory_space<vmem>>, vector<1x1x32xf32>
    %126 = vector.shape_cast %125 : vector<1x1x32xf32> to vector<1x32xf32>
    %cst_52 = arith.constant dense<0.000000e+00> : vector<16xf32>
    %127 = vector.multi_reduction <add>, %122, %cst_52 [1] : vector<16x32xf32> to vector<16xf32>
    %128 = vector.shape_cast %127 : vector<16xf32> to vector<16x1xf32>
    %cst_53 = arith.constant 3.200000e+01 : f32
    %129 = vector.broadcast %cst_53 : f32 to vector<16x1xf32>
    %130 = arith.divf %128, %129 : vector<16x1xf32>
    %131 = vector.broadcast %130 : vector<16x1xf32> to vector<16x32xf32>
    %132 = arith.subf %122, %131 : vector<16x32xf32>
    %133 = arith.mulf %132, %132 : vector<16x32xf32>
    %cst_54 = arith.constant dense<0.000000e+00> : vector<16xf32>
    %134 = vector.multi_reduction <add>, %133, %cst_54 [1] : vector<16x32xf32> to vector<16xf32>
    %135 = vector.shape_cast %134 : vector<16xf32> to vector<16x1xf32>
    %cst_55 = arith.constant 3.200000e+01 : f32
    %136 = vector.broadcast %cst_55 : f32 to vector<16x1xf32>
    %137 = arith.divf %135, %136 : vector<16x1xf32>
    %138 = vector.broadcast %130 : vector<16x1xf32> to vector<16x32xf32>
    %139 = arith.subf %122, %138 : vector<16x32xf32>
    %cst_56 = arith.constant 9.99999974E-6 : f32
    %140 = vector.broadcast %cst_56 : f32 to vector<16x1xf32>
    %141 = arith.addf %137, %140 : vector<16x1xf32>
    %142 = math.rsqrt %141 : vector<16x1xf32>
    %143 = vector.broadcast %142 : vector<16x1xf32> to vector<16x32xf32>
    %144 = arith.mulf %139, %143 : vector<16x32xf32>
    %145 = vector.broadcast %124 : vector<1x32xf32> to vector<16x32xf32>
    %146 = arith.mulf %144, %145 : vector<16x32xf32>
    %147 = vector.broadcast %126 : vector<1x32xf32> to vector<16x32xf32>
    %148 = arith.addf %146, %147 : vector<16x32xf32>
    %149 = arith.truncf %148 : vector<16x32xf32> to vector<16x32xbf16>
    %c0_57 = arith.constant 0 : index
    %c0_58 = arith.constant 0 : index
    %c0_59 = arith.constant 0 : index
    %150 = vector.load %arg13[%c0_57, %c0_58, %c0_59] : memref<2x32x128xbf16, #tpu.memory_space<vmem>>, vector<1x32x128xbf16>
    %151 = vector.shape_cast %150 : vector<1x32x128xbf16> to vector<32x128xbf16>
    %cst_60 = arith.constant dense<0.000000e+00> : vector<16x128xf32>
    %152 = tpu.matmul %149, %151, %cst_60 {dimension_numbers = #tpu.dot_dimension_numbers<[1], [0], [0], [1], [0, 0, 1, 1], [], []>} : vector<16x32xbf16>, vector<32x128xbf16>, vector<16x128xf32> -> vector<16x128xf32>
    %c0_61 = arith.constant 0 : index
    %c0_62 = arith.constant 0 : index
    %c0_63 = arith.constant 0 : index
    %153 = vector.load %arg14[%c0_61, %c0_62, %c0_63] : memref<2x1x128xf32, #tpu.memory_space<vmem>>, vector<1x1x128xf32>
    %154 = vector.shape_cast %153 : vector<1x1x128xf32> to vector<1x128xf32>
    %155 = vector.broadcast %154 : vector<1x128xf32> to vector<16x128xf32>
    %156 = arith.addf %152, %155 : vector<16x128xf32>
    %cst_64 = arith.constant 5.000000e-01 : f32
    %157 = vector.broadcast %cst_64 : f32 to vector<16x128xf32>
    %158 = arith.mulf %157, %156 : vector<16x128xf32>
    %cst_65 = arith.constant 4.471500e-02 : f32
    %159 = vector.broadcast %cst_65 : f32 to vector<16x128xf32>
    %160 = arith.mulf %159, %156 : vector<16x128xf32>
    %161 = arith.mulf %160, %156 : vector<16x128xf32>
    %162 = arith.mulf %161, %156 : vector<16x128xf32>
    %163 = arith.addf %156, %162 : vector<16x128xf32>
    %cst_66 = arith.constant 0.797884583 : f32
    %164 = vector.broadcast %cst_66 : f32 to vector<16x128xf32>
    %165 = arith.mulf %164, %163 : vector<16x128xf32>
    %166 = math.tanh %165 : vector<16x128xf32>
    %cst_67 = arith.constant 1.000000e+00 : f32
    %167 = vector.broadcast %cst_67 : f32 to vector<16x128xf32>
    %168 = arith.addf %167, %166 : vector<16x128xf32>
    %169 = arith.mulf %158, %168 : vector<16x128xf32>
    %170 = arith.truncf %169 : vector<16x128xf32> to vector<16x128xbf16>
    %c0_68 = arith.constant 0 : index
    %c0_69 = arith.constant 0 : index
    %c0_70 = arith.constant 0 : index
    %171 = vector.load %arg15[%c0_68, %c0_69, %c0_70] : memref<2x128x32xbf16, #tpu.memory_space<vmem>>, vector<1x128x32xbf16>
    %172 = vector.shape_cast %171 : vector<1x128x32xbf16> to vector<128x32xbf16>
    %cst_71 = arith.constant dense<0.000000e+00> : vector<16x32xf32>
    %173 = tpu.matmul %170, %172, %cst_71 {dimension_numbers = #tpu.dot_dimension_numbers<[1], [0], [0], [1], [0, 0, 1, 1], [], []>} : vector<16x128xbf16>, vector<128x32xbf16>, vector<16x32xf32> -> vector<16x32xf32>
    %c0_72 = arith.constant 0 : index
    %c0_73 = arith.constant 0 : index
    %c0_74 = arith.constant 0 : index
    %174 = vector.load %arg16[%c0_72, %c0_73, %c0_74] : memref<2x1x32xf32, #tpu.memory_space<vmem>>, vector<1x1x32xf32>
    %175 = vector.shape_cast %174 : vector<1x1x32xf32> to vector<1x32xf32>
    %176 = vector.broadcast %175 : vector<1x32xf32> to vector<16x32xf32>
    %177 = arith.addf %173, %176 : vector<16x32xf32>
    %178 = arith.addf %122, %177 : vector<16x32xf32>
    %c1 = arith.constant 1 : index
    %c0_75 = arith.constant 0 : index
    %c0_76 = arith.constant 0 : index
    %179 = vector.load %arg5[%c1, %c0_75, %c0_76] : memref<2x1x32xf32, #tpu.memory_space<vmem>>, vector<1x1x32xf32>
    %180 = vector.shape_cast %179 : vector<1x1x32xf32> to vector<1x32xf32>
    %c1_77 = arith.constant 1 : index
    %c0_78 = arith.constant 0 : index
    %c0_79 = arith.constant 0 : index
    %181 = vector.load %arg6[%c1_77, %c0_78, %c0_79] : memref<2x1x32xf32, #tpu.memory_space<vmem>>, vector<1x1x32xf32>
    %182 = vector.shape_cast %181 : vector<1x1x32xf32> to vector<1x32xf32>
    %cst_80 = arith.constant dense<0.000000e+00> : vector<16xf32>
    %183 = vector.multi_reduction <add>, %178, %cst_80 [1] : vector<16x32xf32> to vector<16xf32>
    %184 = vector.shape_cast %183 : vector<16xf32> to vector<16x1xf32>
    %cst_81 = arith.constant 3.200000e+01 : f32
    %185 = vector.broadcast %cst_81 : f32 to vector<16x1xf32>
    %186 = arith.divf %184, %185 : vector<16x1xf32>
    %187 = vector.broadcast %186 : vector<16x1xf32> to vector<16x32xf32>
    %188 = arith.subf %178, %187 : vector<16x32xf32>
    %189 = arith.mulf %188, %188 : vector<16x32xf32>
    %cst_82 = arith.constant dense<0.000000e+00> : vector<16xf32>
    %190 = vector.multi_reduction <add>, %189, %cst_82 [1] : vector<16x32xf32> to vector<16xf32>
    %191 = vector.shape_cast %190 : vector<16xf32> to vector<16x1xf32>
    %cst_83 = arith.constant 3.200000e+01 : f32
    %192 = vector.broadcast %cst_83 : f32 to vector<16x1xf32>
    %193 = arith.divf %191, %192 : vector<16x1xf32>
    %194 = vector.broadcast %186 : vector<16x1xf32> to vector<16x32xf32>
    %195 = arith.subf %178, %194 : vector<16x32xf32>
    %cst_84 = arith.constant 9.99999974E-6 : f32
    %196 = vector.broadcast %cst_84 : f32 to vector<16x1xf32>
    %197 = arith.addf %193, %196 : vector<16x1xf32>
    %198 = math.rsqrt %197 : vector<16x1xf32>
    %199 = vector.broadcast %198 : vector<16x1xf32> to vector<16x32xf32>
    %200 = arith.mulf %195, %199 : vector<16x32xf32>
    %201 = vector.broadcast %180 : vector<1x32xf32> to vector<16x32xf32>
    %202 = arith.mulf %200, %201 : vector<16x32xf32>
    %203 = vector.broadcast %182 : vector<1x32xf32> to vector<16x32xf32>
    %204 = arith.addf %202, %203 : vector<16x32xf32>
    %205 = arith.truncf %204 : vector<16x32xf32> to vector<16x32xbf16>
    %c1_85 = arith.constant 1 : index
    %c0_86 = arith.constant 0 : index
    %c0_87 = arith.constant 0 : index
    %206 = vector.load %arg9[%c1_85, %c0_86, %c0_87] : memref<2x32x128xbf16, #tpu.memory_space<vmem>>, vector<1x32x128xbf16>
    %207 = vector.shape_cast %206 : vector<1x32x128xbf16> to vector<32x128xbf16>
    %cst_88 = arith.constant dense<0.000000e+00> : vector<16x128xf32>
    %208 = tpu.matmul %205, %207, %cst_88 {dimension_numbers = #tpu.dot_dimension_numbers<[1], [0], [0], [1], [0, 0, 1, 1], [], []>} : vector<16x32xbf16>, vector<32x128xbf16>, vector<16x128xf32> -> vector<16x128xf32>
    %c1_89 = arith.constant 1 : index
    %c0_90 = arith.constant 0 : index
    %c0_91 = arith.constant 0 : index
    %209 = vector.load %arg10[%c1_89, %c0_90, %c0_91] : memref<2x1x128xf32, #tpu.memory_space<vmem>>, vector<1x1x128xf32>
    %210 = vector.shape_cast %209 : vector<1x1x128xf32> to vector<1x128xf32>
    %211 = vector.broadcast %210 : vector<1x128xf32> to vector<16x128xf32>
    %212 = arith.addf %208, %211 : vector<16x128xf32>
    %213 = vector.extract_strided_slice %212 {offsets = [0, 0], sizes = [16, 8], strides = [1, 1]} : vector<16x128xf32> to vector<16x8xf32>
    %214 = vector.extract_strided_slice %212 {offsets = [0, 8], sizes = [16, 8], strides = [1, 1]} : vector<16x128xf32> to vector<16x8xf32>
    %215 = vector.extract_strided_slice %212 {offsets = [0, 16], sizes = [16, 8], strides = [1, 1]} : vector<16x128xf32> to vector<16x8xf32>
    %216 = vector.extract_strided_slice %212 {offsets = [0, 24], sizes = [16, 8], strides = [1, 1]} : vector<16x128xf32> to vector<16x8xf32>
    %217 = tpu.concatenate %213, %214, %215, %216 in 0 : vector<16x8xf32>, vector<16x8xf32>, vector<16x8xf32>, vector<16x8xf32> -> vector<64x8xf32>
    %218 = vector.extract_strided_slice %212 {offsets = [0, 32], sizes = [16, 8], strides = [1, 1]} : vector<16x128xf32> to vector<16x8xf32>
    %219 = vector.extract_strided_slice %212 {offsets = [0, 40], sizes = [16, 8], strides = [1, 1]} : vector<16x128xf32> to vector<16x8xf32>
    %220 = vector.extract_strided_slice %212 {offsets = [0, 48], sizes = [16, 8], strides = [1, 1]} : vector<16x128xf32> to vector<16x8xf32>
    %221 = vector.extract_strided_slice %212 {offsets = [0, 56], sizes = [16, 8], strides = [1, 1]} : vector<16x128xf32> to vector<16x8xf32>
    %222 = tpu.concatenate %218, %219, %220, %221 in 0 : vector<16x8xf32>, vector<16x8xf32>, vector<16x8xf32>, vector<16x8xf32> -> vector<64x8xf32>
    %223 = vector.extract_strided_slice %212 {offsets = [0, 64], sizes = [16, 8], strides = [1, 1]} : vector<16x128xf32> to vector<16x8xf32>
    %224 = vector.extract_strided_slice %212 {offsets = [0, 72], sizes = [16, 8], strides = [1, 1]} : vector<16x128xf32> to vector<16x8xf32>
    %225 = vector.extract_strided_slice %212 {offsets = [0, 80], sizes = [16, 8], strides = [1, 1]} : vector<16x128xf32> to vector<16x8xf32>
    %226 = vector.extract_strided_slice %212 {offsets = [0, 88], sizes = [16, 8], strides = [1, 1]} : vector<16x128xf32> to vector<16x8xf32>
    %227 = tpu.concatenate %223, %224, %225, %226 in 0 : vector<16x8xf32>, vector<16x8xf32>, vector<16x8xf32>, vector<16x8xf32> -> vector<64x8xf32>
    %228 = arith.truncf %217 : vector<64x8xf32> to vector<64x8xbf16>
    %229 = arith.truncf %222 : vector<64x8xf32> to vector<64x8xbf16>
    %cst_92 = arith.constant dense<0.000000e+00> : vector<64x64xf32>
    %230 = tpu.matmul %228, %229, %cst_92 {dimension_numbers = #tpu.dot_dimension_numbers<[1], [1], [0], [0], [0, 0, 1, 0], [], []>} : vector<64x8xbf16>, vector<64x8xbf16>, vector<64x64xf32> -> vector<64x64xf32>
    %231 = arith.addf %230, %41 : vector<64x64xf32>
    %cst_93 = arith.constant dense<0xFF800000> : vector<64xf32>
    %232 = vector.multi_reduction <maximumf>, %231, %cst_93 [1] : vector<64x64xf32> to vector<64xf32>
    %233 = vector.shape_cast %232 : vector<64xf32> to vector<64x1xf32>
    %234 = vector.broadcast %233 : vector<64x1xf32> to vector<64x64xf32>
    %235 = arith.subf %231, %234 : vector<64x64xf32>
    %236 = math.exp %235 : vector<64x64xf32>
    %cst_94 = arith.constant dense<0.000000e+00> : vector<64xf32>
    %237 = vector.multi_reduction <add>, %236, %cst_94 [1] : vector<64x64xf32> to vector<64xf32>
    %238 = vector.shape_cast %237 : vector<64xf32> to vector<64x1xf32>
    %cst_95 = arith.constant 1.000000e+00 : f32
    %239 = vector.broadcast %cst_95 : f32 to vector<64x1xf32>
    %240 = arith.divf %239, %238 : vector<64x1xf32>
    %241 = vector.broadcast %240 : vector<64x1xf32> to vector<64x64xf32>
    %242 = arith.mulf %236, %241 : vector<64x64xf32>
    %243 = arith.truncf %242 : vector<64x64xf32> to vector<64x64xbf16>
    %244 = arith.truncf %227 : vector<64x8xf32> to vector<64x8xbf16>
    %cst_96 = arith.constant dense<0.000000e+00> : vector<64x8xf32>
    %245 = tpu.matmul %243, %244, %cst_96 {dimension_numbers = #tpu.dot_dimension_numbers<[1], [0], [0], [1], [0, 0, 1, 1], [], []>} : vector<64x64xbf16>, vector<64x8xbf16>, vector<64x8xf32> -> vector<64x8xf32>
    %246 = vector.extract_strided_slice %245 {offsets = [0, 0], sizes = [16, 8], strides = [1, 1]} : vector<64x8xf32> to vector<16x8xf32>
    %247 = vector.extract_strided_slice %245 {offsets = [16, 0], sizes = [16, 8], strides = [1, 1]} : vector<64x8xf32> to vector<16x8xf32>
    %248 = vector.extract_strided_slice %245 {offsets = [32, 0], sizes = [16, 8], strides = [1, 1]} : vector<64x8xf32> to vector<16x8xf32>
    %249 = vector.extract_strided_slice %245 {offsets = [48, 0], sizes = [16, 8], strides = [1, 1]} : vector<64x8xf32> to vector<16x8xf32>
    %250 = tpu.concatenate %246, %247, %248, %249 in 1 : vector<16x8xf32>, vector<16x8xf32>, vector<16x8xf32>, vector<16x8xf32> -> vector<16x32xf32>
    %251 = arith.truncf %250 : vector<16x32xf32> to vector<16x32xbf16>
    %c1_97 = arith.constant 1 : index
    %c0_98 = arith.constant 0 : index
    %c0_99 = arith.constant 0 : index
    %252 = vector.load %arg11[%c1_97, %c0_98, %c0_99] : memref<2x32x32xbf16, #tpu.memory_space<vmem>>, vector<1x32x32xbf16>
    %253 = vector.shape_cast %252 : vector<1x32x32xbf16> to vector<32x32xbf16>
    %cst_100 = arith.constant dense<0.000000e+00> : vector<16x32xf32>
    %254 = tpu.matmul %251, %253, %cst_100 {dimension_numbers = #tpu.dot_dimension_numbers<[1], [0], [0], [1], [0, 0, 1, 1], [], []>} : vector<16x32xbf16>, vector<32x32xbf16>, vector<16x32xf32> -> vector<16x32xf32>
    %c1_101 = arith.constant 1 : index
    %c0_102 = arith.constant 0 : index
    %c0_103 = arith.constant 0 : index
    %255 = vector.load %arg12[%c1_101, %c0_102, %c0_103] : memref<2x1x32xf32, #tpu.memory_space<vmem>>, vector<1x1x32xf32>
    %256 = vector.shape_cast %255 : vector<1x1x32xf32> to vector<1x32xf32>
    %257 = vector.broadcast %256 : vector<1x32xf32> to vector<16x32xf32>
    %258 = arith.addf %254, %257 : vector<16x32xf32>
    %259 = arith.addf %178, %258 : vector<16x32xf32>
    %c1_104 = arith.constant 1 : index
    %c0_105 = arith.constant 0 : index
    %c0_106 = arith.constant 0 : index
    %260 = vector.load %arg7[%c1_104, %c0_105, %c0_106] : memref<2x1x32xf32, #tpu.memory_space<vmem>>, vector<1x1x32xf32>
    %261 = vector.shape_cast %260 : vector<1x1x32xf32> to vector<1x32xf32>
    %c1_107 = arith.constant 1 : index
    %c0_108 = arith.constant 0 : index
    %c0_109 = arith.constant 0 : index
    %262 = vector.load %arg8[%c1_107, %c0_108, %c0_109] : memref<2x1x32xf32, #tpu.memory_space<vmem>>, vector<1x1x32xf32>
    %263 = vector.shape_cast %262 : vector<1x1x32xf32> to vector<1x32xf32>
    %cst_110 = arith.constant dense<0.000000e+00> : vector<16xf32>
    %264 = vector.multi_reduction <add>, %259, %cst_110 [1] : vector<16x32xf32> to vector<16xf32>
    %265 = vector.shape_cast %264 : vector<16xf32> to vector<16x1xf32>
    %cst_111 = arith.constant 3.200000e+01 : f32
    %266 = vector.broadcast %cst_111 : f32 to vector<16x1xf32>
    %267 = arith.divf %265, %266 : vector<16x1xf32>
    %268 = vector.broadcast %267 : vector<16x1xf32> to vector<16x32xf32>
    %269 = arith.subf %259, %268 : vector<16x32xf32>
    %270 = arith.mulf %269, %269 : vector<16x32xf32>
    %cst_112 = arith.constant dense<0.000000e+00> : vector<16xf32>
    %271 = vector.multi_reduction <add>, %270, %cst_112 [1] : vector<16x32xf32> to vector<16xf32>
    %272 = vector.shape_cast %271 : vector<16xf32> to vector<16x1xf32>
    %cst_113 = arith.constant 3.200000e+01 : f32
    %273 = vector.broadcast %cst_113 : f32 to vector<16x1xf32>
    %274 = arith.divf %272, %273 : vector<16x1xf32>
    %275 = vector.broadcast %267 : vector<16x1xf32> to vector<16x32xf32>
    %276 = arith.subf %259, %275 : vector<16x32xf32>
    %cst_114 = arith.constant 9.99999974E-6 : f32
    %277 = vector.broadcast %cst_114 : f32 to vector<16x1xf32>
    %278 = arith.addf %274, %277 : vector<16x1xf32>
    %279 = math.rsqrt %278 : vector<16x1xf32>
    %280 = vector.broadcast %279 : vector<16x1xf32> to vector<16x32xf32>
    %281 = arith.mulf %276, %280 : vector<16x32xf32>
    %282 = vector.broadcast %261 : vector<1x32xf32> to vector<16x32xf32>
    %283 = arith.mulf %281, %282 : vector<16x32xf32>
    %284 = vector.broadcast %263 : vector<1x32xf32> to vector<16x32xf32>
    %285 = arith.addf %283, %284 : vector<16x32xf32>
    %286 = arith.truncf %285 : vector<16x32xf32> to vector<16x32xbf16>
    %c1_115 = arith.constant 1 : index
    %c0_116 = arith.constant 0 : index
    %c0_117 = arith.constant 0 : index
    %287 = vector.load %arg13[%c1_115, %c0_116, %c0_117] : memref<2x32x128xbf16, #tpu.memory_space<vmem>>, vector<1x32x128xbf16>
    %288 = vector.shape_cast %287 : vector<1x32x128xbf16> to vector<32x128xbf16>
    %cst_118 = arith.constant dense<0.000000e+00> : vector<16x128xf32>
    %289 = tpu.matmul %286, %288, %cst_118 {dimension_numbers = #tpu.dot_dimension_numbers<[1], [0], [0], [1], [0, 0, 1, 1], [], []>} : vector<16x32xbf16>, vector<32x128xbf16>, vector<16x128xf32> -> vector<16x128xf32>
    %c1_119 = arith.constant 1 : index
    %c0_120 = arith.constant 0 : index
    %c0_121 = arith.constant 0 : index
    %290 = vector.load %arg14[%c1_119, %c0_120, %c0_121] : memref<2x1x128xf32, #tpu.memory_space<vmem>>, vector<1x1x128xf32>
    %291 = vector.shape_cast %290 : vector<1x1x128xf32> to vector<1x128xf32>
    %292 = vector.broadcast %291 : vector<1x128xf32> to vector<16x128xf32>
    %293 = arith.addf %289, %292 : vector<16x128xf32>
    %cst_122 = arith.constant 5.000000e-01 : f32
    %294 = vector.broadcast %cst_122 : f32 to vector<16x128xf32>
    %295 = arith.mulf %294, %293 : vector<16x128xf32>
    %cst_123 = arith.constant 4.471500e-02 : f32
    %296 = vector.broadcast %cst_123 : f32 to vector<16x128xf32>
    %297 = arith.mulf %296, %293 : vector<16x128xf32>
    %298 = arith.mulf %297, %293 : vector<16x128xf32>
    %299 = arith.mulf %298, %293 : vector<16x128xf32>
    %300 = arith.addf %293, %299 : vector<16x128xf32>
    %cst_124 = arith.constant 0.797884583 : f32
    %301 = vector.broadcast %cst_124 : f32 to vector<16x128xf32>
    %302 = arith.mulf %301, %300 : vector<16x128xf32>
    %303 = math.tanh %302 : vector<16x128xf32>
    %cst_125 = arith.constant 1.000000e+00 : f32
    %304 = vector.broadcast %cst_125 : f32 to vector<16x128xf32>
    %305 = arith.addf %304, %303 : vector<16x128xf32>
    %306 = arith.mulf %295, %305 : vector<16x128xf32>
    %307 = arith.truncf %306 : vector<16x128xf32> to vector<16x128xbf16>
    %c1_126 = arith.constant 1 : index
    %c0_127 = arith.constant 0 : index
    %c0_128 = arith.constant 0 : index
    %308 = vector.load %arg15[%c1_126, %c0_127, %c0_128] : memref<2x128x32xbf16, #tpu.memory_space<vmem>>, vector<1x128x32xbf16>
    %309 = vector.shape_cast %308 : vector<1x128x32xbf16> to vector<128x32xbf16>
    %cst_129 = arith.constant dense<0.000000e+00> : vector<16x32xf32>
    %310 = tpu.matmul %307, %309, %cst_129 {dimension_numbers = #tpu.dot_dimension_numbers<[1], [0], [0], [1], [0, 0, 1, 1], [], []>} : vector<16x128xbf16>, vector<128x32xbf16>, vector<16x32xf32> -> vector<16x32xf32>
    %c1_130 = arith.constant 1 : index
    %c0_131 = arith.constant 0 : index
    %c0_132 = arith.constant 0 : index
    %311 = vector.load %arg16[%c1_130, %c0_131, %c0_132] : memref<2x1x32xf32, #tpu.memory_space<vmem>>, vector<1x1x32xf32>
    %312 = vector.shape_cast %311 : vector<1x1x32xf32> to vector<1x32xf32>
    %313 = vector.broadcast %312 : vector<1x32xf32> to vector<16x32xf32>
    %314 = arith.addf %310, %313 : vector<16x32xf32>
    %315 = arith.addf %259, %314 : vector<16x32xf32>
    %c0_133 = arith.constant 0 : index
    %c0_134 = arith.constant 0 : index
    %316 = vector.load %arg17[%c0_133, %c0_134] : memref<1x32xf32, #tpu.memory_space<vmem>>, vector<1x32xf32>
    %c0_135 = arith.constant 0 : index
    %c0_136 = arith.constant 0 : index
    %317 = vector.load %arg18[%c0_135, %c0_136] : memref<1x32xf32, #tpu.memory_space<vmem>>, vector<1x32xf32>
    %cst_137 = arith.constant dense<0.000000e+00> : vector<16xf32>
    %318 = vector.multi_reduction <add>, %315, %cst_137 [1] : vector<16x32xf32> to vector<16xf32>
    %319 = vector.shape_cast %318 : vector<16xf32> to vector<16x1xf32>
    %cst_138 = arith.constant 3.200000e+01 : f32
    %320 = vector.broadcast %cst_138 : f32 to vector<16x1xf32>
    %321 = arith.divf %319, %320 : vector<16x1xf32>
    %322 = vector.broadcast %321 : vector<16x1xf32> to vector<16x32xf32>
    %323 = arith.subf %315, %322 : vector<16x32xf32>
    %324 = arith.mulf %323, %323 : vector<16x32xf32>
    %cst_139 = arith.constant dense<0.000000e+00> : vector<16xf32>
    %325 = vector.multi_reduction <add>, %324, %cst_139 [1] : vector<16x32xf32> to vector<16xf32>
    %326 = vector.shape_cast %325 : vector<16xf32> to vector<16x1xf32>
    %cst_140 = arith.constant 3.200000e+01 : f32
    %327 = vector.broadcast %cst_140 : f32 to vector<16x1xf32>
    %328 = arith.divf %326, %327 : vector<16x1xf32>
    %329 = vector.broadcast %321 : vector<16x1xf32> to vector<16x32xf32>
    %330 = arith.subf %315, %329 : vector<16x32xf32>
    %cst_141 = arith.constant 9.99999974E-6 : f32
    %331 = vector.broadcast %cst_141 : f32 to vector<16x1xf32>
    %332 = arith.addf %328, %331 : vector<16x1xf32>
    %333 = math.rsqrt %332 : vector<16x1xf32>
    %334 = vector.broadcast %333 : vector<16x1xf32> to vector<16x32xf32>
    %335 = arith.mulf %330, %334 : vector<16x32xf32>
    %336 = vector.broadcast %316 : vector<1x32xf32> to vector<16x32xf32>
    %337 = arith.mulf %335, %336 : vector<16x32xf32>
    %338 = vector.broadcast %317 : vector<1x32xf32> to vector<16x32xf32>
    %339 = arith.addf %337, %338 : vector<16x32xf32>
    %340 = arith.truncf %339 : vector<16x32xf32> to vector<16x32xbf16>
    %c0_142 = arith.constant 0 : index
    %c0_143 = arith.constant 0 : index
    %341 = vector.load %arg19[%c0_142, %c0_143] : memref<32x128xbf16, #tpu.memory_space<vmem>>, vector<32x128xbf16>
    %cst_144 = arith.constant dense<0.000000e+00> : vector<16x128xf32>
    %342 = tpu.matmul %340, %341, %cst_144 {dimension_numbers = #tpu.dot_dimension_numbers<[1], [0], [0], [1], [0, 0, 1, 1], [], []>} : vector<16x32xbf16>, vector<32x128xbf16>, vector<16x128xf32> -> vector<16x128xf32>
    %c0_145 = arith.constant 0 : index
    %c0_146 = arith.constant 0 : index
    %343 = vector.load %arg20[%c0_145, %c0_146] : memref<1x128xf32, #tpu.memory_space<vmem>>, vector<1x128xf32>
    %344 = vector.broadcast %343 : vector<1x128xf32> to vector<16x128xf32>
    %345 = arith.addf %342, %344 : vector<16x128xf32>
    %346 = vector.shape_cast %345 : vector<16x128xf32> to vector<1x16x128xf32>
    %c0_147 = arith.constant 0 : index
    %c0_148 = arith.constant 0 : index
    %c0_149 = arith.constant 0 : index
    %347 = vector.load %arg21[%c0_147, %c0_148, %c0_149] : memref<1x16x128xf32, #tpu.memory_space<vmem>>, vector<1x16x128xf32>
    tpu.vector_store %arg21[%c0_147, %c0_148, %c0_149], %346 {strides = array<i32>} : memref<1x16x128xf32, #tpu.memory_space<vmem>>, vector<1x16x128xf32>,
    return
  }
  func.func @transform_0(%arg0: i32) -> (i32, i32, i32) {
    %c0_i32 = arith.constant 0 : i32
    %c0_i32_0 = arith.constant 0 : i32
    %c0_i32_1 = arith.constant 0 : i32
    return %arg0, %c0_i32, %c0_i32_0 : i32, i32, i32
  }
  func.func @transform_1(%arg0: i32) -> (i32, i32, i32) {
    %c0_i32 = arith.constant 0 : i32
    %c0_i32_0 = arith.constant 0 : i32
    %c0_i32_1 = arith.constant 0 : i32
    return %arg0, %c0_i32, %c0_i32_0 : i32, i32, i32
  }
  func.func @transform_2(%arg0: i32) -> (i32, i32) {
    %c0_i32 = arith.constant 0 : i32
    %c0_i32_0 = arith.constant 0 : i32
    %c0_i32_1 = arith.constant 0 : i32
    return %c0_i32, %c0_i32_0 : i32, i32
  }
  func.func @transform_3(%arg0: i32) -> (i32, i32) {
    %c0_i32 = arith.constant 0 : i32
    %c0_i32_0 = arith.constant 0 : i32
    %c0_i32_1 = arith.constant 0 : i32
    return %c0_i32, %c0_i32_0 : i32, i32
  }
  func.func @transform_4(%arg0: i32) -> (i32, i32, i32) {
    %c0_i32 = arith.constant 0 : i32
    %c0_i32_0 = arith.constant 0 : i32
    %c0_i32_1 = arith.constant 0 : i32
    %c0_i32_2 = arith.constant 0 : i32
    return %c0_i32, %c0_i32_0, %c0_i32_1 : i32, i32, i32
  }
  func.func @transform_5(%arg0: i32) -> (i32, i32, i32) {
    %c0_i32 = arith.constant 0 : i32
    %c0_i32_0 = arith.constant 0 : i32
    %c0_i32_1 = arith.constant 0 : i32
    %c0_i32_2 = arith.constant 0 : i32
    return %c0_i32, %c0_i32_0, %c0_i32_1 : i32, i32, i32
  }
  func.func @transform_6(%arg0: i32) -> (i32, i32, i32) {
    %c0_i32 = arith.constant 0 : i32
    %c0_i32_0 = arith.constant 0 : i32
    %c0_i32_1 = arith.constant 0 : i32
    %c0_i32_2 = arith.constant 0 : i32
    return %c0_i32, %c0_i32_0, %c0_i32_1 : i32, i32, i32
  }
  func.func @transform_7(%arg0: i32) -> (i32, i32, i32) {
    %c0_i32 = arith.constant 0 : i32
    %c0_i32_0 = arith.constant 0 : i32
    %c0_i32_1 = arith.constant 0 : i32
    %c0_i32_2 = arith.constant 0 : i32
    return %c0_i32, %c0_i32_0, %c0_i32_1 : i32, i32, i32
  }
  func.func @transform_8(%arg0: i32) -> (i32, i32, i32) {
    %c0_i32 = arith.constant 0 : i32
    %c0_i32_0 = arith.constant 0 : i32
    %c0_i32_1 = arith.constant 0 : i32
    %c0_i32_2 = arith.constant 0 : i32
    return %c0_i32, %c0_i32_0, %c0_i32_1 : i32, i32, i32
  }
  func.func @transform_9(%arg0: i32) -> (i32, i32, i32) {
    %c0_i32 = arith.constant 0 : i32
    %c0_i32_0 = arith.constant 0 : i32
    %c0_i32_1 = arith.constant 0 : i32
    %c0_i32_2 = arith.constant 0 : i32
    return %c0_i32, %c0_i32_0, %c0_i32_1 : i32, i32, i32
  }
  func.func @transform_10(%arg0: i32) -> (i32, i32, i32) {
    %c0_i32 = arith.constant 0 : i32
    %c0_i32_0 = arith.constant 0 : i32
    %c0_i32_1 = arith.constant 0 : i32
    %c0_i32_2 = arith.constant 0 : i32
    return %c0_i32, %c0_i32_0, %c0_i32_1 : i32, i32, i32
  }
  func.func @transform_11(%arg0: i32) -> (i32, i32, i32) {
    %c0_i32 = arith.constant 0 : i32
    %c0_i32_0 = arith.constant 0 : i32
    %c0_i32_1 = arith.constant 0 : i32
    %c0_i32_2 = arith.constant 0 : i32
    return %c0_i32, %c0_i32_0, %c0_i32_1 : i32, i32, i32
  }
  func.func @transform_12(%arg0: i32) -> (i32, i32, i32) {
    %c0_i32 = arith.constant 0 : i32
    %c0_i32_0 = arith.constant 0 : i32
    %c0_i32_1 = arith.constant 0 : i32
    %c0_i32_2 = arith.constant 0 : i32
    return %c0_i32, %c0_i32_0, %c0_i32_1 : i32, i32, i32
  }
  func.func @transform_13(%arg0: i32) -> (i32, i32, i32) {
    %c0_i32 = arith.constant 0 : i32
    %c0_i32_0 = arith.constant 0 : i32
    %c0_i32_1 = arith.constant 0 : i32
    %c0_i32_2 = arith.constant 0 : i32
    return %c0_i32, %c0_i32_0, %c0_i32_1 : i32, i32, i32
  }
  func.func @transform_14(%arg0: i32) -> (i32, i32, i32) {
    %c0_i32 = arith.constant 0 : i32
    %c0_i32_0 = arith.constant 0 : i32
    %c0_i32_1 = arith.constant 0 : i32
    %c0_i32_2 = arith.constant 0 : i32
    return %c0_i32, %c0_i32_0, %c0_i32_1 : i32, i32, i32
  }
  func.func @transform_15(%arg0: i32) -> (i32, i32, i32) {
    %c0_i32 = arith.constant 0 : i32
    %c0_i32_0 = arith.constant 0 : i32
    %c0_i32_1 = arith.constant 0 : i32
    %c0_i32_2 = arith.constant 0 : i32
    return %c0_i32, %c0_i32_0, %c0_i32_1 : i32, i32, i32
  }
  func.func @transform_16(%arg0: i32) -> (i32, i32) {
    %c0_i32 = arith.constant 0 : i32
    %c0_i32_0 = arith.constant 0 : i32
    %c0_i32_1 = arith.constant 0 : i32
    return %c0_i32, %c0_i32_0 : i32, i32
  }
  func.func @transform_17(%arg0: i32) -> (i32, i32) {
    %c0_i32 = arith.constant 0 : i32
    %c0_i32_0 = arith.constant 0 : i32
    %c0_i32_1 = arith.constant 0 : i32
    return %c0_i32, %c0_i32_0 : i32, i32
  }
  func.func @transform_18(%arg0: i32) -> (i32, i32) {
    %c0_i32 = arith.constant 0 : i32
    %c0_i32_0 = arith.constant 0 : i32
    %c0_i32_1 = arith.constant 0 : i32
    return %c0_i32, %c0_i32_0 : i32, i32
  }
  func.func @transform_19(%arg0: i32) -> (i32, i32) {
    %c0_i32 = arith.constant 0 : i32
    %c0_i32_0 = arith.constant 0 : i32
    %c0_i32_1 = arith.constant 0 : i32
    return %c0_i32, %c0_i32_0 : i32, i32
  }
  func.func @transform_20(%arg0: i32) -> (i32, i32, i32) {
    %c0_i32 = arith.constant 0 : i32
    %c0_i32_0 = arith.constant 0 : i32
    %c0_i32_1 = arith.constant 0 : i32
    return %arg0, %c0_i32, %c0_i32_0 : i32, i32, i32
  }
}

</mosaic_0001>

<llo_original>
// kernel: tpu_custom_call.1
$region0: #{tpu_custom_call.1}
  #allocation0 [shape = 'u32[]', space=smem, size = 0x4, offset = 0x4, fixed_abs, tag = 'smem constant byte address 0x4 - core index']
  #allocation1 [shape = 'u32[144,128]{1,0:T(1,128)}', space=vmem, size = 0x12000, scoped, tag = 'internal scratch']
  %s0 = inlined_call_operand.vmem [shape: s32[2,16,1], index: 0, kind: input, shape index: {}]
  %s1 = inlined_call_operand.vmem [shape: s32[2,1,16], index: 1, kind: input, shape index: {}]
  %s2 = inlined_call_operand.vmem [shape: f32[50,32], index: 2, kind: input, shape index: {}]
  %s3 = inlined_call_operand.vmem [shape: f32[16,32], index: 3, kind: input, shape index: {}]
  %s4 = inlined_call_operand.vmem [shape: f32[2,1,32], index: 4, kind: input, shape index: {}]
  %s5 = inlined_call_operand.vmem [shape: f32[2,1,32], index: 5, kind: input, shape index: {}]
  %s6 = inlined_call_operand.vmem [shape: f32[2,1,32], index: 6, kind: input, shape index: {}]
  %s7 = inlined_call_operand.vmem [shape: f32[2,1,32], index: 7, kind: input, shape index: {}]
  %s8 = inlined_call_operand.vmem [shape: bf16[2,32,128], index: 8, kind: input, shape index: {}]
  %s9 = inlined_call_operand.vmem [shape: f32[2,1,128], index: 9, kind: input, shape index: {}]
  %s10 = inlined_call_operand.vmem [shape: bf16[2,32,32], index: 10, kind: input, shape index: {}]
  %s11 = inlined_call_operand.vmem [shape: f32[2,1,32], index: 11, kind: input, shape index: {}]
  %s12 = inlined_call_operand.vmem [shape: bf16[2,32,128], index: 12, kind: input, shape index: {}]
  %s13 = inlined_call_operand.vmem [shape: f32[2,1,128], index: 13, kind: input, shape index: {}]
  %s14 = inlined_call_operand.vmem [shape: bf16[2,128,32], index: 14, kind: input, shape index: {}]
  %s15 = inlined_call_operand.vmem [shape: f32[2,1,32], index: 15, kind: input, shape index: {}]
  %s16 = inlined_call_operand.vmem [shape: f32[1,32], index: 16, kind: input, shape index: {}]
  %s17 = inlined_call_operand.vmem [shape: f32[1,32], index: 17, kind: input, shape index: {}]
  %s18 = inlined_call_operand.vmem [shape: bf16[32,128], index: 18, kind: input, shape index: {}]
  %s19 = inlined_call_operand.vmem [shape: f32[1,128], index: 19, kind: input, shape index: {}]
  %s20 = inlined_call_operand.hbm [shape: f32[2,16,128], index: 20, kind: output, shape index: {}]
  %s21 = sld [smem:[#allocation0]]
  $region113: #{tpu_custom_call.1} parent=0
    _
  %s23 = ssub.s32 1, %s21
  %s24 = scalar_select 0, %s23, %s21
  $region1: #{tpu_custom_call.1} parent=0
    #allocation2 [shape = 'u8[16384]{0}', space=vmem, size = 0x4000, scoped, tag = 'output window, operand 0']
    #allocation3 [shape = 's32[2]{0}', space=sflag, size = 0x8, scoped, tag = 'scoped memory for tpu_custom_call.1']
    %25 = vsyncpa [#allocation3], 0
    %s26 = scalar_lea.sflag [#allocation3], 1
    %27 = vsyncpa %s26, 0
    loop: start=0, step=1, limit=4
    $region2: #{tpu_custom_call.1} parent=1 // loop_pre_header
      _
    $region3: #{tpu_custom_call.1} parent=1 // loop_header
      %s29 = sphi 0, %s33
      %p30 = scmp.ge.s32.totalorder %s29, 4
      %s39 = sphi 0, %s41
      %s42 = sphi 0, %s39
      %s43 = sphi 0, %s42
      %s59 = sphi 0, %s43
      %s65 = sphi 0, %s67
      %s68 = sphi 0, %s65
      %s69 = sphi 0, %s68
      %s85 = sphi 0, %s69
      %s89 = sphi 0, %s89
      %s91 = sphi 0, %s89
      %s92 = sphi 0, %s91
      %s106 = sphi 0, %s92
      %s110 = sphi 0, %s110
      %s112 = sphi 0, %s110
      %s113 = sphi 0, %s112
      %s127 = sphi 0, %s113
      %s131 = sphi 0, %s131
      %s133 = sphi 0, %s131
      %s134 = sphi 0, %s133
      %s148 = sphi 0, %s134
      %s152 = sphi 0, %s152
      %s154 = sphi 0, %s152
      %s155 = sphi 0, %s154
      %s169 = sphi 0, %s155
      %s173 = sphi 0, %s173
      %s175 = sphi 0, %s173
      %s176 = sphi 0, %s175
      %s190 = sphi 0, %s176
      %s194 = sphi 0, %s194
      %s196 = sphi 0, %s194
      %s197 = sphi 0, %s196
      %s211 = sphi 0, %s197
      %s215 = sphi 0, %s215
      %s217 = sphi 0, %s215
      %s218 = sphi 0, %s217
      %s232 = sphi 0, %s218
      %s236 = sphi 0, %s236
      %s238 = sphi 0, %s236
      %s239 = sphi 0, %s238
      %s253 = sphi 0, %s239
      %s257 = sphi 0, %s257
      %s259 = sphi 0, %s257
      %s260 = sphi 0, %s259
      %s274 = sphi 0, %s260
      %s278 = sphi 0, %s278
      %s280 = sphi 0, %s278
      %s281 = sphi 0, %s280
      %s295 = sphi 0, %s281
      %s299 = sphi 0, %s299
      %s301 = sphi 0, %s299
      %s302 = sphi 0, %s301
      %s316 = sphi 0, %s302
      %s320 = sphi 0, %s320
      %s322 = sphi 0, %s320
      %s323 = sphi 0, %s322
      %s337 = sphi 0, %s323
      %s341 = sphi 0, %s341
      %s343 = sphi 0, %s341
      %s344 = sphi 0, %s343
      %s358 = sphi 0, %s344
      %s362 = sphi 0, %s362
      %s364 = sphi 0, %s362
      %s365 = sphi 0, %s364
      %s379 = sphi 0, %s365
      %s383 = sphi 0, %s383
      %s385 = sphi 0, %s383
      %s386 = sphi 0, %s385
      %s400 = sphi 0, %s386
      %s404 = sphi 0, %s404
      %s406 = sphi 0, %s404
      %s407 = sphi 0, %s406
      %s421 = sphi 0, %s407
      %s425 = sphi 0, %s425
      %s427 = sphi 0, %s425
      %s428 = sphi 0, %s427
      %s442 = sphi 0, %s428
      %s446 = sphi 0, %s446
      %s448 = sphi 0, %s446
      %s449 = sphi 0, %s448
      %s463 = sphi 0, %s449
      %s469 = sphi 0, %s471
      %s472 = sphi 0, %s469
      %s473 = sphi 0, %s472
      %s489 = sphi 0, %s473
    $region4: #{tpu_custom_call.1} parent=1 // loop_header_branch
      %32 = sbr.rel (%p30) target = $region8
    $region5: #{tpu_custom_call.1} parent=1 // loop_body
      %s34 = ssub.s32 %s29, 1
      %s35 = ssub.s32 %s29, 2
      %s36 = sadd.s32 %s29, 1
      %s37 = ssub.s32 %s29, %s36
      %p38 = scmp.eq.s32.totalorder %s37, 0
      %s40 = sadd.s32 %s39, 1
      %s41 = scalar_select %p38, %s39, %s40
      %p44 = pneg %p38
      %p45 = scmp.eq.s32.totalorder %s29, 1
      %p46 = por %p44, %p45
      %p47 = scmp.ne.s32.totalorder %s39, %s42
      %p48 = scmp.eq.s32.totalorder %s29, 0
      %p49 = por %p47, %p48
      %p50 = scmp.ne.s32.totalorder %s39, %s42
      %p51 = scmp.eq.s32.totalorder %s34, 1
      %p52 = por %p50, %p51
      %p53 = scmp.ne.s32.totalorder %s42, %s43
      %p54 = scmp.eq.s32.totalorder %s34, 0
      %p55 = por %p53, %p54
      %p56 = scmp.ne.s32.totalorder %s42, %s43
      %p57 = scmp.eq.s32.totalorder %s35, 1
      %p58 = por %p56, %p57
      %p60 = scmp.ne.s32.totalorder %s43, %s59
      %p61 = scmp.eq.s32.totalorder %s35, 0
      %p62 = por %p60, %p61
      %s63 = ssub.s32 %s29, %s36
      %p64 = scmp.eq.s32.totalorder %s63, 0
      %s66 = sadd.s32 %s65, 1
      %s67 = scalar_select %p64, %s65, %s66
      %p70 = pneg %p64
      %p71 = scmp.eq.s32.totalorder %s29, 1
      %p72 = por %p70, %p71
      %p73 = scmp.ne.s32.totalorder %s65, %s68
      %p74 = scmp.eq.s32.totalorder %s29, 0
      %p75 = por %p73, %p74
      %p76 = scmp.ne.s32.totalorder %s65, %s68
      %p77 = scmp.eq.s32.totalorder %s34, 1
      %p78 = por %p76, %p77
      %p79 = scmp.ne.s32.totalorder %s68, %s69
      %p80 = scmp.eq.s32.totalorder %s34, 0
      %p81 = por %p79, %p80
      %p82 = scmp.ne.s32.totalorder %s68, %s69
      %p83 = scmp.eq.s32.totalorder %s35, 1
      %p84 = por %p82, %p83
      %p86 = scmp.ne.s32.totalorder %s69, %s85
      %p87 = scmp.eq.s32.totalorder %s35, 0
      %p88 = por %p86, %p87
      %s90 = sadd.s32 %s89, 1
      %p93 = scmp.eq.s32.totalorder %s29, 1
      %p94 = scmp.ne.s32.totalorder %s89, %s91
      %p95 = scmp.eq.s32.totalorder %s29, 0
      %p96 = por %p94, %p95
      %p97 = scmp.ne.s32.totalorder %s89, %s91
      %p98 = scmp.eq.s32.totalorder %s34, 1
      %p99 = por %p97, %p98
      %p100 = scmp.ne.s32.totalorder %s91, %s92
      %p101 = scmp.eq.s32.totalorder %s34, 0
      %p102 = por %p100, %p101
      %p103 = scmp.ne.s32.totalorder %s91, %s92
      %p104 = scmp.eq.s32.totalorder %s35, 1
      %p105 = por %p103, %p104
      %p107 = scmp.ne.s32.totalorder %s92, %s106
      %p108 = scmp.eq.s32.totalorder %s35, 0
      %p109 = por %p107, %p108
      %s111 = sadd.s32 %s110, 1
      %p114 = scmp.eq.s32.totalorder %s29, 1
      %p115 = scmp.ne.s32.totalorder %s110, %s112
      %p116 = scmp.eq.s32.totalorder %s29, 0
      %p117 = por %p115, %p116
      %p118 = scmp.ne.s32.totalorder %s110, %s112
      %p119 = scmp.eq.s32.totalorder %s34, 1
      %p120 = por %p118, %p119
      %p121 = scmp.ne.s32.totalorder %s112, %s113
      %p122 = scmp.eq.s32.totalorder %s34, 0
      %p123 = por %p121, %p122
      %p124 = scmp.ne.s32.totalorder %s112, %s113
      %p125 = scmp.eq.s32.totalorder %s35, 1
      %p126 = por %p124, %p125
      %p128 = scmp.ne.s32.totalorder %s113, %s127
      %p129 = scmp.eq.s32.totalorder %s35, 0
      %p130 = por %p128, %p129
      %s132 = sadd.s32 %s131, 1
      %p135 = scmp.eq.s32.totalorder %s29, 1
      %p136 = scmp.ne.s32.totalorder %s131, %s133
      %p137 = scmp.eq.s32.totalorder %s29, 0
      %p138 = por %p136, %p137
      %p139 = scmp.ne.s32.totalorder %s131, %s133
      %p140 = scmp.eq.s32.totalorder %s34, 1
      %p141 = por %p139, %p140
      %p142 = scmp.ne.s32.totalorder %s133, %s134
      %p143 = scmp.eq.s32.totalorder %s34, 0
      %p144 = por %p142, %p143
      %p145 = scmp.ne.s32.totalorder %s133, %s134
      %p146 = scmp.eq.s32.totalorder %s35, 1
      %p147 = por %p145, %p146
      %p149 = scmp.ne.s32.totalorder %s134, %s148
      %p150 = scmp.eq.s32.totalorder %s35, 0
      %p151 = por %p149, %p150
      %s153 = sadd.s32 %s152, 1
      %p156 = scmp.eq.s32.totalorder %s29, 1
      %p157 = scmp.ne.s32.totalorder %s152, %s154
      %p158 = scmp.eq.s32.totalorder %s29, 0
      %p159 = por %p157, %p158
      %p160 = scmp.ne.s32.totalorder %s152, %s154
      %p161 = scmp.eq.s32.totalorder %s34, 1
      %p162 = por %p160, %p161
      %p163 = scmp.ne.s32.totalorder %s154, %s155
      %p164 = scmp.eq.s32.totalorder %s34, 0
      %p165 = por %p163, %p164
      %p166 = scmp.ne.s32.totalorder %s154, %s155
      %p167 = scmp.eq.s32.totalorder %s35, 1
      %p168 = por %p166, %p167
      %p170 = scmp.ne.s32.totalorder %s155, %s169
      %p171 = scmp.eq.s32.totalorder %s35, 0
      %p172 = por %p170, %p171
      %s174 = sadd.s32 %s173, 1
      %p177 = scmp.eq.s32.totalorder %s29, 1
      %p178 = scmp.ne.s32.totalorder %s173, %s175
      %p179 = scmp.eq.s32.totalorder %s29, 0
      %p180 = por %p178, %p179
      %p181 = scmp.ne.s32.totalorder %s173, %s175
      %p182 = scmp.eq.s32.totalorder %s34, 1
      %p183 = por %p181, %p182
      %p184 = scmp.ne.s32.totalorder %s175, %s176
      %p185 = scmp.eq.s32.totalorder %s34, 0
      %p186 = por %p184, %p185
      %p187 = scmp.ne.s32.totalorder %s175, %s176
      %p188 = scmp.eq.s32.totalorder %s35, 1
      %p189 = por %p187, %p188
      %p191 = scmp.ne.s32.totalorder %s176, %s190
      %p192 = scmp.eq.s32.totalorder %s35, 0
      %p193 = por %p191, %p192
      %s195 = sadd.s32 %s194, 1
      %p198 = scmp.eq.s32.totalorder %s29, 1
      %p199 = scmp.ne.s32.totalorder %s194, %s196
      %p200 = scmp.eq.s32.totalorder %s29, 0
      %p201 = por %p199, %p200
      %p202 = scmp.ne.s32.totalorder %s194, %s196
      %p203 = scmp.eq.s32.totalorder %s34, 1
      %p204 = por %p202, %p203
      %p205 = scmp.ne.s32.totalorder %s196, %s197
      %p206 = scmp.eq.s32.totalorder %s34, 0
      %p207 = por %p205, %p206
      %p208 = scmp.ne.s32.totalorder %s196, %s197
      %p209 = scmp.eq.s32.totalorder %s35, 1
      %p210 = por %p208, %p209
      %p212 = scmp.ne.s32.totalorder %s197, %s211
      %p213 = scmp.eq.s32.totalorder %s35, 0
      %p214 = por %p212, %p213
      %s216 = sadd.s32 %s215, 1
      %p219 = scmp.eq.s32.totalorder %s29, 1
      %p220 = scmp.ne.s32.totalorder %s215, %s217
      %p221 = scmp.eq.s32.totalorder %s29, 0
      %p222 = por %p220, %p221
      %p223 = scmp.ne.s32.totalorder %s215, %s217
      %p224 = scmp.eq.s32.totalorder %s34, 1
      %p225 = por %p223, %p224
      %p226 = scmp.ne.s32.totalorder %s217, %s218
      %p227 = scmp.eq.s32.totalorder %s34, 0
      %p228 = por %p226, %p227
      %p229 = scmp.ne.s32.totalorder %s217, %s218
      %p230 = scmp.eq.s32.totalorder %s35, 1
      %p231 = por %p229, %p230
      %p233 = scmp.ne.s32.totalorder %s218, %s232
      %p234 = scmp.eq.s32.totalorder %s35, 0
      %p235 = por %p233, %p234
      %s237 = sadd.s32 %s236, 1
      %p240 = scmp.eq.s32.totalorder %s29, 1
      %p241 = scmp.ne.s32.totalorder %s236, %s238
      %p242 = scmp.eq.s32.totalorder %s29, 0
      %p243 = por %p241, %p242
      %p244 = scmp.ne.s32.totalorder %s236, %s238
      %p245 = scmp.eq.s32.totalorder %s34, 1
      %p246 = por %p244, %p245
      %p247 = scmp.ne.s32.totalorder %s238, %s239
      %p248 = scmp.eq.s32.totalorder %s34, 0
      %p249 = por %p247, %p248
      %p250 = scmp.ne.s32.totalorder %s238, %s239
      %p251 = scmp.eq.s32.totalorder %s35, 1
      %p252 = por %p250, %p251
      %p254 = scmp.ne.s32.totalorder %s239, %s253
      %p255 = scmp.eq.s32.totalorder %s35, 0
      %p256 = por %p254, %p255
      %s258 = sadd.s32 %s257, 1
      %p261 = scmp.eq.s32.totalorder %s29, 1
      %p262 = scmp.ne.s32.totalorder %s257, %s259
      %p263 = scmp.eq.s32.totalorder %s29, 0
      %p264 = por %p262, %p263
      %p265 = scmp.ne.s32.totalorder %s257, %s259
      %p266 = scmp.eq.s32.totalorder %s34, 1
      %p267 = por %p265, %p266
      %p268 = scmp.ne.s32.totalorder %s259, %s260
      %p269 = scmp.eq.s32.totalorder %s34, 0
      %p270 = por %p268, %p269
      %p271 = scmp.ne.s32.totalorder %s259, %s260
      %p272 = scmp.eq.s32.totalorder %s35, 1
      %p273 = por %p271, %p272
      %p275 = scmp.ne.s32.totalorder %s260, %s274
      %p276 = scmp.eq.s32.totalorder %s35, 0
      %p277 = por %p275, %p276
      %s279 = sadd.s32 %s278, 1
      %p282 = scmp.eq.s32.totalorder %s29, 1
      %p283 = scmp.ne.s32.totalorder %s278, %s280
      %p284 = scmp.eq.s32.totalorder %s29, 0
      %p285 = por %p283, %p284
      %p286 = scmp.ne.s32.totalorder %s278, %s280
      %p287 = scmp.eq.s32.totalorder %s34, 1
      %p288 = por %p286, %p287
      %p289 = scmp.ne.s32.totalorder %s280, %s281
      %p290 = scmp.eq.s32.totalorder %s34, 0
      %p291 = por %p289, %p290
      %p292 = scmp.ne.s32.totalorder %s280, %s281
      %p293 = scmp.eq.s32.totalorder %s35, 1
      %p294 = por %p292, %p293
      %p296 = scmp.ne.s32.totalorder %s281, %s295
      %p297 = scmp.eq.s32.totalorder %s35, 0
      %p298 = por %p296, %p297
      %s300 = sadd.s32 %s299, 1
      %p303 = scmp.eq.s32.totalorder %s29, 1
      %p304 = scmp.ne.s32.totalorder %s299, %s301
      %p305 = scmp.eq.s32.totalorder %s29, 0
      %p306 = por %p304, %p305
      %p307 = scmp.ne.s32.totalorder %s299, %s301
      %p308 = scmp.eq.s32.totalorder %s34, 1
      %p309 = por %p307, %p308
      %p310 = scmp.ne.s32.totalorder %s301, %s302
      %p311 = scmp.eq.s32.totalorder %s34, 0
      %p312 = por %p310, %p311
      %p313 = scmp.ne.s32.totalorder %s301, %s302
      %p314 = scmp.eq.s32.totalorder %s35, 1
      %p315 = por %p313, %p314
      %p317 = scmp.ne.s32.totalorder %s302, %s316
      %p318 = scmp.eq.s32.totalorder %s35, 0
      %p319 = por %p317, %p318
      %s321 = sadd.s32 %s320, 1
      %p324 = scmp.eq.s32.totalorder %s29, 1
      %p325 = scmp.ne.s32.totalorder %s320, %s322
      %p326 = scmp.eq.s32.totalorder %s29, 0
      %p327 = por %p325, %p326
      %p328 = scmp.ne.s32.totalorder %s320, %s322
      %p329 = scmp.eq.s32.totalorder %s34, 1
      %p330 = por %p328, %p329
      %p331 = scmp.ne.s32.totalorder %s322, %s323
      %p332 = scmp.eq.s32.totalorder %s34, 0
      %p333 = por %p331, %p332
      %p334 = scmp.ne.s32.totalorder %s322, %s323
      %p335 = scmp.eq.s32.totalorder %s35, 1
      %p336 = por %p334, %p335
      %p338 = scmp.ne.s32.totalorder %s323, %s337
      %p339 = scmp.eq.s32.totalorder %s35, 0
      %p340 = por %p338, %p339
      %s342 = sadd.s32 %s341, 1
      %p345 = scmp.eq.s32.totalorder %s29, 1
      %p346 = scmp.ne.s32.totalorder %s341, %s343
      %p347 = scmp.eq.s32.totalorder %s29, 0
      %p348 = por %p346, %p347
      %p349 = scmp.ne.s32.totalorder %s341, %s343
      %p350 = scmp.eq.s32.totalorder %s34, 1
      %p351 = por %p349, %p350
      %p352 = scmp.ne.s32.totalorder %s343, %s344
      %p353 = scmp.eq.s32.totalorder %s34, 0
      %p354 = por %p352, %p353
      %p355 = scmp.ne.s32.totalorder %s343, %s344
      %p356 = scmp.eq.s32.totalorder %s35, 1
      %p357 = por %p355, %p356
      %p359 = scmp.ne.s32.totalorder %s344, %s358
      %p360 = scmp.eq.s32.totalorder %s35, 0
      %p361 = por %p359, %p360
      %s363 = sadd.s32 %s362, 1
      %p366 = scmp.eq.s32.totalorder %s29, 1
      %p367 = scmp.ne.s32.totalorder %s362, %s364
      %p368 = scmp.eq.s32.totalorder %s29, 0
      %p369 = por %p367, %p368
      %p370 = scmp.ne.s32.totalorder %s362, %s364
      %p371 = scmp.eq.s32.totalorder %s34, 1
      %p372 = por %p370, %p371
      %p373 = scmp.ne.s32.totalorder %s364, %s365
      %p374 = scmp.eq.s32.totalorder %s34, 0
      %p375 = por %p373, %p374
      %p376 = scmp.ne.s32.totalorder %s364, %s365
      %p377 = scmp.eq.s32.totalorder %s35, 1
      %p378 = por %p376, %p377
      %p380 = scmp.ne.s32.totalorder %s365, %s379
      %p381 = scmp.eq.s32.totalorder %s35, 0
      %p382 = por %p380, %p381
      %s384 = sadd.s32 %s383, 1
      %p387 = scmp.eq.s32.totalorder %s29, 1
      %p388 = scmp.ne.s32.totalorder %s383, %s385
      %p389 = scmp.eq.s32.totalorder %s29, 0
      %p390 = por %p388, %p389
      %p391 = scmp.ne.s32.totalorder %s383, %s385
      %p392 = scmp.eq.s32.totalorder %s34, 1
      %p393 = por %p391, %p392
      %p394 = scmp.ne.s32.totalorder %s385, %s386
      %p395 = scmp.eq.s32.totalorder %s34, 0
      %p396 = por %p394, %p395
      %p397 = scmp.ne.s32.totalorder %s385, %s386
      %p398 = scmp.eq.s32.totalorder %s35, 1
      %p399 = por %p397, %p398
      %p401 = scmp.ne.s32.totalorder %s386, %s400
      %p402 = scmp.eq.s32.totalorder %s35, 0
      %p403 = por %p401, %p402
      %s405 = sadd.s32 %s404, 1
      %p408 = scmp.eq.s32.totalorder %s29, 1
      %p409 = scmp.ne.s32.totalorder %s404, %s406
      %p410 = scmp.eq.s32.totalorder %s29, 0
      %p411 = por %p409, %p410
      %p412 = scmp.ne.s32.totalorder %s404, %s406
      %p413 = scmp.eq.s32.totalorder %s34, 1
      %p414 = por %p412, %p413
      %p415 = scmp.ne.s32.totalorder %s406, %s407
      %p416 = scmp.eq.s32.totalorder %s34, 0
      %p417 = por %p415, %p416
      %p418 = scmp.ne.s32.totalorder %s406, %s407
      %p419 = scmp.eq.s32.totalorder %s35, 1
      %p420 = por %p418, %p419
      %p422 = scmp.ne.s32.totalorder %s407, %s421
      %p423 = scmp.eq.s32.totalorder %s35, 0
      %p424 = por %p422, %p423
      %s426 = sadd.s32 %s425, 1
      %p429 = scmp.eq.s32.totalorder %s29, 1
      %p430 = scmp.ne.s32.totalorder %s425, %s427
      %p431 = scmp.eq.s32.totalorder %s29, 0
      %p432 = por %p430, %p431
      %p433 = scmp.ne.s32.totalorder %s425, %s427
      %p434 = scmp.eq.s32.totalorder %s34, 1
      %p435 = por %p433, %p434
      %p436 = scmp.ne.s32.totalorder %s427, %s428
      %p437 = scmp.eq.s32.totalorder %s34, 0
      %p438 = por %p436, %p437
      %p439 = scmp.ne.s32.totalorder %s427, %s428
      %p440 = scmp.eq.s32.totalorder %s35, 1
      %p441 = por %p439, %p440
      %p443 = scmp.ne.s32.totalorder %s428, %s442
      %p444 = scmp.eq.s32.totalorder %s35, 0
      %p445 = por %p443, %p444
      %s447 = sadd.s32 %s446, 1
      %p450 = scmp.eq.s32.totalorder %s29, 1
      %p451 = scmp.ne.s32.totalorder %s446, %s448
      %p452 = scmp.eq.s32.totalorder %s29, 0
      %p453 = por %p451, %p452
      %p454 = scmp.ne.s32.totalorder %s446, %s448
      %p455 = scmp.eq.s32.totalorder %s34, 1
      %p456 = por %p454, %p455
      %p457 = scmp.ne.s32.totalorder %s448, %s449
      %p458 = scmp.eq.s32.totalorder %s34, 0
      %p459 = por %p457, %p458
      %p460 = scmp.ne.s32.totalorder %s448, %s449
      %p461 = scmp.eq.s32.totalorder %s35, 1
      %p462 = por %p460, %p461
      %p464 = scmp.ne.s32.totalorder %s449, %s463
      %p465 = scmp.eq.s32.totalorder %s35, 0
      %p466 = por %p464, %p465
      %s467 = ssub.s32 %s29, %s36
      %p468 = scmp.eq.s32.totalorder %s467, 0
      %s470 = sadd.s32 %s469, 1
      %s471 = scalar_select %p468, %s469, %s470
      %p474 = pneg %p468
      %p475 = scmp.eq.s32.totalorder %s29, 1
      %p476 = por %p474, %p475
      %p477 = scmp.ne.s32.totalorder %s469, %s472
      %p478 = scmp.eq.s32.totalorder %s29, 0
      %p479 = por %p477, %p478
      %p480 = scmp.ne.s32.totalorder %s469, %s472
      %p481 = scmp.eq.s32.totalorder %s34, 1
      %p482 = por %p480, %p481
      %p483 = scmp.ne.s32.totalorder %s472, %s473
      %p484 = scmp.eq.s32.totalorder %s34, 0
      %p485 = por %p483, %p484
      %p486 = scmp.ne.s32.totalorder %s472, %s473
      %p487 = scmp.eq.s32.totalorder %s35, 1
      %p488 = por %p486, %p487
      %p490 = scmp.ne.s32.totalorder %s473, %s489
      %p491 = scmp.eq.s32.totalorder %s35, 0
      %p492 = por %p490, %p491
      %p493 = scmp.le.s32.totalorder 1, %s29
      %p494 = scmp.lt.s32.totalorder %s29, 3
      %p495 = pnand %p493, %p494
      %p496 = pneg %p495
      // Predicated region
      $region9: #{tpu_custom_call.1} parent=5 // pred_check
        _
      $region10: #{tpu_custom_call.1} parent=5 // pred_check_branch
        %498 = sbr.rel (%p495) target = $region12
      $region11: #{tpu_custom_call.1} parent=5 // pred_region
        %s499 = ssub.s32 %s29, 1
        // Predicated region
        $region13: #{tpu_custom_call.1} parent=11 // pred_check
          %p500 = pneg %p102
        $region14: #{tpu_custom_call.1} parent=11 // pred_check_branch
          %502 = sbr.rel (%p500) target = $region16
        $region15: #{tpu_custom_call.1} parent=11 // pred_region
          _
        $region16: #{tpu_custom_call.1} parent=11 // pred_fallthru
          _
        // Predicated region
        $region17: #{tpu_custom_call.1} parent=11 // pred_check
          %p503 = pneg %p123
        $region18: #{tpu_custom_call.1} parent=11 // pred_check_branch
          %505 = sbr.rel (%p503) target = $region20
        $region19: #{tpu_custom_call.1} parent=11 // pred_region
          _
        $region20: #{tpu_custom_call.1} parent=11 // pred_fallthru
          _
        // Predicated region
        $region21: #{tpu_custom_call.1} parent=11 // pred_check
          %p506 = pneg %p144
        $region22: #{tpu_custom_call.1} parent=11 // pred_check_branch
          %508 = sbr.rel (%p506) target = $region24
        $region23: #{tpu_custom_call.1} parent=11 // pred_region
          _
        $region24: #{tpu_custom_call.1} parent=11 // pred_fallthru
          _
        // Predicated region
        $region25: #{tpu_custom_call.1} parent=11 // pred_check
          %p509 = pneg %p165
        $region26: #{tpu_custom_call.1} parent=11 // pred_check_branch
          %511 = sbr.rel (%p509) target = $region28
        $region27: #{tpu_custom_call.1} parent=11 // pred_region
          _
        $region28: #{tpu_custom_call.1} parent=11 // pred_fallthru
          _
        // Predicated region
        $region29: #{tpu_custom_call.1} parent=11 // pred_check
          %p512 = pneg %p186
        $region30: #{tpu_custom_call.1} parent=11 // pred_check_branch
          %514 = sbr.rel (%p512) target = $region32
        $region31: #{tpu_custom_call.1} parent=11 // pred_region
          _
        $region32: #{tpu_custom_call.1} parent=11 // pred_fallthru
          _
        // Predicated region
        $region33: #{tpu_custom_call.1} parent=11 // pred_check
          %p515 = pneg %p207
        $region34: #{tpu_custom_call.1} parent=11 // pred_check_branch
          %517 = sbr.rel (%p515) target = $region36
        $region35: #{tpu_custom_call.1} parent=11 // pred_region
          _
        $region36: #{tpu_custom_call.1} parent=11 // pred_fallthru
          _
        // Predicated region
        $region37: #{tpu_custom_call.1} parent=11 // pred_check
          %p518 = pneg %p228
        $region38: #{tpu_custom_call.1} parent=11 // pred_check_branch
          %520 = sbr.rel (%p518) target = $region40
        $region39: #{tpu_custom_call.1} parent=11 // pred_region
          _
        $region40: #{tpu_custom_call.1} parent=11 // pred_fallthru
          _
        // Predicated region
        $region41: #{tpu_custom_call.1} parent=11 // pred_check
          %p521 = pneg %p249
        $region42: #{tpu_custom_call.1} parent=11 // pred_check_branch
          %523 = sbr.rel (%p521) target = $region44
        $region43: #{tpu_custom_call.1} parent=11 // pred_region
          _
        $region44: #{tpu_custom_call.1} parent=11 // pred_fallthru
          _
        // Predicated region
        $region45: #{tpu_custom_call.1} parent=11 // pred_check
          %p524 = pneg %p270
        $region46: #{tpu_custom_call.1} parent=11 // pred_check_branch
          %526 = sbr.rel (%p524) target = $region48
        $region47: #{tpu_custom_call.1} parent=11 // pred_region
          _
        $region48: #{tpu_custom_call.1} parent=11 // pred_fallthru
          _
        // Predicated region
        $region49: #{tpu_custom_call.1} parent=11 // pred_check
          %p527 = pneg %p291
        $region50: #{tpu_custom_call.1} parent=11 // pred_check_branch
          %529 = sbr.rel (%p527) target = $region52
        $region51: #{tpu_custom_call.1} parent=11 // pred_region
          _
        $region52: #{tpu_custom_call.1} parent=11 // pred_fallthru
          _
        // Predicated region
        $region53: #{tpu_custom_call.1} parent=11 // pred_check
          %p530 = pneg %p312
        $region54: #{tpu_custom_call.1} parent=11 // pred_check_branch
          %532 = sbr.rel (%p530) target = $region56
        $region55: #{tpu_custom_call.1} parent=11 // pred_region
          _
        $region56: #{tpu_custom_call.1} parent=11 // pred_fallthru
          _
        // Predicated region
        $region57: #{tpu_custom_call.1} parent=11 // pred_check
          %p533 = pneg %p333
        $region58: #{tpu_custom_call.1} parent=11 // pred_check_branch
          %535 = sbr.rel (%p533) target = $region60
        $region59: #{tpu_custom_call.1} parent=11 // pred_region
          _
        $region60: #{tpu_custom_call.1} parent=11 // pred_fallthru
          _
        // Predicated region
        $region61: #{tpu_custom_call.1} parent=11 // pred_check
          %p536 = pneg %p354
        $region62: #{tpu_custom_call.1} parent=11 // pred_check_branch
          %538 = sbr.rel (%p536) target = $region64
        $region63: #{tpu_custom_call.1} parent=11 // pred_region
          _
        $region64: #{tpu_custom_call.1} parent=11 // pred_fallthru
          _
        // Predicated region
        $region65: #{tpu_custom_call.1} parent=11 // pred_check
          %p539 = pneg %p375
        $region66: #{tpu_custom_call.1} parent=11 // pred_check_branch
          %541 = sbr.rel (%p539) target = $region68
        $region67: #{tpu_custom_call.1} parent=11 // pred_region
          _
        $region68: #{tpu_custom_call.1} parent=11 // pred_fallthru
          _
        // Predicated region
        $region69: #{tpu_custom_call.1} parent=11 // pred_check
          %p542 = pneg %p396
        $region70: #{tpu_custom_call.1} parent=11 // pred_check_branch
          %544 = sbr.rel (%p542) target = $region72
        $region71: #{tpu_custom_call.1} parent=11 // pred_region
          _
        $region72: #{tpu_custom_call.1} parent=11 // pred_fallthru
          _
        // Predicated region
        $region73: #{tpu_custom_call.1} parent=11 // pred_check
          %p545 = pneg %p417
        $region74: #{tpu_custom_call.1} parent=11 // pred_check_branch
          %547 = sbr.rel (%p545) target = $region76
        $region75: #{tpu_custom_call.1} parent=11 // pred_region
          _
        $region76: #{tpu_custom_call.1} parent=11 // pred_fallthru
          _
        // Predicated region
        $region77: #{tpu_custom_call.1} parent=11 // pred_check
          %p548 = pneg %p438
        $region78: #{tpu_custom_call.1} parent=11 // pred_check_branch
          %550 = sbr.rel (%p548) target = $region80
        $region79: #{tpu_custom_call.1} parent=11 // pred_region
          _
        $region80: #{tpu_custom_call.1} parent=11 // pred_fallthru
          _
        // Predicated region
        $region81: #{tpu_custom_call.1} parent=11 // pred_check
          %p551 = pneg %p459
        $region82: #{tpu_custom_call.1} parent=11 // pred_check_branch
          %553 = sbr.rel (%p551) target = $region84
        $region83: #{tpu_custom_call.1} parent=11 // pred_region
          _
        $region84: #{tpu_custom_call.1} parent=11 // pred_fallthru
          _
      $region12: #{tpu_custom_call.1} parent=5 // pred_fallthru
        _
      %p554 = scmp.lt.s32.totalorder %s29, 2
      // Predicated region
      $region85: #{tpu_custom_call.1} parent=5 // pred_check
        %p555 = pneg %p554
      $region86: #{tpu_custom_call.1} parent=5 // pred_check_branch
        %557 = sbr.rel (%p555) target = $region88
      $region87: #{tpu_custom_call.1} parent=5 // pred_region
        // Predicated region
        $region89: #{tpu_custom_call.1} parent=87 // pred_check
          %p558 = pneg %p49
        $region90: #{tpu_custom_call.1} parent=87 // pred_check_branch
          %560 = sbr.rel (%p558) target = $region92
        $region91: #{tpu_custom_call.1} parent=87 // pred_region
          %p561 = scmp.lt.s32.totalorder %s29, 1
          %s562 = scalar_select %p561, %s29, 1
          %s563 = smul.addr %s562, 2
          %s564 = smul.addr %s563, 8
          %s565 = scalar_lea.vmem %s0, %s564
        $region92: #{tpu_custom_call.1} parent=87 // pred_fallthru
          _
        // Predicated region
        $region93: #{tpu_custom_call.1} parent=87 // pred_check
          %p566 = pneg %p75
        $region94: #{tpu_custom_call.1} parent=87 // pred_check_branch
          %568 = sbr.rel (%p566) target = $region96
        $region95: #{tpu_custom_call.1} parent=87 // pred_region
          %p569 = scmp.lt.s32.totalorder %s29, 1
          %s570 = scalar_select %p569, %s29, 1
          %s571 = scalar_lea.vmem %s1, %s570
        $region96: #{tpu_custom_call.1} parent=87 // pred_fallthru
          _
      $region88: #{tpu_custom_call.1} parent=5 // pred_fallthru
        _
      %p572 = scmp.le.s32.totalorder 1, %s29
      %p573 = scmp.lt.s32.totalorder %s29, 3
      %p574 = pnand %p572, %p573
      %p575 = pneg %p574
      // Predicated region
      $region97: #{tpu_custom_call.1} parent=5 // pred_check
        _
      $region98: #{tpu_custom_call.1} parent=5 // pred_check_branch
        %577 = sbr.rel (%p574) target = $region100
      $region99: #{tpu_custom_call.1} parent=5 // pred_region
        %s578 = ssub.s32 %s29, 1
        %p579 = scmp.lt.s32.totalorder %s34, 1
        %s580 = scalar_select %p579, %s34, 1
        %s581 = smul.addr %s580, 2
        %s582 = smul.addr %s581, 8
        %s583 = scalar_lea.vmem %s0, %s582
        %p584 = pneg %p55
        %p585 = pneg %p52
        %p586 = scmp.lt.s32.totalorder %s34, 1
        %s587 = scalar_select %p586, %s34, 1
        %s588 = scalar_lea.vmem %s1, %s587
        %p589 = pneg %p81
        %p590 = pneg %p78
        %p591 = pneg %p102
        %p592 = pneg %p99
        %p593 = pneg %p123
        %p594 = pneg %p120
        %p595 = pneg %p144
        %p596 = pneg %p141
        %p597 = pneg %p165
        %p598 = pneg %p162
        %p599 = pneg %p186
        %p600 = pneg %p183
        %p601 = pneg %p207
        %p602 = pneg %p204
        %p603 = pneg %p228
        %p604 = pneg %p225
        %p605 = pneg %p249
        %p606 = pneg %p246
        %p607 = pneg %p270
        %p608 = pneg %p267
        %p609 = pneg %p291
        %p610 = pneg %p288
        %p611 = pneg %p312
        %p612 = pneg %p309
        %p613 = pneg %p333
        %p614 = pneg %p330
        %p615 = pneg %p354
        %p616 = pneg %p351
        %p617 = pneg %p375
        %p618 = pneg %p372
        %p619 = pneg %p396
        %p620 = pneg %p393
        %p621 = pneg %p417
        %p622 = pneg %p414
        %p623 = pneg %p438
        %p624 = pneg %p435
        %p625 = pneg %p459
        %p626 = pneg %p456
        %p627 = pneg %p485
        %p628 = pneg %p482
        %s629 = sand.u32 %s472, 1
        %s630 = scalar_lea.sflag [#allocation3], %s629
        %s631 = sand.u32 %s472, 1
        %s632 = smul.addr %s631, 16
        %s633 = scalar_lea.vmem [#allocation2], %s632
        %p634 = scmp.lt.s32.totalorder %s34, 1
        %s635 = scalar_select %p634, %s34, 1
        %s636 = smul.addr %s635, 2
        %s637 = smul.addr %s636, 8
        %s638 = scalar_lea.vmem %s0, %s637
        %p639 = scmp.lt.s32.totalorder %s34, 1
        %s640 = scalar_select %p639, %s34, 1
        %s641 = scalar_lea.vmem %s1, %s640
        %v643 = vld [vmem:[%s638] sm:$0xff]
        %v644 = vld [vmem:[%s638 + $0x8] sm:$0xff]
        %v645 = vlaneseq
        %v646 = vand.u32 %v645, 127
        %647 = vset.pattern.permute.xlu0 0
        %648 = vperm.xlu0 %647, %v643
        %v649 = vpop.permute.xlu0 %648
        %650 = vset.pattern.permute.xlu0 0
        %651 = vperm.xlu0 %650, %v644
        %v652 = vpop.permute.xlu0 %651
        %vm653 = vcmp.eq.s32.totalorder %v646, %v649
        %vm654 = vcmp.eq.s32.totalorder %v646, %v652
        %v655 = vsel %vm653, 1, 0
        %v656 = vsel %vm654, 1, 0
        %v657 = vcvt.s32.f32 %v655
        %v658 = vcvt.s32.f32 %v656
        %v659 = vld [vmem:[%s2] sm:$0xff]
        %v660 = vld [vmem:[%s2 + $0x8] sm:$0xff]
        %v661 = vld [vmem:[%s2 + $0x10] sm:$0xff]
        %v662 = vld [vmem:[%s2 + $0x18] sm:$0xff]
        %v663 = vld [vmem:[%s2 + $0x20] sm:$0xff]
        %v664 = vld [vmem:[%s2 + $0x28] sm:$0xff]
        %v665 = vld [vmem:[%s2 + $0x30] sm:$0x3]
        %v666 = vld [vmem:[%s3] sm:$0xff]
        %v667 = vld [vmem:[%s3 + $0x8] sm:$0xff]
        %vm668 = vcmask 408576
        %v670 = vsel %vm668, %v657, 0
        %v673 = vsel %vm668, %v658, 0
        %vm675 = vcmask 1041408
        %v677 = vsel %vm675, %v665, 0
        %679 = vmatprep.subr.mxu0 0.0
        %680 = vmatpush1.msra.mxu0 0.0
        %681 = vmatprep.subr.mxu0 0.0
        %682 = vmatpush1.msra.mxu0 0.0
        %683 = vmatprep.subr.mxu0 0.0
        %684 = vmatpush1.msra.mxu0 0.0
        %685 = vmatprep.subr.mxu0 0.0
        %686 = vmatpush1.msra.mxu0 0.0
        %687 = vmatprep.subr.mxu0 0.0
        %688 = vmatpush1.msra.mxu0 0.0
        %689 = vmatprep.subr.mxu0 0.0
        %690 = vmatpush1.msra.mxu0 0.0
        %691 = vmatprep.subr.mxu0 0.0
        %692 = vmatpush1.msra.mxu0 0.0
        %693 = vmatprep.subr.mxu0 0.0
        %694 = vmatpush1.msra.mxu0 0.0
        %695 = vmatprep.subr.mxu0 0.0
        %696 = vmatpush1.msra.mxu0 0.0
        %697 = vmatprep.subr.mxu0 0.0
        %698 = vmatpush1.msra.mxu0 %v677
        %699 = vmatprep.subr.mxu0 0.0
        %700 = vmatpush1.msra.mxu0 %v664
        %701 = vmatprep.subr.mxu0 0.0
        %702 = vmatpush1.msra.mxu0 %v663
        %703 = vmatprep.subr.mxu0 0.0
        %704 = vmatpush1.msra.mxu0 %v662
        %705 = vmatprep.subr.mxu0 0.0
        %706 = vmatpush1.msra.mxu0 %v661
        %707 = vmatprep.subr.mxu0 0.0
        %708 = vmatpush1.msra.mxu0 %v660
        %709 = vmatprep.subr.mxu0 0.0
        %710 = vmatpush1.msra.mxu0 %v659
        %711 = vmatprep.subr.mxu0 0.0
        %712 = vmatpush2.msra.mxu0 0.0
        %713 = vmatprep.subr.mxu0 0.0
        %714 = vmatpush2.msra.mxu0 0.0
        %715 = vmatprep.subr.mxu0 0.0
        %716 = vmatpush2.msra.mxu0 0.0
        %717 = vmatprep.subr.mxu0 0.0
        %718 = vmatpush2.msra.mxu0 0.0
        %719 = vmatprep.subr.mxu0 0.0
        %720 = vmatpush2.msra.mxu0 0.0
        %721 = vmatprep.subr.mxu0 0.0
        %722 = vmatpush2.msra.mxu0 0.0
        %723 = vmatprep.subr.mxu0 0.0
        %724 = vmatpush2.msra.mxu0 0.0
        %725 = vmatprep.subr.mxu0 0.0
        %726 = vmatpush2.msra.mxu0 0.0
        %727 = vmatprep.subr.mxu0 0.0
        %728 = vmatpush2.msra.mxu0 0.0
        %729 = vmatprep.subr.mxu0 0.0
        %730 = vmatpush2.msra.mxu0 0.0
        %731 = vmatprep.subr.mxu0 0.0
        %732 = vmatpush2.msra.mxu0 0.0
        %733 = vmatprep.subr.mxu0 0.0
        %734 = vmatpush2.msra.mxu0 0.0
        %735 = vmatprep.subr.mxu0 0.0
        %736 = vmatpush2.msra.mxu0 0.0
        %737 = vmatprep.subr.mxu0 0.0
        %738 = vmatpush2.msra.mxu0 0.0
        %739 = vmatprep.subr.mxu0 0.0
        %740 = vmatpush2.msra.mxu0 0.0
        %741 = vmatprep.subr.mxu0 0.0
        %742 = vmatpush2.msra.mxu0 0.0
        %743 = vmatprep.mubr.f32.mxu0 0.0
        %744 = vmatmul.mubr.f32.gmra.mxu0 %v670
        %v745 = vpop.f32.mrf.mxu0
        %v746 = vadd.f32 %v666, %v745
        %v747 = vpop.f32.mrf.mxu0
        %748 = vmatprep.mubr.f32.mxu0 0.0
        %749 = vmatmul.mubr.f32.gmra.mxu0 %v673
        %v750 = vpop.f32.mrf.mxu0
        %v751 = vadd.f32 %v667, %v750
        %v752 = vpop.f32.mrf.mxu0
        %753 = vdwg.mxu0
        %v754 = vlaneseq
        %v755 = vshrl.u32 %v754, 7
        %v756 = vadd.s32 %v755, 8
        %757 = vrot.lane.b32.xlu0 %v646, 16
        %v758 = vpop.permute.xlu0 %757
        %759 = vrot.lane.b32.xlu0 %v646, 32
        %v760 = vpop.permute.xlu0 %759
        %761 = vrot.lane.b32.xlu0 %v646, 48
        %v762 = vpop.permute.xlu0 %761
        %vm763 = vcmask 130048
        %v764 = vsel %vm763, %v646, %v758
        %vm765 = vcmask 261120
        %v766 = vsel %vm765, %v764, %v760
        %vm767 = vcmask 392192
        %v768 = vsel %vm767, %v766, %v762
        %v769 = vsel %vm763, 0, 1
        %v770 = vsel %vm765, %v769, 2
        %v771 = vsel %vm767, %v770, 3
        %772 = vset.pattern.permute.xlu0 0
        %773 = vperm.xlu0 %772, 0
        %v774 = vpop.permute.xlu0 %773
        %775 = vset.pattern.permute.xlu0 0
        %776 = vperm.xlu0 %775, 1
        %v777 = vpop.permute.xlu0 %776
        %778 = vset.pattern.permute.xlu0 0
        %779 = vperm.xlu0 %778, 2
        %v780 = vpop.permute.xlu0 %779
        %781 = vset.pattern.permute.xlu0 0
        %782 = vperm.xlu0 %781, 3
        %v783 = vpop.permute.xlu0 %782
        %v784 = vlaneseq
        %v785 = vshrl.u32 %v784, 7
        %v786 = vsub.s32 0, %v785
        %v787 = vrot.slane %v771, %v786
        %vm788 = vcmp.eq.s32.totalorder %v774, %v787
        %vm789 = vcmp.eq.s32.totalorder %v777, %v787
        %vm790 = vcmp.eq.s32.totalorder %v780, %v787
        %vm791 = vcmp.eq.s32.totalorder %v783, %v787
        %v792 = vlaneseq
        %v793 = vshrl.u32 %v792, 7
        %v794 = vsub.s32 0, %v793
        %v795 = vrot.slane %v768, %v794
        %796 = vset.pattern.permute.xlu0 0
        %797 = vperm.xlu0 %796, %v755
        %v798 = vpop.permute.xlu0 %797
        %799 = vset.pattern.permute.xlu0 0
        %800 = vperm.xlu0 %799, %v756
        %v801 = vpop.permute.xlu0 %800
        %vm802 = vcmp.le.s32.totalorder %v795, %v798
        %vm803 = vcmp.le.s32.totalorder %v795, %v801
        %vm804 = vmand %vm788, %vm802
        %vm805 = vmand %vm788, %vm803
        %vm806 = vmand %vm789, %vm802
        %vm807 = vmand %vm789, %vm803
        %vm808 = vmand %vm790, %vm802
        %vm809 = vmand %vm790, %vm803
        %vm810 = vmand %vm791, %vm802
        %vm811 = vmand %vm791, %vm803
        %v812 = vld [vmem:[%s641] sm:$0x1]
        %v813 = vlaneseq
        %v814 = vshrl.u32 %v813, 7
        %v815 = vsub.s32 0, %v814
        %v816 = vrot.slane %v812, %v815
        %817 = vrot.lane.b32.xlu0 %v816, 16
        %v818 = vpop.permute.xlu0 %817
        %819 = vrot.lane.b32.xlu0 %v816, 32
        %v820 = vpop.permute.xlu0 %819
        %821 = vrot.lane.b32.xlu0 %v816, 48
        %v822 = vpop.permute.xlu0 %821
        %v823 = vsel %vm763, %v812, %v818
        %v824 = vsel %vm765, %v823, %v820
        %v825 = vsel %vm767, %v824, %v822
        %vm826 = vcmp.eq.s32.totalorder %v825, 0
        %v827 = vsel %vm826, 1, 0
        %v828 = vlaneseq
        %v829 = vshrl.u32 %v828, 7
        %v830 = vsub.s32 0, %v829
        %v831 = vrot.slane %v827, %v830
        %vm832 = vcmp.eq.s32.totalorder %v831, 1
        %vm833 = vmand %vm804, %vm832
        %vm834 = vmand %vm805, %vm832
        %vm835 = vmand %vm806, %vm832
        %vm836 = vmand %vm807, %vm832
        %vm837 = vmand %vm808, %vm832
        %vm838 = vmand %vm809, %vm832
        %vm839 = vmand %vm810, %vm832
        %vm840 = vmand %vm811, %vm832
        %v841 = vsel %vm833, 0.0, -1e+30
        %v842 = vsel %vm834, 0.0, -1e+30
        %v843 = vsel %vm835, 0.0, -1e+30
        %v844 = vsel %vm836, 0.0, -1e+30
        %v845 = vsel %vm837, 0.0, -1e+30
        %v846 = vsel %vm838, 0.0, -1e+30
        %v847 = vsel %vm839, 0.0, -1e+30
        %v848 = vsel %vm840, 0.0, -1e+30
        %v849 = vld [vmem:[%s4] sm:$0x1]
        %v850 = vld [vmem:[%s5] sm:$0x1]
        %v851 = vsel %vm765, %v746, 0.0
        %852 = vadd.xlane.f32.xlu0 %v851
        %v853 = vpop.xlane.xlu0 %852
        %v854 = vsel %vm765, %v751, 0.0
        %855 = vadd.xlane.f32.xlu0 %v854
        %v856 = vpop.xlane.xlu0 %855
        %v857 = vrcp.pop 32.0
        %v858 = vmul.f32 %v853, %v857
        %v859 = vmul.f32 %v856, %v857
        %v860 = vsub.f32 %v746, %v858
        %v861 = vsub.f32 %v751, %v859
        %v862 = vmul.f32 %v860, %v860
        %v863 = vmul.f32 %v861, %v861
        %v864 = vsel %vm765, %v862, 0.0
        %865 = vadd.xlane.f32.xlu0 %v864
        %v866 = vpop.xlane.xlu0 %865
        %v867 = vsel %vm765, %v863, 0.0
        %868 = vadd.xlane.f32.xlu0 %v867
        %v869 = vpop.xlane.xlu0 %868
        %v870 = vmul.f32 %v866, %v857
        %v871 = vmul.f32 %v869, %v857
        %v872 = vadd.f32 %v870, 1e-05
        %v873 = vadd.f32 %v871, 1e-05
        %v874 = vrsqrt.pop %v872
        %v875 = vrsqrt.pop %v873
        %v876 = vmul.f32 %v860, %v874
        %v877 = vmul.f32 %v861, %v875
        %v879 = vlaneseq
        %v880 = vshrl.u32 %v879, 7
        %v881 = vsub.s32 0, %v880
        %v882 = vrot.slane %v849, %v881
        %v884 = vmul.f32 %v876, %v882
        %v885 = vmul.f32 %v877, %v882
        %v887 = vlaneseq
        %v888 = vshrl.u32 %v887, 7
        %v889 = vsub.s32 0, %v888
        %v890 = vrot.slane %v850, %v889
        %v892 = vadd.f32 %v884, %v890
        %v893 = vadd.f32 %v885, %v890
        %v894 = vpack.c.bf16 %v893, %v892
        %v895 = vld [vmem:[%s8] sm:$0xf]
        %v896 = vld [vmem:[%s8 + $0x4] sm:$0xf]
        %v897 = vld [vmem:[%s8 + $0x8] sm:$0xf]
        %v898 = vld [vmem:[%s8 + $0xc] sm:$0xf]
        %v899 = vld [vmem:[%s9] sm:$0x1]
        %v901 = vlaneseq
        %v902 = vshrl.u32 %v901, 7
        %v903 = vsub.s32 0, %v902
        %v904 = vrot.slane %v899, %v903
        %v910 = vunpack.c.l.b16 %v895
        %v911 = vunpack.c.l.b16 %v896
        %v912 = vunpack.c.l.b16 %v897
        %v913 = vunpack.c.l.b16 %v898
        %v914 = vpack.c.b16 %v911, %v910
        %v915 = vpack.c.b16 %v913, %v912
        %v919 = vsel %vm765, %v894, 0
        %921 = vmatprep.subr.bf16.mxu0 0
        %922 = vmatpush1.bf16.msra.mxu0 0
        %923 = vmatprep.subr.bf16.mxu0 0
        %924 = vmatpush1.bf16.msra.mxu0 0
        %925 = vmatprep.subr.bf16.mxu0 0
        %926 = vmatpush1.bf16.msra.mxu0 0
        %927 = vmatprep.subr.bf16.mxu0 0
        %928 = vmatpush1.bf16.msra.mxu0 0
        %929 = vmatprep.subr.bf16.mxu0 0
        %930 = vmatpush1.bf16.msra.mxu0 0
        %931 = vmatprep.subr.bf16.mxu0 0
        %932 = vmatpush1.bf16.msra.mxu0 0
        %933 = vmatprep.subr.bf16.mxu0 0
        %934 = vmatpush1.bf16.msra.mxu0 %v915
        %935 = vmatprep.subr.bf16.mxu0 0
        %936 = vmatpush1.bf16.msra.mxu0 %v914
        %937 = vmatprep.subr.bf16.mxu0 0
        %938 = vmatpush2.bf16.msra.mxu0 0
        %939 = vmatprep.subr.bf16.mxu0 0
        %940 = vmatpush2.bf16.msra.mxu0 0
        %941 = vmatprep.subr.bf16.mxu0 0
        %942 = vmatpush2.bf16.msra.mxu0 0
        %943 = vmatprep.subr.bf16.mxu0 0
        %944 = vmatpush2.bf16.msra.mxu0 0
        %945 = vmatprep.subr.bf16.mxu0 0
        %946 = vmatpush2.bf16.msra.mxu0 0
        %947 = vmatprep.subr.bf16.mxu0 0
        %948 = vmatpush2.bf16.msra.mxu0 0
        %949 = vmatprep.subr.bf16.mxu0 0
        %950 = vmatpush2.bf16.msra.mxu0 0
        %951 = vmatprep.subr.bf16.mxu0 0
        %952 = vmatpush2.bf16.msra.mxu0 0
        %953 = vmatprep.mubr.bf16.mxu0 0
        %954 = vmatmul.mubr.bf16.gmra.mxu0 %v919
        %v955 = vpop.f32.mrf.mxu0
        %v956 = vadd.f32 %v904, %v955
        %v957 = vpop.f32.mrf.mxu0
        %v958 = vpop.f32.mrf.mxu0
        %v959 = vadd.f32 %v904, %v958
        %v960 = vpop.f32.mrf.mxu0
        %961 = vdwg.mxu0
        %964 = vrot.lane.b32.xlu0 %v956, 120
        %v965 = vpop.permute.xlu0 %964
        %966 = vrot.lane.b32.xlu0 %v959, 120
        %v967 = vpop.permute.xlu0 %966
        %970 = vrot.lane.b32.xlu0 %v956, 112
        %v971 = vpop.permute.xlu0 %970
        %972 = vrot.lane.b32.xlu0 %v959, 112
        %v973 = vpop.permute.xlu0 %972
        %976 = vrot.lane.b32.xlu0 %v956, 104
        %v977 = vpop.permute.xlu0 %976
        %978 = vrot.lane.b32.xlu0 %v959, 104
        %v979 = vpop.permute.xlu0 %978
        %v982 = vpack.c.bf16 %v959, %v956
        %v983 = vpack.c.bf16 %v967, %v965
        %v984 = vpack.c.bf16 %v973, %v971
        %v985 = vpack.c.bf16 %v979, %v977
        %990 = vrot.lane.b32.xlu0 %v982, 96
        %v991 = vpop.permute.xlu0 %990
        %992 = vrot.lane.b32.xlu0 %v983, 96
        %v993 = vpop.permute.xlu0 %992
        %994 = vrot.lane.b32.xlu0 %v984, 96
        %v995 = vpop.permute.xlu0 %994
        %996 = vrot.lane.b32.xlu0 %v985, 96
        %v997 = vpop.permute.xlu0 %996
        %vm998 = vcmask 64512
        %v1000 = vsel %vm998, %v982, 0
        %v1003 = vsel %vm998, %v983, 0
        %v1006 = vsel %vm998, %v984, 0
        %v1009 = vsel %vm998, %v985, 0
        %v1012 = vsel %vm998, %v991, 0
        %v1015 = vsel %vm998, %v993, 0
        %v1018 = vsel %vm998, %v995, 0
        %v1021 = vsel %vm998, %v997, 0
        %1023 = vmatprep.subr.bf16.mxu0 0
        %1024 = vmatpush1.bf16.xpose.msra.mxu0 0
        %1025 = vmatprep.subr.bf16.mxu0 0
        %1026 = vmatpush1.bf16.xpose.msra.mxu0 0
        %1027 = vmatprep.subr.bf16.mxu0 0
        %1028 = vmatpush1.bf16.xpose.msra.mxu0 0
        %1029 = vmatprep.subr.bf16.mxu0 0
        %1030 = vmatpush1.bf16.xpose.msra.mxu0 0
        %1031 = vmatprep.subr.bf16.mxu0 0
        %1032 = vmatpush1.bf16.xpose.msra.mxu0 %v1021
        %1033 = vmatprep.subr.bf16.mxu0 0
        %1034 = vmatpush1.bf16.xpose.msra.mxu0 %v1018
        %1035 = vmatprep.subr.bf16.mxu0 0
        %1036 = vmatpush1.bf16.xpose.msra.mxu0 %v1015
        %1037 = vmatprep.subr.bf16.mxu0 0
        %1038 = vmatpush1.bf16.xpose.msra.mxu0 %v1012
        %1039 = vmatprep.subr.bf16.mxu0 0
        %1040 = vmatpush2.bf16.xpose.msra.mxu0 0
        %1041 = vmatprep.subr.bf16.mxu0 0
        %1042 = vmatpush2.bf16.xpose.msra.mxu0 0
        %1043 = vmatprep.subr.bf16.mxu0 0
        %1044 = vmatpush2.bf16.xpose.msra.mxu0 0
        %1045 = vmatprep.subr.bf16.mxu0 0
        %1046 = vmatpush2.bf16.xpose.msra.mxu0 0
        %1047 = vmatprep.subr.bf16.mxu0 0
        %1048 = vmatpush2.bf16.xpose.msra.mxu0 0
        %1049 = vmatprep.subr.bf16.mxu0 0
        %1050 = vmatpush2.bf16.xpose.msra.mxu0 0
        %1051 = vmatprep.subr.bf16.mxu0 0
        %1052 = vmatpush2.bf16.xpose.msra.mxu0 0
        %1053 = vmatprep.subr.bf16.mxu0 0
        %1054 = vmatpush2.bf16.xpose.msra.mxu0 0
        %1055 = vmatprep.mubr.bf16.mxu0 0
        %1056 = vmatmul.mubr.bf16.gmra.mxu0 %v1000
        %v1057 = vpop.f32.mrf.mxu0
        %v1058 = vadd.f32 %v841, %v1057
        %v1059 = vpop.f32.mrf.mxu0
        %v1060 = vpop.f32.mrf.mxu0
        %v1061 = vadd.f32 %v842, %v1060
        %v1062 = vpop.f32.mrf.mxu0
        %1063 = vmatprep.mubr.bf16.mxu0 0
        %1064 = vmatmul.mubr.bf16.gmra.mxu0 %v1003
        %v1065 = vpop.f32.mrf.mxu0
        %v1066 = vadd.f32 %v843, %v1065
        %v1067 = vpop.f32.mrf.mxu0
        %v1068 = vpop.f32.mrf.mxu0
        %v1069 = vadd.f32 %v844, %v1068
        %v1070 = vpop.f32.mrf.mxu0
        %1071 = vmatprep.mubr.bf16.mxu0 0
        %1072 = vmatmul.mubr.bf16.gmra.mxu0 %v1006
        %v1073 = vpop.f32.mrf.mxu0
        %v1074 = vadd.f32 %v845, %v1073
        %v1075 = vpop.f32.mrf.mxu0
        %v1076 = vpop.f32.mrf.mxu0
        %v1077 = vadd.f32 %v846, %v1076
        %v1078 = vpop.f32.mrf.mxu0
        %1079 = vmatprep.mubr.bf16.mxu0 0
        %1080 = vmatmul.mubr.bf16.gmra.mxu0 %v1009
        %v1081 = vpop.f32.mrf.mxu0
        %v1082 = vadd.f32 %v847, %v1081
        %v1083 = vpop.f32.mrf.mxu0
        %v1084 = vpop.f32.mrf.mxu0
        %v1085 = vadd.f32 %v848, %v1084
        %v1086 = vpop.f32.mrf.mxu0
        %1087 = vdwg.mxu0
        %vm1088 = vcmask 523264
        %v1089 = vsel %vm1088, %v1058, -inf
        %1090 = vmax.xlane.f32.xlu0 %v1089
        %v1091 = vpop.xlane.xlu0 %1090
        %v1092 = vsel %vm1088, %v1061, -inf
        %1093 = vmax.xlane.f32.xlu0 %v1092
        %v1094 = vpop.xlane.xlu0 %1093
        %v1095 = vsel %vm1088, %v1066, -inf
        %1096 = vmax.xlane.f32.xlu0 %v1095
        %v1097 = vpop.xlane.xlu0 %1096
        %v1098 = vsel %vm1088, %v1069, -inf
        %1099 = vmax.xlane.f32.xlu0 %v1098
        %v1100 = vpop.xlane.xlu0 %1099
        %v1101 = vsel %vm1088, %v1074, -inf
        %1102 = vmax.xlane.f32.xlu0 %v1101
        %v1103 = vpop.xlane.xlu0 %1102
        %v1104 = vsel %vm1088, %v1077, -inf
        %1105 = vmax.xlane.f32.xlu0 %v1104
        %v1106 = vpop.xlane.xlu0 %1105
        %v1107 = vsel %vm1088, %v1082, -inf
        %1108 = vmax.xlane.f32.xlu0 %v1107
        %v1109 = vpop.xlane.xlu0 %1108
        %v1110 = vsel %vm1088, %v1085, -inf
        %1111 = vmax.xlane.f32.xlu0 %v1110
        %v1112 = vpop.xlane.xlu0 %1111
        %v1113 = vsub.f32 %v1058, %v1091
        %v1114 = vsub.f32 %v1061, %v1094
        %v1115 = vsub.f32 %v1066, %v1097
        %v1116 = vsub.f32 %v1069, %v1100
        %v1117 = vsub.f32 %v1074, %v1103
        %v1118 = vsub.f32 %v1077, %v1106
        %v1119 = vsub.f32 %v1082, %v1109
        %v1120 = vsub.f32 %v1085, %v1112
        %v1121 = vmul.f32 %v1113, 1.442695
        %v1122 = vpow.pop %v1121
        %v1123 = vmul.f32 %v1114, 1.442695
        %v1124 = vpow.pop %v1123
        %v1125 = vmul.f32 %v1115, 1.442695
        %v1126 = vpow.pop %v1125
        %v1127 = vmul.f32 %v1116, 1.442695
        %v1128 = vpow.pop %v1127
        %v1129 = vmul.f32 %v1117, 1.442695
        %v1130 = vpow.pop %v1129
        %v1131 = vmul.f32 %v1118, 1.442695
        %v1132 = vpow.pop %v1131
        %v1133 = vmul.f32 %v1119, 1.442695
        %v1134 = vpow.pop %v1133
        %v1135 = vmul.f32 %v1120, 1.442695
        %v1136 = vpow.pop %v1135
        %v1137 = vsel %vm1088, %v1122, 0.0
        %1138 = vadd.xlane.f32.xlu0 %v1137
        %v1139 = vpop.xlane.xlu0 %1138
        %v1140 = vsel %vm1088, %v1124, 0.0
        %1141 = vadd.xlane.f32.xlu0 %v1140
        %v1142 = vpop.xlane.xlu0 %1141
        %v1143 = vsel %vm1088, %v1126, 0.0
        %1144 = vadd.xlane.f32.xlu0 %v1143
        %v1145 = vpop.xlane.xlu0 %1144
        %v1146 = vsel %vm1088, %v1128, 0.0
        %1147 = vadd.xlane.f32.xlu0 %v1146
        %v1148 = vpop.xlane.xlu0 %1147
        %v1149 = vsel %vm1088, %v1130, 0.0
        %1150 = vadd.xlane.f32.xlu0 %v1149
        %v1151 = vpop.xlane.xlu0 %1150
        %v1152 = vsel %vm1088, %v1132, 0.0
        %1153 = vadd.xlane.f32.xlu0 %v1152
        %v1154 = vpop.xlane.xlu0 %1153
        %v1155 = vsel %vm1088, %v1134, 0.0
        %1156 = vadd.xlane.f32.xlu0 %v1155
        %v1157 = vpop.xlane.xlu0 %1156
        %v1158 = vsel %vm1088, %v1136, 0.0
        %1159 = vadd.xlane.f32.xlu0 %v1158
        %v1160 = vpop.xlane.xlu0 %1159
        %v1161 = vrcp.pop %v1139
        %v1162 = vmul.f32 1.0, %v1161
        %v1163 = vrcp.pop %v1142
        %v1164 = vmul.f32 1.0, %v1163
        %v1165 = vrcp.pop %v1145
        %v1166 = vmul.f32 1.0, %v1165
        %v1167 = vrcp.pop %v1148
        %v1168 = vmul.f32 1.0, %v1167
        %v1169 = vrcp.pop %v1151
        %v1170 = vmul.f32 1.0, %v1169
        %v1171 = vrcp.pop %v1154
        %v1172 = vmul.f32 1.0, %v1171
        %v1173 = vrcp.pop %v1157
        %v1174 = vmul.f32 1.0, %v1173
        %v1175 = vrcp.pop %v1160
        %v1176 = vmul.f32 1.0, %v1175
        %v1177 = vmul.f32 %v1122, %v1162
        %v1178 = vmul.f32 %v1124, %v1164
        %v1179 = vmul.f32 %v1126, %v1166
        %v1180 = vmul.f32 %v1128, %v1168
        %v1181 = vmul.f32 %v1130, %v1170
        %v1182 = vmul.f32 %v1132, %v1172
        %v1183 = vmul.f32 %v1134, %v1174
        %v1184 = vmul.f32 %v1136, %v1176
        %v1185 = vpack.c.bf16 %v1178, %v1177
        %v1186 = vpack.c.bf16 %v1180, %v1179
        %v1187 = vpack.c.bf16 %v1182, %v1181
        %v1188 = vpack.c.bf16 %v1184, %v1183
        %1189 = vrot.lane.b32.xlu0 %v982, 64
        %v1190 = vpop.permute.xlu0 %1189
        %1191 = vrot.lane.b32.xlu0 %v983, 64
        %v1192 = vpop.permute.xlu0 %1191
        %1193 = vrot.lane.b32.xlu0 %v984, 64
        %v1194 = vpop.permute.xlu0 %1193
        %1195 = vrot.lane.b32.xlu0 %v985, 64
        %v1196 = vpop.permute.xlu0 %1195
        %v1202 = vsel %vm1088, %v1185, 0
        %v1205 = vsel %vm1088, %v1186, 0
        %v1208 = vsel %vm1088, %v1187, 0
        %v1211 = vsel %vm1088, %v1188, 0
        %1213 = vmatprep.subr.bf16.mxu0 0
        %1214 = vmatpush1.bf16.msra.mxu0 0
        %1215 = vmatprep.subr.bf16.mxu0 0
        %1216 = vmatpush1.bf16.msra.mxu0 0
        %1217 = vmatprep.subr.bf16.mxu0 0
        %1218 = vmatpush1.bf16.msra.mxu0 0
        %1219 = vmatprep.subr.bf16.mxu0 0
        %1220 = vmatpush1.bf16.msra.mxu0 0
        %1221 = vmatprep.subr.bf16.mxu0 0
        %1222 = vmatpush1.bf16.msra.mxu0 %v1196
        %1223 = vmatprep.subr.bf16.mxu0 0
        %1224 = vmatpush1.bf16.msra.mxu0 %v1194
        %1225 = vmatprep.subr.bf16.mxu0 0
        %1226 = vmatpush1.bf16.msra.mxu0 %v1192
        %1227 = vmatprep.subr.bf16.mxu0 0
        %1228 = vmatpush1.bf16.msra.mxu0 %v1190
        %1229 = vmatprep.subr.bf16.mxu0 0
        %1230 = vmatpush2.bf16.msra.mxu0 0
        %1231 = vmatprep.subr.bf16.mxu0 0
        %1232 = vmatpush2.bf16.msra.mxu0 0
        %1233 = vmatprep.subr.bf16.mxu0 0
        %1234 = vmatpush2.bf16.msra.mxu0 0
        %1235 = vmatprep.subr.bf16.mxu0 0
        %1236 = vmatpush2.bf16.msra.mxu0 0
        %1237 = vmatprep.subr.bf16.mxu0 0
        %1238 = vmatpush2.bf16.msra.mxu0 0
        %1239 = vmatprep.subr.bf16.mxu0 0
        %1240 = vmatpush2.bf16.msra.mxu0 0
        %1241 = vmatprep.subr.bf16.mxu0 0
        %1242 = vmatpush2.bf16.msra.mxu0 0
        %1243 = vmatprep.subr.bf16.mxu0 0
        %1244 = vmatpush2.bf16.msra.mxu0 0
        %1245 = vmatprep.mubr.bf16.mxu0 0
        %1246 = vmatmul.mubr.bf16.gmra.mxu0 %v1202
        %v1247 = vpop.f32.mrf.mxu0
        %v1248 = vadd.f32 0.0, %v1247
        %v1249 = vpop.f32.mrf.mxu0
        %v1250 = vpop.f32.mrf.mxu0
        %v1251 = vadd.f32 0.0, %v1250
        %v1252 = vpop.f32.mrf.mxu0
        %1253 = vmatprep.mubr.bf16.mxu0 0
        %1254 = vmatmul.mubr.bf16.gmra.mxu0 %v1205
        %v1255 = vpop.f32.mrf.mxu0
        %v1256 = vadd.f32 0.0, %v1255
        %v1257 = vpop.f32.mrf.mxu0
        %v1258 = vpop.f32.mrf.mxu0
        %v1259 = vadd.f32 0.0, %v1258
        %v1260 = vpop.f32.mrf.mxu0
        %1261 = vmatprep.mubr.bf16.mxu0 0
        %1262 = vmatmul.mubr.bf16.gmra.mxu0 %v1208
        %v1263 = vpop.f32.mrf.mxu0
        %v1264 = vadd.f32 0.0, %v1263
        %v1265 = vpop.f32.mrf.mxu0
        %v1266 = vpop.f32.mrf.mxu0
        %v1267 = vadd.f32 0.0, %v1266
        %v1268 = vpop.f32.mrf.mxu0
        %1269 = vmatprep.mubr.bf16.mxu0 0
        %1270 = vmatmul.mubr.bf16.gmra.mxu0 %v1211
        %v1271 = vpop.f32.mrf.mxu0
        %v1272 = vadd.f32 0.0, %v1271
        %v1273 = vpop.f32.mrf.mxu0
        %v1274 = vpop.f32.mrf.mxu0
        %v1275 = vadd.f32 0.0, %v1274
        %v1276 = vpop.f32.mrf.mxu0
        %1277 = vdwg.mxu0
        %1280 = vrot.lane.b32.xlu0 %v1256, 8
        %v1281 = vpop.permute.xlu0 %1280
        %1282 = vrot.lane.b32.xlu0 %v1259, 8
        %v1283 = vpop.permute.xlu0 %1282
        %1288 = vrot.lane.b32.xlu0 %v1264, 16
        %v1289 = vpop.permute.xlu0 %1288
        %1290 = vrot.lane.b32.xlu0 %v1267, 16
        %v1291 = vpop.permute.xlu0 %1290
        %1296 = vrot.lane.b32.xlu0 %v1272, 24
        %v1297 = vpop.permute.xlu0 %1296
        %1298 = vrot.lane.b32.xlu0 %v1275, 24
        %v1299 = vpop.permute.xlu0 %1298
        %v1302 = vsel %vm998, %v1248, %v1281
        %v1303 = vsel %vm998, %v1251, %v1283
        %v1304 = vsel %vm763, %v1302, %v1289
        %v1305 = vsel %vm763, %v1303, %v1291
        %vm1306 = vcmask 195584
        %v1307 = vsel %vm1306, %v1304, %v1297
        %v1308 = vsel %vm1306, %v1305, %v1299
        %v1309 = vpack.c.bf16 %v1308, %v1307
        %v1310 = vld [vmem:[%s10] sm:$0xf]
        %v1311 = vld [vmem:[%s10 + $0x4] sm:$0xf]
        %v1312 = vld [vmem:[%s10 + $0x8] sm:$0xf]
        %v1313 = vld [vmem:[%s10 + $0xc] sm:$0xf]
        %v1314 = vld [vmem:[%s11] sm:$0x1]
        %v1316 = vlaneseq
        %v1317 = vshrl.u32 %v1316, 7
        %v1318 = vsub.s32 0, %v1317
        %v1319 = vrot.slane %v1314, %v1318
        %v1325 = vunpack.c.l.b16 %v1310
        %v1326 = vunpack.c.l.b16 %v1311
        %v1327 = vunpack.c.l.b16 %v1312
        %v1328 = vunpack.c.l.b16 %v1313
        %v1329 = vpack.c.b16 %v1326, %v1325
        %v1330 = vpack.c.b16 %v1328, %v1327
        %v1334 = vsel %vm765, %v1309, 0
        %1336 = vmatprep.subr.bf16.mxu0 0
        %1337 = vmatpush1.bf16.msra.mxu0 0
        %1338 = vmatprep.subr.bf16.mxu0 0
        %1339 = vmatpush1.bf16.msra.mxu0 0
        %1340 = vmatprep.subr.bf16.mxu0 0
        %1341 = vmatpush1.bf16.msra.mxu0 0
        %1342 = vmatprep.subr.bf16.mxu0 0
        %1343 = vmatpush1.bf16.msra.mxu0 0
        %1344 = vmatprep.subr.bf16.mxu0 0
        %1345 = vmatpush1.bf16.msra.mxu0 0
        %1346 = vmatprep.subr.bf16.mxu0 0
        %1347 = vmatpush1.bf16.msra.mxu0 0
        %1348 = vmatprep.subr.bf16.mxu0 0
        %1349 = vmatpush1.bf16.msra.mxu0 %v1330
        %1350 = vmatprep.subr.bf16.mxu0 0
        %1351 = vmatpush1.bf16.msra.mxu0 %v1329
        %1352 = vmatprep.subr.bf16.mxu0 0
        %1353 = vmatpush2.bf16.msra.mxu0 0
        %1354 = vmatprep.subr.bf16.mxu0 0
        %1355 = vmatpush2.bf16.msra.mxu0 0
        %1356 = vmatprep.subr.bf16.mxu0 0
        %1357 = vmatpush2.bf16.msra.mxu0 0
        %1358 = vmatprep.subr.bf16.mxu0 0
        %1359 = vmatpush2.bf16.msra.mxu0 0
        %1360 = vmatprep.subr.bf16.mxu0 0
        %1361 = vmatpush2.bf16.msra.mxu0 0
        %1362 = vmatprep.subr.bf16.mxu0 0
        %1363 = vmatpush2.bf16.msra.mxu0 0
        %1364 = vmatprep.subr.bf16.mxu0 0
        %1365 = vmatpush2.bf16.msra.mxu0 0
        %1366 = vmatprep.subr.bf16.mxu0 0
        %1367 = vmatpush2.bf16.msra.mxu0 0
        %1368 = vmatprep.mubr.bf16.mxu0 0
        %1369 = vmatmul.mubr.bf16.gmra.mxu0 %v1334
        %v1370 = vpop.f32.mrf.mxu0
        %v1371 = vadd.f32 %v1319, %v1370
        %v1372 = vpop.f32.mrf.mxu0
        %v1373 = vpop.f32.mrf.mxu0
        %v1374 = vadd.f32 %v1319, %v1373
        %v1375 = vpop.f32.mrf.mxu0
        %1376 = vdwg.mxu0
        %v1377 = vadd.f32 %v746, %v1371
        %v1378 = vadd.f32 %v751, %v1374
        %v1379 = vld [vmem:[%s6] sm:$0x1]
        %v1380 = vld [vmem:[%s7] sm:$0x1]
        %v1381 = vsel %vm765, %v1377, 0.0
        %1382 = vadd.xlane.f32.xlu0 %v1381
        %v1383 = vpop.xlane.xlu0 %1382
        %v1384 = vsel %vm765, %v1378, 0.0
        %1385 = vadd.xlane.f32.xlu0 %v1384
        %v1386 = vpop.xlane.xlu0 %1385
        %v1387 = vmul.f32 %v1383, %v857
        %v1388 = vmul.f32 %v1386, %v857
        %v1389 = vsub.f32 %v1377, %v1387
        %v1390 = vsub.f32 %v1378, %v1388
        %v1391 = vmul.f32 %v1389, %v1389
        %v1392 = vmul.f32 %v1390, %v1390
        %v1393 = vsel %vm765, %v1391, 0.0
        %1394 = vadd.xlane.f32.xlu0 %v1393
        %v1395 = vpop.xlane.xlu0 %1394
        %v1396 = vsel %vm765, %v1392, 0.0
        %1397 = vadd.xlane.f32.xlu0 %v1396
        %v1398 = vpop.xlane.xlu0 %1397
        %v1399 = vmul.f32 %v1395, %v857
        %v1400 = vmul.f32 %v1398, %v857
        %v1401 = vadd.f32 %v1399, 1e-05
        %v1402 = vadd.f32 %v1400, 1e-05
        %v1403 = vrsqrt.pop %v1401
        %v1404 = vrsqrt.pop %v1402
        %v1405 = vmul.f32 %v1389, %v1403
        %v1406 = vmul.f32 %v1390, %v1404
        %v1408 = vlaneseq
        %v1409 = vshrl.u32 %v1408, 7
        %v1410 = vsub.s32 0, %v1409
        %v1411 = vrot.slane %v1379, %v1410
        %v1413 = vmul.f32 %v1405, %v1411
        %v1414 = vmul.f32 %v1406, %v1411
        %v1416 = vlaneseq
        %v1417 = vshrl.u32 %v1416, 7
        %v1418 = vsub.s32 0, %v1417
        %v1419 = vrot.slane %v1380, %v1418
        %v1421 = vadd.f32 %v1413, %v1419
        %v1422 = vadd.f32 %v1414, %v1419
        %v1423 = vpack.c.bf16 %v1422, %v1421
        %v1424 = vld [vmem:[%s12] sm:$0xf]
        %v1425 = vld [vmem:[%s12 + $0x4] sm:$0xf]
        %v1426 = vld [vmem:[%s12 + $0x8] sm:$0xf]
        %v1427 = vld [vmem:[%s12 + $0xc] sm:$0xf]
        %v1428 = vld [vmem:[%s13] sm:$0x1]
        %v1430 = vlaneseq
        %v1431 = vshrl.u32 %v1430, 7
        %v1432 = vsub.s32 0, %v1431
        %v1433 = vrot.slane %v1428, %v1432
        %v1439 = vunpack.c.l.b16 %v1424
        %v1440 = vunpack.c.l.b16 %v1425
        %v1441 = vunpack.c.l.b16 %v1426
        %v1442 = vunpack.c.l.b16 %v1427
        %v1443 = vpack.c.b16 %v1440, %v1439
        %v1444 = vpack.c.b16 %v1442, %v1441
        %v1448 = vsel %vm765, %v1423, 0
        %1450 = vmatprep.subr.bf16.mxu0 0
        %1451 = vmatpush1.bf16.msra.mxu0 0
        %1452 = vmatprep.subr.bf16.mxu0 0
        %1453 = vmatpush1.bf16.msra.mxu0 0
        %1454 = vmatprep.subr.bf16.mxu0 0
        %1455 = vmatpush1.bf16.msra.mxu0 0
        %1456 = vmatprep.subr.bf16.mxu0 0
        %1457 = vmatpush1.bf16.msra.mxu0 0
        %1458 = vmatprep.subr.bf16.mxu0 0
        %1459 = vmatpush1.bf16.msra.mxu0 0
        %1460 = vmatprep.subr.bf16.mxu0 0
        %1461 = vmatpush1.bf16.msra.mxu0 0
        %1462 = vmatprep.subr.bf16.mxu0 0
        %1463 = vmatpush1.bf16.msra.mxu0 %v1444
        %1464 = vmatprep.subr.bf16.mxu0 0
        %1465 = vmatpush1.bf16.msra.mxu0 %v1443
        %1466 = vmatprep.subr.bf16.mxu0 0
        %1467 = vmatpush2.bf16.msra.mxu0 0
        %1468 = vmatprep.subr.bf16.mxu0 0
        %1469 = vmatpush2.bf16.msra.mxu0 0
        %1470 = vmatprep.subr.bf16.mxu0 0
        %1471 = vmatpush2.bf16.msra.mxu0 0
        %1472 = vmatprep.subr.bf16.mxu0 0
        %1473 = vmatpush2.bf16.msra.mxu0 0
        %1474 = vmatprep.subr.bf16.mxu0 0
        %1475 = vmatpush2.bf16.msra.mxu0 0
        %1476 = vmatprep.subr.bf16.mxu0 0
        %1477 = vmatpush2.bf16.msra.mxu0 0
        %1478 = vmatprep.subr.bf16.mxu0 0
        %1479 = vmatpush2.bf16.msra.mxu0 0
        %1480 = vmatprep.subr.bf16.mxu0 0
        %1481 = vmatpush2.bf16.msra.mxu0 0
        %1482 = vmatprep.mubr.bf16.mxu0 0
        %1483 = vmatmul.mubr.bf16.gmra.mxu0 %v1448
        %v1484 = vpop.f32.mrf.mxu0
        %v1485 = vadd.f32 %v1433, %v1484
        %v1486 = vpop.f32.mrf.mxu0
        %v1487 = vpop.f32.mrf.mxu0
        %v1488 = vadd.f32 %v1433, %v1487
        %v1489 = vpop.f32.mrf.mxu0
        %1490 = vdwg.mxu0
        %v1491 = vmul.f32 %v1485, 0.5
        %v1492 = vmul.f32 %v1488, 0.5
        %v1493 = vmul.f32 %v1485, 0.044715
        %v1494 = vmul.f32 %v1488, 0.044715
        %v1495 = vmul.f32 %v1493, %v1485
        %v1496 = vmul.f32 %v1494, %v1488
        %v1497 = vmul.f32 %v1495, %v1485
        %v1498 = vmul.f32 %v1496, %v1488
        %v1499 = vadd.f32 %v1485, %v1497
        %v1500 = vadd.f32 %v1488, %v1498
        %v1501 = vmul.f32 %v1499, 0.7978846
        %v1502 = vmul.f32 %v1500, 0.7978846
        %v1503 = vtanh.pop %v1501
        %v1504 = vtanh.pop %v1502
        %v1505 = vadd.f32 %v1503, 1.0
        %v1506 = vadd.f32 %v1504, 1.0
        %v1507 = vmul.f32 %v1491, %v1505
        %v1508 = vmul.f32 %v1492, %v1506
        %v1509 = vpack.c.bf16 %v1508, %v1507
        %v1510 = vld [vmem:[%s14] sm:$0xf]
        %v1511 = vld [vmem:[%s14 + $0x4] sm:$0xf]
        %v1512 = vld [vmem:[%s14 + $0x8] sm:$0xf]
        %v1513 = vld [vmem:[%s14 + $0xc] sm:$0xf]
        %v1514 = vld [vmem:[%s14 + $0x10] sm:$0xf]
        %v1515 = vld [vmem:[%s14 + $0x14] sm:$0xf]
        %v1516 = vld [vmem:[%s14 + $0x18] sm:$0xf]
        %v1517 = vld [vmem:[%s14 + $0x1c] sm:$0xf]
        %v1518 = vld [vmem:[%s14 + $0x20] sm:$0xf]
        %v1519 = vld [vmem:[%s14 + $0x24] sm:$0xf]
        %v1520 = vld [vmem:[%s14 + $0x28] sm:$0xf]
        %v1521 = vld [vmem:[%s14 + $0x2c] sm:$0xf]
        %v1522 = vld [vmem:[%s14 + $0x30] sm:$0xf]
        %v1523 = vld [vmem:[%s14 + $0x34] sm:$0xf]
        %v1524 = vld [vmem:[%s14 + $0x38] sm:$0xf]
        %v1525 = vld [vmem:[%s14 + $0x3c] sm:$0xf]
        %v1526 = vld [vmem:[%s15] sm:$0x1]
        %v1528 = vlaneseq
        %v1529 = vshrl.u32 %v1528, 7
        %v1530 = vsub.s32 0, %v1529
        %v1531 = vrot.slane %v1526, %v1530
        %v1549 = vunpack.c.l.b16 %v1510
        %v1550 = vunpack.c.l.b16 %v1511
        %v1551 = vunpack.c.l.b16 %v1512
        %v1552 = vunpack.c.l.b16 %v1513
        %v1553 = vunpack.c.l.b16 %v1514
        %v1554 = vunpack.c.l.b16 %v1515
        %v1555 = vunpack.c.l.b16 %v1516
        %v1556 = vunpack.c.l.b16 %v1517
        %v1557 = vunpack.c.l.b16 %v1518
        %v1558 = vunpack.c.l.b16 %v1519
        %v1559 = vunpack.c.l.b16 %v1520
        %v1560 = vunpack.c.l.b16 %v1521
        %v1561 = vunpack.c.l.b16 %v1522
        %v1562 = vunpack.c.l.b16 %v1523
        %v1563 = vunpack.c.l.b16 %v1524
        %v1564 = vunpack.c.l.b16 %v1525
        %v1565 = vpack.c.b16 %v1550, %v1549
        %v1566 = vpack.c.b16 %v1552, %v1551
        %v1567 = vpack.c.b16 %v1554, %v1553
        %v1568 = vpack.c.b16 %v1556, %v1555
        %v1569 = vpack.c.b16 %v1558, %v1557
        %v1570 = vpack.c.b16 %v1560, %v1559
        %v1571 = vpack.c.b16 %v1562, %v1561
        %v1572 = vpack.c.b16 %v1564, %v1563
        %1581 = vmatprep.subr.bf16.mxu0 0
        %1582 = vmatpush1.bf16.msra.mxu0 %v1572
        %1583 = vmatprep.subr.bf16.mxu0 0
        %1584 = vmatpush1.bf16.msra.mxu0 %v1571
        %1585 = vmatprep.subr.bf16.mxu0 0
        %1586 = vmatpush1.bf16.msra.mxu0 %v1570
        %1587 = vmatprep.subr.bf16.mxu0 0
        %1588 = vmatpush1.bf16.msra.mxu0 %v1569
        %1589 = vmatprep.subr.bf16.mxu0 0
        %1590 = vmatpush1.bf16.msra.mxu0 %v1568
        %1591 = vmatprep.subr.bf16.mxu0 0
        %1592 = vmatpush1.bf16.msra.mxu0 %v1567
        %1593 = vmatprep.subr.bf16.mxu0 0
        %1594 = vmatpush1.bf16.msra.mxu0 %v1566
        %1595 = vmatprep.subr.bf16.mxu0 0
        %1596 = vmatpush1.bf16.msra.mxu0 %v1565
        %1597 = vmatprep.subr.bf16.mxu0 0
        %1598 = vmatpush2.bf16.msra.mxu0 0
        %1599 = vmatprep.subr.bf16.mxu0 0
        %1600 = vmatpush2.bf16.msra.mxu0 0
        %1601 = vmatprep.subr.bf16.mxu0 0
        %1602 = vmatpush2.bf16.msra.mxu0 0
        %1603 = vmatprep.subr.bf16.mxu0 0
        %1604 = vmatpush2.bf16.msra.mxu0 0
        %1605 = vmatprep.subr.bf16.mxu0 0
        %1606 = vmatpush2.bf16.msra.mxu0 0
        %1607 = vmatprep.subr.bf16.mxu0 0
        %1608 = vmatpush2.bf16.msra.mxu0 0
        %1609 = vmatprep.subr.bf16.mxu0 0
        %1610 = vmatpush2.bf16.msra.mxu0 0
        %1611 = vmatprep.subr.bf16.mxu0 0
        %1612 = vmatpush2.bf16.msra.mxu0 0
        %1613 = vmatprep.mubr.bf16.mxu0 0
        %1614 = vmatmul.mubr.bf16.gmra.mxu0 %v1509
        %v1615 = vpop.f32.mrf.mxu0
        %v1616 = vadd.f32 %v1531, %v1615
        %v1617 = vpop.f32.mrf.mxu0
        %v1618 = vpop.f32.mrf.mxu0
        %v1619 = vadd.f32 %v1531, %v1618
        %v1620 = vpop.f32.mrf.mxu0
        %1621 = vdwg.mxu0
        %v1622 = vadd.f32 %v1377, %v1616
        %v1623 = vadd.f32 %v1378, %v1619
        %s1624 = scalar_lea.vmem %s4, 1
        %v1625 = vld [vmem:[%s1624] sm:$0x1]
        %s1626 = scalar_lea.vmem %s5, 1
        %v1627 = vld [vmem:[%s1626] sm:$0x1]
        %v1628 = vsel %vm765, %v1622, 0.0
        %1629 = vadd.xlane.f32.xlu0 %v1628
        %v1630 = vpop.xlane.xlu0 %1629
        %v1631 = vsel %vm765, %v1623, 0.0
        %1632 = vadd.xlane.f32.xlu0 %v1631
        %v1633 = vpop.xlane.xlu0 %1632
        %v1634 = vmul.f32 %v1630, %v857
        %v1635 = vmul.f32 %v1633, %v857
        %v1636 = vsub.f32 %v1622, %v1634
        %v1637 = vsub.f32 %v1623, %v1635
        %v1638 = vmul.f32 %v1636, %v1636
        %v1639 = vmul.f32 %v1637, %v1637
        %v1640 = vsel %vm765, %v1638, 0.0
        %1641 = vadd.xlane.f32.xlu0 %v1640
        %v1642 = vpop.xlane.xlu0 %1641
        %v1643 = vsel %vm765, %v1639, 0.0
        %1644 = vadd.xlane.f32.xlu0 %v1643
        %v1645 = vpop.xlane.xlu0 %1644
        %v1646 = vmul.f32 %v1642, %v857
        %v1647 = vmul.f32 %v1645, %v857
        %v1648 = vadd.f32 %v1646, 1e-05
        %v1649 = vadd.f32 %v1647, 1e-05
        %v1650 = vrsqrt.pop %v1648
        %v1651 = vrsqrt.pop %v1649
        %v1652 = vmul.f32 %v1636, %v1650
        %v1653 = vmul.f32 %v1637, %v1651
        %v1655 = vlaneseq
        %v1656 = vshrl.u32 %v1655, 7
        %v1657 = vsub.s32 0, %v1656
        %v1658 = vrot.slane %v1625, %v1657
        %v1660 = vmul.f32 %v1652, %v1658
        %v1661 = vmul.f32 %v1653, %v1658
        %v1663 = vlaneseq
        %v1664 = vshrl.u32 %v1663, 7
        %v1665 = vsub.s32 0, %v1664
        %v1666 = vrot.slane %v1627, %v1665
        %v1668 = vadd.f32 %v1660, %v1666
        %v1669 = vadd.f32 %v1661, %v1666
        %v1670 = vpack.c.bf16 %v1669, %v1668
        %s1671 = scalar_lea.vmem %s8, 16
        %v1672 = vld [vmem:[%s1671] sm:$0xf]
        %v1673 = vld [vmem:[%s1671 + $0x4] sm:$0xf]
        %v1674 = vld [vmem:[%s1671 + $0x8] sm:$0xf]
        %v1675 = vld [vmem:[%s1671 + $0xc] sm:$0xf]
        %s1676 = scalar_lea.vmem %s9, 1
        %v1677 = vld [vmem:[%s1676] sm:$0x1]
        %v1679 = vlaneseq
        %v1680 = vshrl.u32 %v1679, 7
        %v1681 = vsub.s32 0, %v1680
        %v1682 = vrot.slane %v1677, %v1681
        %v1688 = vunpack.c.l.b16 %v1672
        %v1689 = vunpack.c.l.b16 %v1673
        %v1690 = vunpack.c.l.b16 %v1674
        %v1691 = vunpack.c.l.b16 %v1675
        %v1692 = vpack.c.b16 %v1689, %v1688
        %v1693 = vpack.c.b16 %v1691, %v1690
        %v1697 = vsel %vm765, %v1670, 0
        %1699 = vmatprep.subr.bf16.mxu0 0
        %1700 = vmatpush1.bf16.msra.mxu0 0
        %1701 = vmatprep.subr.bf16.mxu0 0
        %1702 = vmatpush1.bf16.msra.mxu0 0
        %1703 = vmatprep.subr.bf16.mxu0 0
        %1704 = vmatpush1.bf16.msra.mxu0 0
        %1705 = vmatprep.subr.bf16.mxu0 0
        %1706 = vmatpush1.bf16.msra.mxu0 0
        %1707 = vmatprep.subr.bf16.mxu0 0
        %1708 = vmatpush1.bf16.msra.mxu0 0
        %1709 = vmatprep.subr.bf16.mxu0 0
        %1710 = vmatpush1.bf16.msra.mxu0 0
        %1711 = vmatprep.subr.bf16.mxu0 0
        %1712 = vmatpush1.bf16.msra.mxu0 %v1693
        %1713 = vmatprep.subr.bf16.mxu0 0
        %1714 = vmatpush1.bf16.msra.mxu0 %v1692
        %1715 = vmatprep.subr.bf16.mxu0 0
        %1716 = vmatpush2.bf16.msra.mxu0 0
        %1717 = vmatprep.subr.bf16.mxu0 0
        %1718 = vmatpush2.bf16.msra.mxu0 0
        %1719 = vmatprep.subr.bf16.mxu0 0
        %1720 = vmatpush2.bf16.msra.mxu0 0
        %1721 = vmatprep.subr.bf16.mxu0 0
        %1722 = vmatpush2.bf16.msra.mxu0 0
        %1723 = vmatprep.subr.bf16.mxu0 0
        %1724 = vmatpush2.bf16.msra.mxu0 0
        %1725 = vmatprep.subr.bf16.mxu0 0
        %1726 = vmatpush2.bf16.msra.mxu0 0
        %1727 = vmatprep.subr.bf16.mxu0 0
        %1728 = vmatpush2.bf16.msra.mxu0 0
        %1729 = vmatprep.subr.bf16.mxu0 0
        %1730 = vmatpush2.bf16.msra.mxu0 0
        %1731 = vmatprep.mubr.bf16.mxu0 0
        %1732 = vmatmul.mubr.bf16.gmra.mxu0 %v1697
        %v1733 = vpop.f32.mrf.mxu0
        %v1734 = vadd.f32 %v1682, %v1733
        %v1735 = vpop.f32.mrf.mxu0
        %v1736 = vpop.f32.mrf.mxu0
        %v1737 = vadd.f32 %v1682, %v1736
        %v1738 = vpop.f32.mrf.mxu0
        %1739 = vdwg.mxu0
        %1742 = vrot.lane.b32.xlu0 %v1734, 120
        %v1743 = vpop.permute.xlu0 %1742
        %1744 = vrot.lane.b32.xlu0 %v1737, 120
        %v1745 = vpop.permute.xlu0 %1744
        %1748 = vrot.lane.b32.xlu0 %v1734, 112
        %v1749 = vpop.permute.xlu0 %1748
        %1750 = vrot.lane.b32.xlu0 %v1737, 112
        %v1751 = vpop.permute.xlu0 %1750
        %1754 = vrot.lane.b32.xlu0 %v1734, 104
        %v1755 = vpop.permute.xlu0 %1754
        %1756 = vrot.lane.b32.xlu0 %v1737, 104
        %v1757 = vpop.permute.xlu0 %1756
        %v1760 = vpack.c.bf16 %v1737, %v1734
        %v1761 = vpack.c.bf16 %v1745, %v1743
        %v1762 = vpack.c.bf16 %v1751, %v1749
        %v1763 = vpack.c.bf16 %v1757, %v1755
        %1768 = vrot.lane.b32.xlu0 %v1760, 96
        %v1769 = vpop.permute.xlu0 %1768
        %1770 = vrot.lane.b32.xlu0 %v1761, 96
        %v1771 = vpop.permute.xlu0 %1770
        %1772 = vrot.lane.b32.xlu0 %v1762, 96
        %v1773 = vpop.permute.xlu0 %1772
        %1774 = vrot.lane.b32.xlu0 %v1763, 96
        %v1775 = vpop.permute.xlu0 %1774
        %v1777 = vsel %vm998, %v1760, 0
        %v1780 = vsel %vm998, %v1761, 0
        %v1783 = vsel %vm998, %v1762, 0
        %v1786 = vsel %vm998, %v1763, 0
        %v1789 = vsel %vm998, %v1769, 0
        %v1792 = vsel %vm998, %v1771, 0
        %v1795 = vsel %vm998, %v1773, 0
        %v1798 = vsel %vm998, %v1775, 0
        %1800 = vmatprep.subr.bf16.mxu0 0
        %1801 = vmatpush1.bf16.xpose.msra.mxu0 0
        %1802 = vmatprep.subr.bf16.mxu0 0
        %1803 = vmatpush1.bf16.xpose.msra.mxu0 0
        %1804 = vmatprep.subr.bf16.mxu0 0
        %1805 = vmatpush1.bf16.xpose.msra.mxu0 0
        %1806 = vmatprep.subr.bf16.mxu0 0
        %1807 = vmatpush1.bf16.xpose.msra.mxu0 0
        %1808 = vmatprep.subr.bf16.mxu0 0
        %1809 = vmatpush1.bf16.xpose.msra.mxu0 %v1798
        %1810 = vmatprep.subr.bf16.mxu0 0
        %1811 = vmatpush1.bf16.xpose.msra.mxu0 %v1795
        %1812 = vmatprep.subr.bf16.mxu0 0
        %1813 = vmatpush1.bf16.xpose.msra.mxu0 %v1792
        %1814 = vmatprep.subr.bf16.mxu0 0
        %1815 = vmatpush1.bf16.xpose.msra.mxu0 %v1789
        %1816 = vmatprep.subr.bf16.mxu0 0
        %1817 = vmatpush2.bf16.xpose.msra.mxu0 0
        %1818 = vmatprep.subr.bf16.mxu0 0
        %1819 = vmatpush2.bf16.xpose.msra.mxu0 0
        %1820 = vmatprep.subr.bf16.mxu0 0
        %1821 = vmatpush2.bf16.xpose.msra.mxu0 0
        %1822 = vmatprep.subr.bf16.mxu0 0
        %1823 = vmatpush2.bf16.xpose.msra.mxu0 0
        %1824 = vmatprep.subr.bf16.mxu0 0
        %1825 = vmatpush2.bf16.xpose.msra.mxu0 0
        %1826 = vmatprep.subr.bf16.mxu0 0
        %1827 = vmatpush2.bf16.xpose.msra.mxu0 0
        %1828 = vmatprep.subr.bf16.mxu0 0
        %1829 = vmatpush2.bf16.xpose.msra.mxu0 0
        %1830 = vmatprep.subr.bf16.mxu0 0
        %1831 = vmatpush2.bf16.xpose.msra.mxu0 0
        %1832 = vmatprep.mubr.bf16.mxu0 0
        %1833 = vmatmul.mubr.bf16.gmra.mxu0 %v1777
        %v1834 = vpop.f32.mrf.mxu0
        %v1835 = vadd.f32 %v841, %v1834
        %v1836 = vpop.f32.mrf.mxu0
        %v1837 = vpop.f32.mrf.mxu0
        %v1838 = vadd.f32 %v842, %v1837
        %v1839 = vpop.f32.mrf.mxu0
        %1840 = vmatprep.mubr.bf16.mxu0 0
        %1841 = vmatmul.mubr.bf16.gmra.mxu0 %v1780
        %v1842 = vpop.f32.mrf.mxu0
        %v1843 = vadd.f32 %v843, %v1842
        %v1844 = vpop.f32.mrf.mxu0
        %v1845 = vpop.f32.mrf.mxu0
        %v1846 = vadd.f32 %v844, %v1845
        %v1847 = vpop.f32.mrf.mxu0
        %1848 = vmatprep.mubr.bf16.mxu0 0
        %1849 = vmatmul.mubr.bf16.gmra.mxu0 %v1783
        %v1850 = vpop.f32.mrf.mxu0
        %v1851 = vadd.f32 %v845, %v1850
        %v1852 = vpop.f32.mrf.mxu0
        %v1853 = vpop.f32.mrf.mxu0
        %v1854 = vadd.f32 %v846, %v1853
        %v1855 = vpop.f32.mrf.mxu0
        %1856 = vmatprep.mubr.bf16.mxu0 0
        %1857 = vmatmul.mubr.bf16.gmra.mxu0 %v1786
        %v1858 = vpop.f32.mrf.mxu0
        %v1859 = vadd.f32 %v847, %v1858
        %v1860 = vpop.f32.mrf.mxu0
        %v1861 = vpop.f32.mrf.mxu0
        %v1862 = vadd.f32 %v848, %v1861
        %v1863 = vpop.f32.mrf.mxu0
        %1864 = vdwg.mxu0
        %v1865 = vsel %vm1088, %v1835, -inf
        %1866 = vmax.xlane.f32.xlu0 %v1865
        %v1867 = vpop.xlane.xlu0 %1866
        %v1868 = vsel %vm1088, %v1838, -inf
        %1869 = vmax.xlane.f32.xlu0 %v1868
        %v1870 = vpop.xlane.xlu0 %1869
        %v1871 = vsel %vm1088, %v1843, -inf
        %1872 = vmax.xlane.f32.xlu0 %v1871
        %v1873 = vpop.xlane.xlu0 %1872
        %v1874 = vsel %vm1088, %v1846, -inf
        %1875 = vmax.xlane.f32.xlu0 %v1874
        %v1876 = vpop.xlane.xlu0 %1875
        %v1877 = vsel %vm1088, %v1851, -inf
        %1878 = vmax.xlane.f32.xlu0 %v1877
        %v1879 = vpop.xlane.xlu0 %1878
        %v1880 = vsel %vm1088, %v1854, -inf
        %1881 = vmax.xlane.f32.xlu0 %v1880
        %v1882 = vpop.xlane.xlu0 %1881
        %v1883 = vsel %vm1088, %v1859, -inf
        %1884 = vmax.xlane.f32.xlu0 %v1883
        %v1885 = vpop.xlane.xlu0 %1884
        %v1886 = vsel %vm1088, %v1862, -inf
        %1887 = vmax.xlane.f32.xlu0 %v1886
        %v1888 = vpop.xlane.xlu0 %1887
        %v1889 = vsub.f32 %v1835, %v1867
        %v1890 = vsub.f32 %v1838, %v1870
        %v1891 = vsub.f32 %v1843, %v1873
        %v1892 = vsub.f32 %v1846, %v1876
        %v1893 = vsub.f32 %v1851, %v1879
        %v1894 = vsub.f32 %v1854, %v1882
        %v1895 = vsub.f32 %v1859, %v1885
        %v1896 = vsub.f32 %v1862, %v1888
        %v1897 = vmul.f32 %v1889, 1.442695
        %v1898 = vpow.pop %v1897
        %v1899 = vmul.f32 %v1890, 1.442695
        %v1900 = vpow.pop %v1899
        %v1901 = vmul.f32 %v1891, 1.442695
        %v1902 = vpow.pop %v1901
        %v1903 = vmul.f32 %v1892, 1.442695
        %v1904 = vpow.pop %v1903
        %v1905 = vmul.f32 %v1893, 1.442695
        %v1906 = vpow.pop %v1905
        %v1907 = vmul.f32 %v1894, 1.442695
        %v1908 = vpow.pop %v1907
        %v1909 = vmul.f32 %v1895, 1.442695
        %v1910 = vpow.pop %v1909
        %v1911 = vmul.f32 %v1896, 1.442695
        %v1912 = vpow.pop %v1911
        %v1913 = vsel %vm1088, %v1898, 0.0
        %1914 = vadd.xlane.f32.xlu0 %v1913
        %v1915 = vpop.xlane.xlu0 %1914
        %v1916 = vsel %vm1088, %v1900, 0.0
        %1917 = vadd.xlane.f32.xlu0 %v1916
        %v1918 = vpop.xlane.xlu0 %1917
        %v1919 = vsel %vm1088, %v1902, 0.0
        %1920 = vadd.xlane.f32.xlu0 %v1919
        %v1921 = vpop.xlane.xlu0 %1920
        %v1922 = vsel %vm1088, %v1904, 0.0
        %1923 = vadd.xlane.f32.xlu0 %v1922
        %v1924 = vpop.xlane.xlu0 %1923
        %v1925 = vsel %vm1088, %v1906, 0.0
        %1926 = vadd.xlane.f32.xlu0 %v1925
        %v1927 = vpop.xlane.xlu0 %1926
        %v1928 = vsel %vm1088, %v1908, 0.0
        %1929 = vadd.xlane.f32.xlu0 %v1928
        %v1930 = vpop.xlane.xlu0 %1929
        %v1931 = vsel %vm1088, %v1910, 0.0
        %1932 = vadd.xlane.f32.xlu0 %v1931
        %v1933 = vpop.xlane.xlu0 %1932
        %v1934 = vsel %vm1088, %v1912, 0.0
        %1935 = vadd.xlane.f32.xlu0 %v1934
        %v1936 = vpop.xlane.xlu0 %1935
        %v1937 = vrcp.pop %v1915
        %v1938 = vmul.f32 1.0, %v1937
        %v1939 = vrcp.pop %v1918
        %v1940 = vmul.f32 1.0, %v1939
        %v1941 = vrcp.pop %v1921
        %v1942 = vmul.f32 1.0, %v1941
        %v1943 = vrcp.pop %v1924
        %v1944 = vmul.f32 1.0, %v1943
        %v1945 = vrcp.pop %v1927
        %v1946 = vmul.f32 1.0, %v1945
        %v1947 = vrcp.pop %v1930
        %v1948 = vmul.f32 1.0, %v1947
        %v1949 = vrcp.pop %v1933
        %v1950 = vmul.f32 1.0, %v1949
        %v1951 = vrcp.pop %v1936
        %v1952 = vmul.f32 1.0, %v1951
        %v1953 = vmul.f32 %v1898, %v1938
        %v1954 = vmul.f32 %v1900, %v1940
        %v1955 = vmul.f32 %v1902, %v1942
        %v1956 = vmul.f32 %v1904, %v1944
        %v1957 = vmul.f32 %v1906, %v1946
        %v1958 = vmul.f32 %v1908, %v1948
        %v1959 = vmul.f32 %v1910, %v1950
        %v1960 = vmul.f32 %v1912, %v1952
        %v1961 = vpack.c.bf16 %v1954, %v1953
        %v1962 = vpack.c.bf16 %v1956, %v1955
        %v1963 = vpack.c.bf16 %v1958, %v1957
        %v1964 = vpack.c.bf16 %v1960, %v1959
        %1965 = vrot.lane.b32.xlu0 %v1760, 64
        %v1966 = vpop.permute.xlu0 %1965
        %1967 = vrot.lane.b32.xlu0 %v1761, 64
        %v1968 = vpop.permute.xlu0 %1967
        %1969 = vrot.lane.b32.xlu0 %v1762, 64
        %v1970 = vpop.permute.xlu0 %1969
        %1971 = vrot.lane.b32.xlu0 %v1763, 64
        %v1972 = vpop.permute.xlu0 %1971
        %v1978 = vsel %vm1088, %v1961, 0
        %v1981 = vsel %vm1088, %v1962, 0
        %v1984 = vsel %vm1088, %v1963, 0
        %v1987 = vsel %vm1088, %v1964, 0
        %1989 = vmatprep.subr.bf16.mxu0 0
        %1990 = vmatpush1.bf16.msra.mxu0 0
        %1991 = vmatprep.subr.bf16.mxu0 0
        %1992 = vmatpush1.bf16.msra.mxu0 0
        %1993 = vmatprep.subr.bf16.mxu0 0
        %1994 = vmatpush1.bf16.msra.mxu0 0
        %1995 = vmatprep.subr.bf16.mxu0 0
        %1996 = vmatpush1.bf16.msra.mxu0 0
        %1997 = vmatprep.subr.bf16.mxu0 0
        %1998 = vmatpush1.bf16.msra.mxu0 %v1972
        %1999 = vmatprep.subr.bf16.mxu0 0
        %2000 = vmatpush1.bf16.msra.mxu0 %v1970
        %2001 = vmatprep.subr.bf16.mxu0 0
        %2002 = vmatpush1.bf16.msra.mxu0 %v1968
        %2003 = vmatprep.subr.bf16.mxu0 0
        %2004 = vmatpush1.bf16.msra.mxu0 %v1966
        %2005 = vmatprep.subr.bf16.mxu0 0
        %2006 = vmatpush2.bf16.msra.mxu0 0
        %2007 = vmatprep.subr.bf16.mxu0 0
        %2008 = vmatpush2.bf16.msra.mxu0 0
        %2009 = vmatprep.subr.bf16.mxu0 0
        %2010 = vmatpush2.bf16.msra.mxu0 0
        %2011 = vmatprep.subr.bf16.mxu0 0
        %2012 = vmatpush2.bf16.msra.mxu0 0
        %2013 = vmatprep.subr.bf16.mxu0 0
        %2014 = vmatpush2.bf16.msra.mxu0 0
        %2015 = vmatprep.subr.bf16.mxu0 0
        %2016 = vmatpush2.bf16.msra.mxu0 0
        %2017 = vmatprep.subr.bf16.mxu0 0
        %2018 = vmatpush2.bf16.msra.mxu0 0
        %2019 = vmatprep.subr.bf16.mxu0 0
        %2020 = vmatpush2.bf16.msra.mxu0 0
        %2021 = vmatprep.mubr.bf16.mxu0 0
        %2022 = vmatmul.mubr.bf16.gmra.mxu0 %v1978
        %v2023 = vpop.f32.mrf.mxu0
        %v2024 = vadd.f32 0.0, %v2023
        %v2025 = vpop.f32.mrf.mxu0
        %v2026 = vpop.f32.mrf.mxu0
        %v2027 = vadd.f32 0.0, %v2026
        %v2028 = vpop.f32.mrf.mxu0
        %2029 = vmatprep.mubr.bf16.mxu0 0
        %2030 = vmatmul.mubr.bf16.gmra.mxu0 %v1981
        %v2031 = vpop.f32.mrf.mxu0
        %v2032 = vadd.f32 0.0, %v2031
        %v2033 = vpop.f32.mrf.mxu0
        %v2034 = vpop.f32.mrf.mxu0
        %v2035 = vadd.f32 0.0, %v2034
        %v2036 = vpop.f32.mrf.mxu0
        %2037 = vmatprep.mubr.bf16.mxu0 0
        %2038 = vmatmul.mubr.bf16.gmra.mxu0 %v1984
        %v2039 = vpop.f32.mrf.mxu0
        %v2040 = vadd.f32 0.0, %v2039
        %v2041 = vpop.f32.mrf.mxu0
        %v2042 = vpop.f32.mrf.mxu0
        %v2043 = vadd.f32 0.0, %v2042
        %v2044 = vpop.f32.mrf.mxu0
        %2045 = vmatprep.mubr.bf16.mxu0 0
        %2046 = vmatmul.mubr.bf16.gmra.mxu0 %v1987
        %v2047 = vpop.f32.mrf.mxu0
        %v2048 = vadd.f32 0.0, %v2047
        %v2049 = vpop.f32.mrf.mxu0
        %v2050 = vpop.f32.mrf.mxu0
        %v2051 = vadd.f32 0.0, %v2050
        %v2052 = vpop.f32.mrf.mxu0
        %2053 = vdwg.mxu0
        %2056 = vrot.lane.b32.xlu0 %v2032, 8
        %v2057 = vpop.permute.xlu0 %2056
        %2058 = vrot.lane.b32.xlu0 %v2035, 8
        %v2059 = vpop.permute.xlu0 %2058
        %2064 = vrot.lane.b32.xlu0 %v2040, 16
        %v2065 = vpop.permute.xlu0 %2064
        %2066 = vrot.lane.b32.xlu0 %v2043, 16
        %v2067 = vpop.permute.xlu0 %2066
        %2072 = vrot.lane.b32.xlu0 %v2048, 24
        %v2073 = vpop.permute.xlu0 %2072
        %2074 = vrot.lane.b32.xlu0 %v2051, 24
        %v2075 = vpop.permute.xlu0 %2074
        %v2078 = vsel %vm998, %v2024, %v2057
        %v2079 = vsel %vm998, %v2027, %v2059
        %v2080 = vsel %vm763, %v2078, %v2065
        %v2081 = vsel %vm763, %v2079, %v2067
        %v2082 = vsel %vm1306, %v2080, %v2073
        %v2083 = vsel %vm1306, %v2081, %v2075
        %v2084 = vpack.c.bf16 %v2083, %v2082
        %s2085 = scalar_lea.vmem %s10, 16
        %v2086 = vld [vmem:[%s2085] sm:$0xf]
        %v2087 = vld [vmem:[%s2085 + $0x4] sm:$0xf]
        %v2088 = vld [vmem:[%s2085 + $0x8] sm:$0xf]
        %v2089 = vld [vmem:[%s2085 + $0xc] sm:$0xf]
        %s2090 = scalar_lea.vmem %s11, 1
        %v2091 = vld [vmem:[%s2090] sm:$0x1]
        %v2093 = vlaneseq
        %v2094 = vshrl.u32 %v2093, 7
        %v2095 = vsub.s32 0, %v2094
        %v2096 = vrot.slane %v2091, %v2095
        %v2102 = vunpack.c.l.b16 %v2086
        %v2103 = vunpack.c.l.b16 %v2087
        %v2104 = vunpack.c.l.b16 %v2088
        %v2105 = vunpack.c.l.b16 %v2089
        %v2106 = vpack.c.b16 %v2103, %v2102
        %v2107 = vpack.c.b16 %v2105, %v2104
        %v2111 = vsel %vm765, %v2084, 0
        %2113 = vmatprep.subr.bf16.mxu0 0
        %2114 = vmatpush1.bf16.msra.mxu0 0
        %2115 = vmatprep.subr.bf16.mxu0 0
        %2116 = vmatpush1.bf16.msra.mxu0 0
        %2117 = vmatprep.subr.bf16.mxu0 0
        %2118 = vmatpush1.bf16.msra.mxu0 0
        %2119 = vmatprep.subr.bf16.mxu0 0
        %2120 = vmatpush1.bf16.msra.mxu0 0
        %2121 = vmatprep.subr.bf16.mxu0 0
        %2122 = vmatpush1.bf16.msra.mxu0 0
        %2123 = vmatprep.subr.bf16.mxu0 0
        %2124 = vmatpush1.bf16.msra.mxu0 0
        %2125 = vmatprep.subr.bf16.mxu0 0
        %2126 = vmatpush1.bf16.msra.mxu0 %v2107
        %2127 = vmatprep.subr.bf16.mxu0 0
        %2128 = vmatpush1.bf16.msra.mxu0 %v2106
        %2129 = vmatprep.subr.bf16.mxu0 0
        %2130 = vmatpush2.bf16.msra.mxu0 0
        %2131 = vmatprep.subr.bf16.mxu0 0
        %2132 = vmatpush2.bf16.msra.mxu0 0
        %2133 = vmatprep.subr.bf16.mxu0 0
        %2134 = vmatpush2.bf16.msra.mxu0 0
        %2135 = vmatprep.subr.bf16.mxu0 0
        %2136 = vmatpush2.bf16.msra.mxu0 0
        %2137 = vmatprep.subr.bf16.mxu0 0
        %2138 = vmatpush2.bf16.msra.mxu0 0
        %2139 = vmatprep.subr.bf16.mxu0 0
        %2140 = vmatpush2.bf16.msra.mxu0 0
        %2141 = vmatprep.subr.bf16.mxu0 0
        %2142 = vmatpush2.bf16.msra.mxu0 0
        %2143 = vmatprep.subr.bf16.mxu0 0
        %2144 = vmatpush2.bf16.msra.mxu0 0
        %2145 = vmatprep.mubr.bf16.mxu0 0
        %2146 = vmatmul.mubr.bf16.gmra.mxu0 %v2111
        %v2147 = vpop.f32.mrf.mxu0
        %v2148 = vadd.f32 %v2096, %v2147
        %v2149 = vpop.f32.mrf.mxu0
        %v2150 = vpop.f32.mrf.mxu0
        %v2151 = vadd.f32 %v2096, %v2150
        %v2152 = vpop.f32.mrf.mxu0
        %2153 = vdwg.mxu0
        %v2154 = vadd.f32 %v1622, %v2148
        %v2155 = vadd.f32 %v1623, %v2151
        %s2156 = scalar_lea.vmem %s6, 1
        %v2157 = vld [vmem:[%s2156] sm:$0x1]
        %s2158 = scalar_lea.vmem %s7, 1
        %v2159 = vld [vmem:[%s2158] sm:$0x1]
        %v2160 = vsel %vm765, %v2154, 0.0
        %2161 = vadd.xlane.f32.xlu0 %v2160
        %v2162 = vpop.xlane.xlu0 %2161
        %v2163 = vsel %vm765, %v2155, 0.0
        %2164 = vadd.xlane.f32.xlu0 %v2163
        %v2165 = vpop.xlane.xlu0 %2164
        %v2166 = vmul.f32 %v2162, %v857
        %v2167 = vmul.f32 %v2165, %v857
        %v2168 = vsub.f32 %v2154, %v2166
        %v2169 = vsub.f32 %v2155, %v2167
        %v2170 = vmul.f32 %v2168, %v2168
        %v2171 = vmul.f32 %v2169, %v2169
        %v2172 = vsel %vm765, %v2170, 0.0
        %2173 = vadd.xlane.f32.xlu0 %v2172
        %v2174 = vpop.xlane.xlu0 %2173
        %v2175 = vsel %vm765, %v2171, 0.0
        %2176 = vadd.xlane.f32.xlu0 %v2175
        %v2177 = vpop.xlane.xlu0 %2176
        %v2178 = vmul.f32 %v2174, %v857
        %v2179 = vmul.f32 %v2177, %v857
        %v2180 = vadd.f32 %v2178, 1e-05
        %v2181 = vadd.f32 %v2179, 1e-05
        %v2182 = vrsqrt.pop %v2180
        %v2183 = vrsqrt.pop %v2181
        %v2184 = vmul.f32 %v2168, %v2182
        %v2185 = vmul.f32 %v2169, %v2183
        %v2187 = vlaneseq
        %v2188 = vshrl.u32 %v2187, 7
        %v2189 = vsub.s32 0, %v2188
        %v2190 = vrot.slane %v2157, %v2189
        %v2192 = vmul.f32 %v2184, %v2190
        %v2193 = vmul.f32 %v2185, %v2190
        %v2195 = vlaneseq
        %v2196 = vshrl.u32 %v2195, 7
        %v2197 = vsub.s32 0, %v2196
        %v2198 = vrot.slane %v2159, %v2197
        %v2200 = vadd.f32 %v2192, %v2198
        %v2201 = vadd.f32 %v2193, %v2198
        %v2202 = vpack.c.bf16 %v2201, %v2200
        %s2203 = scalar_lea.vmem %s12, 16
        %v2204 = vld [vmem:[%s2203] sm:$0xf]
        %v2205 = vld [vmem:[%s2203 + $0x4] sm:$0xf]
        %v2206 = vld [vmem:[%s2203 + $0x8] sm:$0xf]
        %v2207 = vld [vmem:[%s2203 + $0xc] sm:$0xf]
        %s2208 = scalar_lea.vmem %s13, 1
        %v2209 = vld [vmem:[%s2208] sm:$0x1]
        %v2211 = vlaneseq
        %v2212 = vshrl.u32 %v2211, 7
        %v2213 = vsub.s32 0, %v2212
        %v2214 = vrot.slane %v2209, %v2213
        %v2220 = vunpack.c.l.b16 %v2204
        %v2221 = vunpack.c.l.b16 %v2205
        %v2222 = vunpack.c.l.b16 %v2206
        %v2223 = vunpack.c.l.b16 %v2207
        %v2224 = vpack.c.b16 %v2221, %v2220
        %v2225 = vpack.c.b16 %v2223, %v2222
        %v2229 = vsel %vm765, %v2202, 0
        %2231 = vmatprep.subr.bf16.mxu0 0
        %2232 = vmatpush1.bf16.msra.mxu0 0
        %2233 = vmatprep.subr.bf16.mxu0 0
        %2234 = vmatpush1.bf16.msra.mxu0 0
        %2235 = vmatprep.subr.bf16.mxu0 0
        %2236 = vmatpush1.bf16.msra.mxu0 0
        %2237 = vmatprep.subr.bf16.mxu0 0
        %2238 = vmatpush1.bf16.msra.mxu0 0
        %2239 = vmatprep.subr.bf16.mxu0 0
        %2240 = vmatpush1.bf16.msra.mxu0 0
        %2241 = vmatprep.subr.bf16.mxu0 0
        %2242 = vmatpush1.bf16.msra.mxu0 0
        %2243 = vmatprep.subr.bf16.mxu0 0
        %2244 = vmatpush1.bf16.msra.mxu0 %v2225
        %2245 = vmatprep.subr.bf16.mxu0 0
        %2246 = vmatpush1.bf16.msra.mxu0 %v2224
        %2247 = vmatprep.subr.bf16.mxu0 0
        %2248 = vmatpush2.bf16.msra.mxu0 0
        %2249 = vmatprep.subr.bf16.mxu0 0
        %2250 = vmatpush2.bf16.msra.mxu0 0
        %2251 = vmatprep.subr.bf16.mxu0 0
        %2252 = vmatpush2.bf16.msra.mxu0 0
        %2253 = vmatprep.subr.bf16.mxu0 0
        %2254 = vmatpush2.bf16.msra.mxu0 0
        %2255 = vmatprep.subr.bf16.mxu0 0
        %2256 = vmatpush2.bf16.msra.mxu0 0
        %2257 = vmatprep.subr.bf16.mxu0 0
        %2258 = vmatpush2.bf16.msra.mxu0 0
        %2259 = vmatprep.subr.bf16.mxu0 0
        %2260 = vmatpush2.bf16.msra.mxu0 0
        %2261 = vmatprep.subr.bf16.mxu0 0
        %2262 = vmatpush2.bf16.msra.mxu0 0
        %2263 = vmatprep.mubr.bf16.mxu0 0
        %2264 = vmatmul.mubr.bf16.gmra.mxu0 %v2229
        %v2265 = vpop.f32.mrf.mxu0
        %v2266 = vadd.f32 %v2214, %v2265
        %v2267 = vpop.f32.mrf.mxu0
        %v2268 = vpop.f32.mrf.mxu0
        %v2269 = vadd.f32 %v2214, %v2268
        %v2270 = vpop.f32.mrf.mxu0
        %2271 = vdwg.mxu0
        %v2272 = vmul.f32 %v2266, 0.5
        %v2273 = vmul.f32 %v2269, 0.5
        %v2274 = vmul.f32 %v2266, 0.044715
        %v2275 = vmul.f32 %v2269, 0.044715
        %v2276 = vmul.f32 %v2274, %v2266
        %v2277 = vmul.f32 %v2275, %v2269
        %v2278 = vmul.f32 %v2276, %v2266
        %v2279 = vmul.f32 %v2277, %v2269
        %v2280 = vadd.f32 %v2266, %v2278
        %v2281 = vadd.f32 %v2269, %v2279
        %v2282 = vmul.f32 %v2280, 0.7978846
        %v2283 = vmul.f32 %v2281, 0.7978846
        %v2284 = vtanh.pop %v2282
        %v2285 = vtanh.pop %v2283
        %v2286 = vadd.f32 %v2284, 1.0
        %v2287 = vadd.f32 %v2285, 1.0
        %v2288 = vmul.f32 %v2272, %v2286
        %v2289 = vmul.f32 %v2273, %v2287
        %v2290 = vpack.c.bf16 %v2289, %v2288
        %s2291 = scalar_lea.vmem %s14, 64
        %v2292 = vld [vmem:[%s2291] sm:$0xf]
        %v2293 = vld [vmem:[%s2291 + $0x4] sm:$0xf]
        %v2294 = vld [vmem:[%s2291 + $0x8] sm:$0xf]
        %v2295 = vld [vmem:[%s2291 + $0xc] sm:$0xf]
        %v2296 = vld [vmem:[%s2291 + $0x10] sm:$0xf]
        %v2297 = vld [vmem:[%s2291 + $0x14] sm:$0xf]
        %v2298 = vld [vmem:[%s2291 + $0x18] sm:$0xf]
        %v2299 = vld [vmem:[%s2291 + $0x1c] sm:$0xf]
        %v2300 = vld [vmem:[%s2291 + $0x20] sm:$0xf]
        %v2301 = vld [vmem:[%s2291 + $0x24] sm:$0xf]
        %v2302 = vld [vmem:[%s2291 + $0x28] sm:$0xf]
        %v2303 = vld [vmem:[%s2291 + $0x2c] sm:$0xf]
        %v2304 = vld [vmem:[%s2291 + $0x30] sm:$0xf]
        %v2305 = vld [vmem:[%s2291 + $0x34] sm:$0xf]
        %v2306 = vld [vmem:[%s2291 + $0x38] sm:$0xf]
        %v2307 = vld [vmem:[%s2291 + $0x3c] sm:$0xf]
        %s2308 = scalar_lea.vmem %s15, 1
        %v2309 = vld [vmem:[%s2308] sm:$0x1]
        %v2311 = vlaneseq
        %v2312 = vshrl.u32 %v2311, 7
        %v2313 = vsub.s32 0, %v2312
        %v2314 = vrot.slane %v2309, %v2313
        %v2332 = vunpack.c.l.b16 %v2292
        %v2333 = vunpack.c.l.b16 %v2293
        %v2334 = vunpack.c.l.b16 %v2294
        %v2335 = vunpack.c.l.b16 %v2295
        %v2336 = vunpack.c.l.b16 %v2296
        %v2337 = vunpack.c.l.b16 %v2297
        %v2338 = vunpack.c.l.b16 %v2298
        %v2339 = vunpack.c.l.b16 %v2299
        %v2340 = vunpack.c.l.b16 %v2300
        %v2341 = vunpack.c.l.b16 %v2301
        %v2342 = vunpack.c.l.b16 %v2302
        %v2343 = vunpack.c.l.b16 %v2303
        %v2344 = vunpack.c.l.b16 %v2304
        %v2345 = vunpack.c.l.b16 %v2305
        %v2346 = vunpack.c.l.b16 %v2306
        %v2347 = vunpack.c.l.b16 %v2307
        %v2348 = vpack.c.b16 %v2333, %v2332
        %v2349 = vpack.c.b16 %v2335, %v2334
        %v2350 = vpack.c.b16 %v2337, %v2336
        %v2351 = vpack.c.b16 %v2339, %v2338
        %v2352 = vpack.c.b16 %v2341, %v2340
        %v2353 = vpack.c.b16 %v2343, %v2342
        %v2354 = vpack.c.b16 %v2345, %v2344
        %v2355 = vpack.c.b16 %v2347, %v2346
        %2364 = vmatprep.subr.bf16.mxu0 0
        %2365 = vmatpush1.bf16.msra.mxu0 %v2355
        %2366 = vmatprep.subr.bf16.mxu0 0
        %2367 = vmatpush1.bf16.msra.mxu0 %v2354
        %2368 = vmatprep.subr.bf16.mxu0 0
        %2369 = vmatpush1.bf16.msra.mxu0 %v2353
        %2370 = vmatprep.subr.bf16.mxu0 0
        %2371 = vmatpush1.bf16.msra.mxu0 %v2352
        %2372 = vmatprep.subr.bf16.mxu0 0
        %2373 = vmatpush1.bf16.msra.mxu0 %v2351
        %2374 = vmatprep.subr.bf16.mxu0 0
        %2375 = vmatpush1.bf16.msra.mxu0 %v2350
        %2376 = vmatprep.subr.bf16.mxu0 0
        %2377 = vmatpush1.bf16.msra.mxu0 %v2349
        %2378 = vmatprep.subr.bf16.mxu0 0
        %2379 = vmatpush1.bf16.msra.mxu0 %v2348
        %2380 = vmatprep.subr.bf16.mxu0 0
        %2381 = vmatpush2.bf16.msra.mxu0 0
        %2382 = vmatprep.subr.bf16.mxu0 0
        %2383 = vmatpush2.bf16.msra.mxu0 0
        %2384 = vmatprep.subr.bf16.mxu0 0
        %2385 = vmatpush2.bf16.msra.mxu0 0
        %2386 = vmatprep.subr.bf16.mxu0 0
        %2387 = vmatpush2.bf16.msra.mxu0 0
        %2388 = vmatprep.subr.bf16.mxu0 0
        %2389 = vmatpush2.bf16.msra.mxu0 0
        %2390 = vmatprep.subr.bf16.mxu0 0
        %2391 = vmatpush2.bf16.msra.mxu0 0
        %2392 = vmatprep.subr.bf16.mxu0 0
        %2393 = vmatpush2.bf16.msra.mxu0 0
        %2394 = vmatprep.subr.bf16.mxu0 0
        %2395 = vmatpush2.bf16.msra.mxu0 0
        %2396 = vmatprep.mubr.bf16.mxu0 0
        %2397 = vmatmul.mubr.bf16.gmra.mxu0 %v2290
        %v2398 = vpop.f32.mrf.mxu0
        %v2399 = vadd.f32 %v2314, %v2398
        %v2400 = vpop.f32.mrf.mxu0
        %v2401 = vpop.f32.mrf.mxu0
        %v2402 = vadd.f32 %v2314, %v2401
        %v2403 = vpop.f32.mrf.mxu0
        %2404 = vdwg.mxu0
        %v2405 = vadd.f32 %v2154, %v2399
        %v2406 = vadd.f32 %v2155, %v2402
        %v2407 = vld [vmem:[%s16] sm:$0x1]
        %v2408 = vld [vmem:[%s17] sm:$0x1]
        %v2409 = vsel %vm765, %v2405, 0.0
        %2410 = vadd.xlane.f32.xlu0 %v2409
        %v2411 = vpop.xlane.xlu0 %2410
        %v2412 = vsel %vm765, %v2406, 0.0
        %2413 = vadd.xlane.f32.xlu0 %v2412
        %v2414 = vpop.xlane.xlu0 %2413
        %v2415 = vmul.f32 %v2411, %v857
        %v2416 = vmul.f32 %v2414, %v857
        %v2417 = vsub.f32 %v2405, %v2415
        %v2418 = vsub.f32 %v2406, %v2416
        %v2419 = vmul.f32 %v2417, %v2417
        %v2420 = vmul.f32 %v2418, %v2418
        %v2421 = vsel %vm765, %v2419, 0.0
        %2422 = vadd.xlane.f32.xlu0 %v2421
        %v2423 = vpop.xlane.xlu0 %2422
        %v2424 = vsel %vm765, %v2420, 0.0
        %2425 = vadd.xlane.f32.xlu0 %v2424
        %v2426 = vpop.xlane.xlu0 %2425
        %v2427 = vmul.f32 %v2423, %v857
        %v2428 = vmul.f32 %v2426, %v857
        %v2429 = vadd.f32 %v2427, 1e-05
        %v2430 = vadd.f32 %v2428, 1e-05
        %v2431 = vrsqrt.pop %v2429
        %v2432 = vrsqrt.pop %v2430
        %v2433 = vmul.f32 %v2417, %v2431
        %v2434 = vmul.f32 %v2418, %v2432
        %v2436 = vlaneseq
        %v2437 = vshrl.u32 %v2436, 7
        %v2438 = vsub.s32 0, %v2437
        %v2439 = vrot.slane %v2407, %v2438
        %v2441 = vmul.f32 %v2433, %v2439
        %v2442 = vmul.f32 %v2434, %v2439
        %v2444 = vlaneseq
        %v2445 = vshrl.u32 %v2444, 7
        %v2446 = vsub.s32 0, %v2445
        %v2447 = vrot.slane %v2408, %v2446
        %v2449 = vadd.f32 %v2441, %v2447
        %v2450 = vadd.f32 %v2442, %v2447
        %v2451 = vpack.c.bf16 %v2450, %v2449
        %v2452 = vld [vmem:[%s18] sm:$0xf]
        %v2453 = vld [vmem:[%s18 + $0x4] sm:$0xf]
        %v2454 = vld [vmem:[%s18 + $0x8] sm:$0xf]
        %v2455 = vld [vmem:[%s18 + $0xc] sm:$0xf]
        %v2456 = vld [vmem:[%s19] sm:$0x1]
        %v2458 = vlaneseq
        %v2459 = vshrl.u32 %v2458, 7
        %v2460 = vsub.s32 0, %v2459
        %v2461 = vrot.slane %v2456, %v2460
        %v2467 = vunpack.c.l.b16 %v2452
        %v2468 = vunpack.c.l.b16 %v2453
        %v2469 = vunpack.c.l.b16 %v2454
        %v2470 = vunpack.c.l.b16 %v2455
        %v2471 = vpack.c.b16 %v2468, %v2467
        %v2472 = vpack.c.b16 %v2470, %v2469
        %v2476 = vsel %vm765, %v2451, 0
        %2478 = vmatprep.subr.bf16.mxu0 0
        %2479 = vmatpush1.bf16.msra.mxu0 0
        %2480 = vmatprep.subr.bf16.mxu0 0
        %2481 = vmatpush1.bf16.msra.mxu0 0
        %2482 = vmatprep.subr.bf16.mxu0 0
        %2483 = vmatpush1.bf16.msra.mxu0 0
        %2484 = vmatprep.subr.bf16.mxu0 0
        %2485 = vmatpush1.bf16.msra.mxu0 0
        %2486 = vmatprep.subr.bf16.mxu0 0
        %2487 = vmatpush1.bf16.msra.mxu0 0
        %2488 = vmatprep.subr.bf16.mxu0 0
        %2489 = vmatpush1.bf16.msra.mxu0 0
        %2490 = vmatprep.subr.bf16.mxu0 0
        %2491 = vmatpush1.bf16.msra.mxu0 %v2472
        %2492 = vmatprep.subr.bf16.mxu0 0
        %2493 = vmatpush1.bf16.msra.mxu0 %v2471
        %2494 = vmatprep.subr.bf16.mxu0 0
        %2495 = vmatpush2.bf16.msra.mxu0 0
        %2496 = vmatprep.subr.bf16.mxu0 0
        %2497 = vmatpush2.bf16.msra.mxu0 0
        %2498 = vmatprep.subr.bf16.mxu0 0
        %2499 = vmatpush2.bf16.msra.mxu0 0
        %2500 = vmatprep.subr.bf16.mxu0 0
        %2501 = vmatpush2.bf16.msra.mxu0 0
        %2502 = vmatprep.subr.bf16.mxu0 0
        %2503 = vmatpush2.bf16.msra.mxu0 0
        %2504 = vmatprep.subr.bf16.mxu0 0
        %2505 = vmatpush2.bf16.msra.mxu0 0
        %2506 = vmatprep.subr.bf16.mxu0 0
        %2507 = vmatpush2.bf16.msra.mxu0 0
        %2508 = vmatprep.subr.bf16.mxu0 0
        %2509 = vmatpush2.bf16.msra.mxu0 0
        %2510 = vmatprep.mubr.bf16.mxu0 0
        %2511 = vmatmul.mubr.bf16.gmra.mxu0 %v2476
        %v2512 = vpop.f32.mrf.mxu0
        %v2513 = vadd.f32 %v2461, %v2512
        %v2514 = vpop.f32.mrf.mxu0
        %v2515 = vpop.f32.mrf.mxu0
        %v2516 = vadd.f32 %v2461, %v2515
        %v2517 = vpop.f32.mrf.mxu0
        %2518 = vdwg.mxu0
        %2519 = vst [vmem:[%s633] sm:$0xff] %v2513
        %2520 = vst [vmem:[%s633 + $0x8] sm:$0xff] %v2516
        %s2521 = sand.u32 %s472, 1
        %s2522 = scalar_lea.sflag [#allocation3], %s2521
        %s2523 = sand.u32 %s472, 1
        %s2524 = smul.addr %s2523, 16
        %s2525 = scalar_lea.vmem [#allocation2], %s2524
        // Predicated region
        $region101: #{tpu_custom_call.1} parent=99 // pred_check
          %p2526 = pneg %p482
        $region102: #{tpu_custom_call.1} parent=99 // pred_check_branch
          %2528 = sbr.rel (%p2526) target = $region104
        $region103: #{tpu_custom_call.1} parent=99 // pred_region
          %s2530 = ssub.s32 256, 256
          %2531 = vsyncadd %s2522, %s2530
          %s2532 = smul.addr %s34, 2
          %s2533 = smul.addr %s2532, 128
          %s2534 = scalar_lea.hbm %s20, %s2533
          %s2535 = sshll.u32 %s2525, 4
          %s2536 = int_to_ptr.vmem [resolvable:$true] %s2535
          %2541 = dma.vmem_to_hbm [thread:$0]  %s2536, 256, %s2534, %s2522, 128, 128, 8
        $region104: #{tpu_custom_call.1} parent=99 // pred_fallthru
          _
      $region100: #{tpu_custom_call.1} parent=5 // pred_fallthru
        _
      %p2542 = scmp.le.s32.totalorder 2, %s29
      // Predicated region
      $region105: #{tpu_custom_call.1} parent=5 // pred_check
        %p2543 = pneg %p2542
      $region106: #{tpu_custom_call.1} parent=5 // pred_check_branch
        %2545 = sbr.rel (%p2543) target = $region108
      $region107: #{tpu_custom_call.1} parent=5 // pred_region
        %s2546 = ssub.s32 %s29, 2
        // Predicated region
        $region109: #{tpu_custom_call.1} parent=107 // pred_check
          %p2547 = pneg %p488
        $region110: #{tpu_custom_call.1} parent=107 // pred_check_branch
          %2549 = sbr.rel (%p2547) target = $region112
        $region111: #{tpu_custom_call.1} parent=107 // pred_region
          %s2550 = sand.u32 %s473, 1
          %s2551 = scalar_lea.sflag [#allocation3], %s2550
          %s2552 = sand.u32 %s473, 1
          %s2553 = smul.addr %s2552, 16
          %s2554 = scalar_lea.vmem [#allocation2], %s2553
          %2555 = dma.done %s2551, 256
        $region112: #{tpu_custom_call.1} parent=107 // pred_fallthru
          _
      $region108: #{tpu_custom_call.1} parent=5 // pred_fallthru
        _
    $region6: #{tpu_custom_call.1} parent=1 // loop_footer
      %s33 = sadd.s32 1, %s29
    $region7: #{tpu_custom_call.1} parent=1 // loop_footer_branch
      %28 = sbr.rel target = $region3
    $region8: #{tpu_custom_call.1} parent=1 // loop_exit
      _
    %2556 = vsyncpa [#allocation3], 1
    %s2557 = scalar_lea.sflag [#allocation3], 1
    %2558 = vsyncpa %s2557, 1

</llo_original>
